<compile_context>
chip_gen: v6e
topology: v6e:2x2x1
jax: 0.10.0
libtpu: 0.0.40
codegen_flags: <defaults>
</compile_context>

<pallas_src>
import functools

import jax
import jax.numpy as jnp
import numpy as np
from jax.experimental import pallas as pl
from jax.experimental.pallas import tpu as pltpu


def _ceil_half(n: int) -> int:
    return -(-n // 2)


def _pool_matrix(size: int) -> np.ndarray:
    """(ceil(size/2), size) matrix M so that (M @ v) is the per-window mean along one
    axis, matching AvgPool2d(2, 2, count_include_pad=False, ceil_mode=True)."""
    out = _ceil_half(size)
    m = np.zeros((out, size), np.float32)
    for i in range(out):
        cols = [c for c in (2 * i, 2 * i + 1) if c < size]
        for c in cols:
            m[i, c] = 1.0 / len(cols)   # divisor = #valid elements (count_include_pad=False)
    return m


def _avgpool_pyramid_kernel(x_ref, ah1_ref, aw1_ref, ah2_ref, aw2_ref,
                            ah3_ref, aw3_ref, s1_ref, s2_ref, s3_ref, *, nb):
    # x_ref: (nb, H, W); A_h*: (H_out, H_in) row-pool; A_w*: (W_in, W_out) col-pool.
    ah1, aw1 = ah1_ref[...], aw1_ref[...]
    ah2, aw2 = ah2_ref[...], aw2_ref[...]
    ah3, aw3 = ah3_ref[...], aw3_ref[...]
    dot = functools.partial(jnp.dot, preferred_element_type=jnp.float32)
    for n in range(nb):                         # static unroll over images in this block
        x = x_ref[n].astype(jnp.float32)        # (H, W)
        s1 = dot(dot(ah1, x), aw1)              # (H1, W1)  separable 2x2 mean
        s2 = dot(dot(ah2, s1), aw2)             # (H2, W2)
        s3 = dot(dot(ah3, s2), aw3)             # (H3, W3)
        s1_ref[n] = s1.astype(s1_ref.dtype)
        s2_ref[n] = s2.astype(s2_ref.dtype)
        s3_ref[n] = s3.astype(s3_ref.dtype)


def _pick_block(n: int, target: int = 8) -> int:
    """Largest divisor of n that is <= target (amortizes per-grid-step overhead)."""
    for cand in range(min(n, target), 0, -1):
        if n % cand == 0:
            return cand
    return 1


def avgpool_pyramid(s0):
    """AvgPool.forward: s0 is (B,C,H,W) or (B,T,C,H,W); returns (s1, s2, s3)."""
    lead = s0.shape[:-2]
    H, W = int(s0.shape[-2]), int(s0.shape[-1])
    N = 1
    for d in lead:
        N *= int(d)
    x = s0.reshape((N, H, W))

    H1, W1 = _ceil_half(H), _ceil_half(W)
    H2, W2 = _ceil_half(H1), _ceil_half(W1)
    H3, W3 = _ceil_half(H2), _ceil_half(W2)

    ah1 = jnp.asarray(_pool_matrix(H))        # (H1, H)
    aw1 = jnp.asarray(_pool_matrix(W).T)      # (W, W1)
    ah2 = jnp.asarray(_pool_matrix(H1))       # (H2, H1)
    aw2 = jnp.asarray(_pool_matrix(W1).T)     # (W1, W2)
    ah3 = jnp.asarray(_pool_matrix(H2))       # (H3, H2)
    aw3 = jnp.asarray(_pool_matrix(W2).T)     # (W2, W3)

    nb = _pick_block(N)
    grid = (N // nb,)
    dt = s0.dtype

    def full2d(a):
        return pl.BlockSpec(a.shape, lambda i: (0, 0))

    kernel = functools.partial(_avgpool_pyramid_kernel, nb=nb)

    s1, s2, s3 = pl.pallas_call(
        kernel,
        grid=grid,
        in_specs=[
            pl.BlockSpec((nb, H, W), lambda i: (i, 0, 0)),
            full2d(ah1), full2d(aw1),
            full2d(ah2), full2d(aw2),
            full2d(ah3), full2d(aw3),
        ],
        out_specs=(
            pl.BlockSpec((nb, H1, W1), lambda i: (i, 0, 0)),
            pl.BlockSpec((nb, H2, W2), lambda i: (i, 0, 0)),
            pl.BlockSpec((nb, H3, W3), lambda i: (i, 0, 0)),
        ),
        out_shape=(
            jax.ShapeDtypeStruct((N, H1, W1), dt),
            jax.ShapeDtypeStruct((N, H2, W2), dt),
            jax.ShapeDtypeStruct((N, H3, W3), dt),
        ),
        compiler_params=pltpu.CompilerParams(
            dimension_semantics=("parallel",),   # shard grid across TCs on v7x
            vmem_limit_bytes=32 * 1024 * 1024,
        ),
    )(x, ah1, aw1, ah2, aw2, ah3, aw3)

    unflat = lambda a: a.reshape(tuple(lead) + a.shape[1:])
    return unflat(s1), unflat(s2), unflat(s3)


# ----------------------------- pure-JAX reference -----------------------------

def _ref_avgpool2x2(x):
    """AvgPool2d(2,2,count_include_pad=False,ceil_mode=True) over the last two dims."""
    H, W = x.shape[-2:]
    H1, W1 = _ceil_half(H), _ceil_half(W)
    ph, pw = 2 * H1 - H, 2 * W1 - W
    pad = [(0, 0)] * (x.ndim - 2) + [(0, ph), (0, pw)]
    xs = jnp.pad(x, pad).reshape(x.shape[:-2] + (H1, 2, W1, 2)).sum(axis=(-3, -1))
    cnt = jnp.pad(jnp.ones((H, W), x.dtype), ((0, ph), (0, pw)))
    cnt = cnt.reshape(H1, 2, W1, 2).sum(axis=(1, 3))
    return xs / cnt


# ----------------------------------- main --------------------------------------

if __name__ == "__main__":
    key = jax.random.PRNGKey(0)
    k5, k4 = jax.random.split(key)

    fwd = jax.jit(avgpool_pyramid)

    # 5-D time-series path, even spatial sizes (the usual RVM decoder case).
    B, T, C, H, W = 2, 2, 3, 16, 16
    s0 = jax.random.normal(k5, (B, T, C, H, W), jnp.float32)
    s1, s2, s3 = fwd(s0)
    jax.block_until_ready((s1, s2, s3))
    assert s1.shape == (B, T, C, 8, 8)
    assert s2.shape == (B, T, C, 4, 4)
    assert s3.shape == (B, T, C, 2, 2)
    r1 = _ref_avgpool2x2(s0)
    r2 = _ref_avgpool2x2(r1)
    r3 = _ref_avgpool2x2(r2)
    for got, ref in ((s1, r1), (s2, r2), (s3, r3)):
        assert bool(jnp.all(jnp.isfinite(got)))
        assert float(jnp.max(jnp.abs(got - ref))) < 5e-2

    # 4-D single-frame path with odd spatial sizes (exercises ceil_mode +
    # count_include_pad=False edge-window divisors).
    x4 = jax.random.normal(k4, (2, 4, 17, 15), jnp.float32)
    a1, a2, a3 = fwd(x4)
    jax.block_until_ready((a1, a2, a3))
    assert a1.shape == (2, 4, 9, 8)
    assert a2.shape == (2, 4, 5, 4)
    assert a3.shape == (2, 4, 3, 2)
    q1 = _ref_avgpool2x2(x4)
    q2 = _ref_avgpool2x2(q1)
    q3 = _ref_avgpool2x2(q2)
    for got, ref in ((a1, q1), (a2, q2), (a3, q3)):
        assert bool(jnp.all(jnp.isfinite(got)))
        assert float(jnp.max(jnp.abs(got - ref))) < 5e-2

    print("KERNEL_OK")
</pallas_src>

<mosaic_0001>
module attributes {stable_mosaic.version = 11 : i64} {
  func.func @_avgpool_pyramid_kernel(%arg0: i32, %arg1: memref<6x16x16xf32, #tpu.memory_space<vmem>>, %arg2: memref<8x16xf32, #tpu.memory_space<vmem>>, %arg3: memref<16x8xf32, #tpu.memory_space<vmem>>, %arg4: memref<4x8xf32, #tpu.memory_space<vmem>>, %arg5: memref<8x4xf32, #tpu.memory_space<vmem>>, %arg6: memref<2x4xf32, #tpu.memory_space<vmem>>, %arg7: memref<4x2xf32, #tpu.memory_space<vmem>>, %arg8: memref<6x8x8xf32, #tpu.memory_space<vmem>>, %arg9: memref<6x4x4xf32, #tpu.memory_space<vmem>>, %arg10: memref<6x2x2xf32, #tpu.memory_space<vmem>>) attributes {dimension_semantics = [#tpu.dimension_semantics<parallel>], iteration_bounds = array<i64: 2>, scalar_prefetch = 0 : i64, scratch_operands = 0 : i64, tpu.core_type = #tpu.core_type<tc>, window_params = [{transform_indices = @transform_0, window_bounds = array<i64: 6, 16, 16>}, {pipeline_mode = #tpu.pipeline_mode<synchronous>, transform_indices = @transform_1, window_bounds = array<i64: 8, 16>}, {pipeline_mode = #tpu.pipeline_mode<synchronous>, transform_indices = @transform_2, window_bounds = array<i64: 16, 8>}, {pipeline_mode = #tpu.pipeline_mode<synchronous>, transform_indices = @transform_3, window_bounds = array<i64: 4, 8>}, {pipeline_mode = #tpu.pipeline_mode<synchronous>, transform_indices = @transform_4, window_bounds = array<i64: 8, 4>}, {pipeline_mode = #tpu.pipeline_mode<synchronous>, transform_indices = @transform_5, window_bounds = array<i64: 2, 4>}, {pipeline_mode = #tpu.pipeline_mode<synchronous>, transform_indices = @transform_6, window_bounds = array<i64: 4, 2>}, {transform_indices = @transform_7, window_bounds = array<i64: 6, 8, 8>}, {transform_indices = @transform_8, window_bounds = array<i64: 6, 4, 4>}, {transform_indices = @transform_9, window_bounds = array<i64: 6, 2, 2>}]} {
    %c0 = arith.constant 0 : index
    %c0_0 = arith.constant 0 : index
    %0 = vector.load %arg2[%c0, %c0_0] : memref<8x16xf32, #tpu.memory_space<vmem>>, vector<8x16xf32>
    %c0_1 = arith.constant 0 : index
    %c0_2 = arith.constant 0 : index
    %1 = vector.load %arg3[%c0_1, %c0_2] : memref<16x8xf32, #tpu.memory_space<vmem>>, vector<16x8xf32>
    %c0_3 = arith.constant 0 : index
    %c0_4 = arith.constant 0 : index
    %2 = vector.load %arg4[%c0_3, %c0_4] : memref<4x8xf32, #tpu.memory_space<vmem>>, vector<4x8xf32>
    %c0_5 = arith.constant 0 : index
    %c0_6 = arith.constant 0 : index
    %3 = vector.load %arg5[%c0_5, %c0_6] : memref<8x4xf32, #tpu.memory_space<vmem>>, vector<8x4xf32>
    %c0_7 = arith.constant 0 : index
    %c0_8 = arith.constant 0 : index
    %4 = vector.load %arg6[%c0_7, %c0_8] : memref<2x4xf32, #tpu.memory_space<vmem>>, vector<2x4xf32>
    %c0_9 = arith.constant 0 : index
    %c0_10 = arith.constant 0 : index
    %5 = vector.load %arg7[%c0_9, %c0_10] : memref<4x2xf32, #tpu.memory_space<vmem>>, vector<4x2xf32>
    %c0_11 = arith.constant 0 : index
    %c0_12 = arith.constant 0 : index
    %c0_13 = arith.constant 0 : index
    %6 = vector.load %arg1[%c0_11, %c0_12, %c0_13] : memref<6x16x16xf32, #tpu.memory_space<vmem>>, vector<1x16x16xf32>
    %7 = vector.shape_cast %6 : vector<1x16x16xf32> to vector<16x16xf32>
    %cst = arith.constant dense<0.000000e+00> : vector<8x16xf32>
    %8 = tpu.matmul %0, %7, %cst {dimension_numbers = #tpu.dot_dimension_numbers<[1], [0], [0], [1], [0, 0, 1, 1], [], []>} : vector<8x16xf32>, vector<16x16xf32>, vector<8x16xf32> -> vector<8x16xf32>
    %cst_14 = arith.constant dense<0.000000e+00> : vector<8x8xf32>
    %9 = tpu.matmul %8, %1, %cst_14 {dimension_numbers = #tpu.dot_dimension_numbers<[1], [0], [0], [1], [0, 0, 1, 1], [], []>} : vector<8x16xf32>, vector<16x8xf32>, vector<8x8xf32> -> vector<8x8xf32>
    %cst_15 = arith.constant dense<0.000000e+00> : vector<4x8xf32>
    %10 = tpu.matmul %2, %9, %cst_15 {dimension_numbers = #tpu.dot_dimension_numbers<[1], [0], [0], [1], [0, 0, 1, 1], [], []>} : vector<4x8xf32>, vector<8x8xf32>, vector<4x8xf32> -> vector<4x8xf32>
    %cst_16 = arith.constant dense<0.000000e+00> : vector<4x4xf32>
    %11 = tpu.matmul %10, %3, %cst_16 {dimension_numbers = #tpu.dot_dimension_numbers<[1], [0], [0], [1], [0, 0, 1, 1], [], []>} : vector<4x8xf32>, vector<8x4xf32>, vector<4x4xf32> -> vector<4x4xf32>
    %cst_17 = arith.constant dense<0.000000e+00> : vector<2x4xf32>
    %12 = tpu.matmul %4, %11, %cst_17 {dimension_numbers = #tpu.dot_dimension_numbers<[1], [0], [0], [1], [0, 0, 1, 1], [], []>} : vector<2x4xf32>, vector<4x4xf32>, vector<2x4xf32> -> vector<2x4xf32>
    %cst_18 = arith.constant dense<0.000000e+00> : vector<2x2xf32>
    %13 = tpu.matmul %12, %5, %cst_18 {dimension_numbers = #tpu.dot_dimension_numbers<[1], [0], [0], [1], [0, 0, 1, 1], [], []>} : vector<2x4xf32>, vector<4x2xf32>, vector<2x2xf32> -> vector<2x2xf32>
    %c0_19 = arith.constant 0 : index
    %c0_20 = arith.constant 0 : index
    %c0_21 = arith.constant 0 : index
    %14 = vector.load %arg8[%c0_19, %c0_20, %c0_21] : memref<6x8x8xf32, #tpu.memory_space<vmem>>, vector<1x8x8xf32>
    %15 = vector.shape_cast %14 : vector<1x8x8xf32> to vector<8x8xf32>
    %16 = vector.shape_cast %9 : vector<8x8xf32> to vector<1x8x8xf32>
    tpu.vector_store %arg8[%c0_19, %c0_20, %c0_21], %16 {strides = array<i32>} : memref<6x8x8xf32, #tpu.memory_space<vmem>>, vector<1x8x8xf32>,
    %c0_22 = arith.constant 0 : index
    %c0_23 = arith.constant 0 : index
    %c0_24 = arith.constant 0 : index
    %17 = vector.load %arg9[%c0_22, %c0_23, %c0_24] : memref<6x4x4xf32, #tpu.memory_space<vmem>>, vector<1x4x4xf32>
    %18 = vector.shape_cast %17 : vector<1x4x4xf32> to vector<4x4xf32>
    %19 = vector.shape_cast %11 : vector<4x4xf32> to vector<1x4x4xf32>
    tpu.vector_store %arg9[%c0_22, %c0_23, %c0_24], %19 {strides = array<i32>} : memref<6x4x4xf32, #tpu.memory_space<vmem>>, vector<1x4x4xf32>,
    %c0_25 = arith.constant 0 : index
    %c0_26 = arith.constant 0 : index
    %c0_27 = arith.constant 0 : index
    %20 = vector.load %arg10[%c0_25, %c0_26, %c0_27] : memref<6x2x2xf32, #tpu.memory_space<vmem>>, vector<1x2x2xf32>
    %21 = vector.shape_cast %20 : vector<1x2x2xf32> to vector<2x2xf32>
    %22 = vector.shape_cast %13 : vector<2x2xf32> to vector<1x2x2xf32>
    tpu.vector_store %arg10[%c0_25, %c0_26, %c0_27], %22 {strides = array<i32>} : memref<6x2x2xf32, #tpu.memory_space<vmem>>, vector<1x2x2xf32>,
    %c1 = arith.constant 1 : index
    %c0_28 = arith.constant 0 : index
    %c0_29 = arith.constant 0 : index
    %23 = vector.load %arg1[%c1, %c0_28, %c0_29] : memref<6x16x16xf32, #tpu.memory_space<vmem>>, vector<1x16x16xf32>
    %24 = vector.shape_cast %23 : vector<1x16x16xf32> to vector<16x16xf32>
    %cst_30 = arith.constant dense<0.000000e+00> : vector<8x16xf32>
    %25 = tpu.matmul %0, %24, %cst_30 {dimension_numbers = #tpu.dot_dimension_numbers<[1], [0], [0], [1], [0, 0, 1, 1], [], []>} : vector<8x16xf32>, vector<16x16xf32>, vector<8x16xf32> -> vector<8x16xf32>
    %cst_31 = arith.constant dense<0.000000e+00> : vector<8x8xf32>
    %26 = tpu.matmul %25, %1, %cst_31 {dimension_numbers = #tpu.dot_dimension_numbers<[1], [0], [0], [1], [0, 0, 1, 1], [], []>} : vector<8x16xf32>, vector<16x8xf32>, vector<8x8xf32> -> vector<8x8xf32>
    %cst_32 = arith.constant dense<0.000000e+00> : vector<4x8xf32>
    %27 = tpu.matmul %2, %26, %cst_32 {dimension_numbers = #tpu.dot_dimension_numbers<[1], [0], [0], [1], [0, 0, 1, 1], [], []>} : vector<4x8xf32>, vector<8x8xf32>, vector<4x8xf32> -> vector<4x8xf32>
    %cst_33 = arith.constant dense<0.000000e+00> : vector<4x4xf32>
    %28 = tpu.matmul %27, %3, %cst_33 {dimension_numbers = #tpu.dot_dimension_numbers<[1], [0], [0], [1], [0, 0, 1, 1], [], []>} : vector<4x8xf32>, vector<8x4xf32>, vector<4x4xf32> -> vector<4x4xf32>
    %cst_34 = arith.constant dense<0.000000e+00> : vector<2x4xf32>
    %29 = tpu.matmul %4, %28, %cst_34 {dimension_numbers = #tpu.dot_dimension_numbers<[1], [0], [0], [1], [0, 0, 1, 1], [], []>} : vector<2x4xf32>, vector<4x4xf32>, vector<2x4xf32> -> vector<2x4xf32>
    %cst_35 = arith.constant dense<0.000000e+00> : vector<2x2xf32>
    %30 = tpu.matmul %29, %5, %cst_35 {dimension_numbers = #tpu.dot_dimension_numbers<[1], [0], [0], [1], [0, 0, 1, 1], [], []>} : vector<2x4xf32>, vector<4x2xf32>, vector<2x2xf32> -> vector<2x2xf32>
    %c1_36 = arith.constant 1 : index
    %c0_37 = arith.constant 0 : index
    %c0_38 = arith.constant 0 : index
    %31 = vector.load %arg8[%c1_36, %c0_37, %c0_38] : memref<6x8x8xf32, #tpu.memory_space<vmem>>, vector<1x8x8xf32>
    %32 = vector.shape_cast %31 : vector<1x8x8xf32> to vector<8x8xf32>
    %33 = vector.shape_cast %26 : vector<8x8xf32> to vector<1x8x8xf32>
    tpu.vector_store %arg8[%c1_36, %c0_37, %c0_38], %33 {strides = array<i32>} : memref<6x8x8xf32, #tpu.memory_space<vmem>>, vector<1x8x8xf32>,
    %c1_39 = arith.constant 1 : index
    %c0_40 = arith.constant 0 : index
    %c0_41 = arith.constant 0 : index
    %34 = vector.load %arg9[%c1_39, %c0_40, %c0_41] : memref<6x4x4xf32, #tpu.memory_space<vmem>>, vector<1x4x4xf32>
    %35 = vector.shape_cast %34 : vector<1x4x4xf32> to vector<4x4xf32>
    %36 = vector.shape_cast %28 : vector<4x4xf32> to vector<1x4x4xf32>
    tpu.vector_store %arg9[%c1_39, %c0_40, %c0_41], %36 {strides = array<i32>} : memref<6x4x4xf32, #tpu.memory_space<vmem>>, vector<1x4x4xf32>,
    %c1_42 = arith.constant 1 : index
    %c0_43 = arith.constant 0 : index
    %c0_44 = arith.constant 0 : index
    %37 = vector.load %arg10[%c1_42, %c0_43, %c0_44] : memref<6x2x2xf32, #tpu.memory_space<vmem>>, vector<1x2x2xf32>
    %38 = vector.shape_cast %37 : vector<1x2x2xf32> to vector<2x2xf32>
    %39 = vector.shape_cast %30 : vector<2x2xf32> to vector<1x2x2xf32>
    tpu.vector_store %arg10[%c1_42, %c0_43, %c0_44], %39 {strides = array<i32>} : memref<6x2x2xf32, #tpu.memory_space<vmem>>, vector<1x2x2xf32>,
    %c2 = arith.constant 2 : index
    %c0_45 = arith.constant 0 : index
    %c0_46 = arith.constant 0 : index
    %40 = vector.load %arg1[%c2, %c0_45, %c0_46] : memref<6x16x16xf32, #tpu.memory_space<vmem>>, vector<1x16x16xf32>
    %41 = vector.shape_cast %40 : vector<1x16x16xf32> to vector<16x16xf32>
    %cst_47 = arith.constant dense<0.000000e+00> : vector<8x16xf32>
    %42 = tpu.matmul %0, %41, %cst_47 {dimension_numbers = #tpu.dot_dimension_numbers<[1], [0], [0], [1], [0, 0, 1, 1], [], []>} : vector<8x16xf32>, vector<16x16xf32>, vector<8x16xf32> -> vector<8x16xf32>
    %cst_48 = arith.constant dense<0.000000e+00> : vector<8x8xf32>
    %43 = tpu.matmul %42, %1, %cst_48 {dimension_numbers = #tpu.dot_dimension_numbers<[1], [0], [0], [1], [0, 0, 1, 1], [], []>} : vector<8x16xf32>, vector<16x8xf32>, vector<8x8xf32> -> vector<8x8xf32>
    %cst_49 = arith.constant dense<0.000000e+00> : vector<4x8xf32>
    %44 = tpu.matmul %2, %43, %cst_49 {dimension_numbers = #tpu.dot_dimension_numbers<[1], [0], [0], [1], [0, 0, 1, 1], [], []>} : vector<4x8xf32>, vector<8x8xf32>, vector<4x8xf32> -> vector<4x8xf32>
    %cst_50 = arith.constant dense<0.000000e+00> : vector<4x4xf32>
    %45 = tpu.matmul %44, %3, %cst_50 {dimension_numbers = #tpu.dot_dimension_numbers<[1], [0], [0], [1], [0, 0, 1, 1], [], []>} : vector<4x8xf32>, vector<8x4xf32>, vector<4x4xf32> -> vector<4x4xf32>
    %cst_51 = arith.constant dense<0.000000e+00> : vector<2x4xf32>
    %46 = tpu.matmul %4, %45, %cst_51 {dimension_numbers = #tpu.dot_dimension_numbers<[1], [0], [0], [1], [0, 0, 1, 1], [], []>} : vector<2x4xf32>, vector<4x4xf32>, vector<2x4xf32> -> vector<2x4xf32>
    %cst_52 = arith.constant dense<0.000000e+00> : vector<2x2xf32>
    %47 = tpu.matmul %46, %5, %cst_52 {dimension_numbers = #tpu.dot_dimension_numbers<[1], [0], [0], [1], [0, 0, 1, 1], [], []>} : vector<2x4xf32>, vector<4x2xf32>, vector<2x2xf32> -> vector<2x2xf32>
    %c2_53 = arith.constant 2 : index
    %c0_54 = arith.constant 0 : index
    %c0_55 = arith.constant 0 : index
    %48 = vector.load %arg8[%c2_53, %c0_54, %c0_55] : memref<6x8x8xf32, #tpu.memory_space<vmem>>, vector<1x8x8xf32>
    %49 = vector.shape_cast %48 : vector<1x8x8xf32> to vector<8x8xf32>
    %50 = vector.shape_cast %43 : vector<8x8xf32> to vector<1x8x8xf32>
    tpu.vector_store %arg8[%c2_53, %c0_54, %c0_55], %50 {strides = array<i32>} : memref<6x8x8xf32, #tpu.memory_space<vmem>>, vector<1x8x8xf32>,
    %c2_56 = arith.constant 2 : index
    %c0_57 = arith.constant 0 : index
    %c0_58 = arith.constant 0 : index
    %51 = vector.load %arg9[%c2_56, %c0_57, %c0_58] : memref<6x4x4xf32, #tpu.memory_space<vmem>>, vector<1x4x4xf32>
    %52 = vector.shape_cast %51 : vector<1x4x4xf32> to vector<4x4xf32>
    %53 = vector.shape_cast %45 : vector<4x4xf32> to vector<1x4x4xf32>
    tpu.vector_store %arg9[%c2_56, %c0_57, %c0_58], %53 {strides = array<i32>} : memref<6x4x4xf32, #tpu.memory_space<vmem>>, vector<1x4x4xf32>,
    %c2_59 = arith.constant 2 : index
    %c0_60 = arith.constant 0 : index
    %c0_61 = arith.constant 0 : index
    %54 = vector.load %arg10[%c2_59, %c0_60, %c0_61] : memref<6x2x2xf32, #tpu.memory_space<vmem>>, vector<1x2x2xf32>
    %55 = vector.shape_cast %54 : vector<1x2x2xf32> to vector<2x2xf32>
    %56 = vector.shape_cast %47 : vector<2x2xf32> to vector<1x2x2xf32>
    tpu.vector_store %arg10[%c2_59, %c0_60, %c0_61], %56 {strides = array<i32>} : memref<6x2x2xf32, #tpu.memory_space<vmem>>, vector<1x2x2xf32>,
    %c3 = arith.constant 3 : index
    %c0_62 = arith.constant 0 : index
    %c0_63 = arith.constant 0 : index
    %57 = vector.load %arg1[%c3, %c0_62, %c0_63] : memref<6x16x16xf32, #tpu.memory_space<vmem>>, vector<1x16x16xf32>
    %58 = vector.shape_cast %57 : vector<1x16x16xf32> to vector<16x16xf32>
    %cst_64 = arith.constant dense<0.000000e+00> : vector<8x16xf32>
    %59 = tpu.matmul %0, %58, %cst_64 {dimension_numbers = #tpu.dot_dimension_numbers<[1], [0], [0], [1], [0, 0, 1, 1], [], []>} : vector<8x16xf32>, vector<16x16xf32>, vector<8x16xf32> -> vector<8x16xf32>
    %cst_65 = arith.constant dense<0.000000e+00> : vector<8x8xf32>
    %60 = tpu.matmul %59, %1, %cst_65 {dimension_numbers = #tpu.dot_dimension_numbers<[1], [0], [0], [1], [0, 0, 1, 1], [], []>} : vector<8x16xf32>, vector<16x8xf32>, vector<8x8xf32> -> vector<8x8xf32>
    %cst_66 = arith.constant dense<0.000000e+00> : vector<4x8xf32>
    %61 = tpu.matmul %2, %60, %cst_66 {dimension_numbers = #tpu.dot_dimension_numbers<[1], [0], [0], [1], [0, 0, 1, 1], [], []>} : vector<4x8xf32>, vector<8x8xf32>, vector<4x8xf32> -> vector<4x8xf32>
    %cst_67 = arith.constant dense<0.000000e+00> : vector<4x4xf32>
    %62 = tpu.matmul %61, %3, %cst_67 {dimension_numbers = #tpu.dot_dimension_numbers<[1], [0], [0], [1], [0, 0, 1, 1], [], []>} : vector<4x8xf32>, vector<8x4xf32>, vector<4x4xf32> -> vector<4x4xf32>
    %cst_68 = arith.constant dense<0.000000e+00> : vector<2x4xf32>
    %63 = tpu.matmul %4, %62, %cst_68 {dimension_numbers = #tpu.dot_dimension_numbers<[1], [0], [0], [1], [0, 0, 1, 1], [], []>} : vector<2x4xf32>, vector<4x4xf32>, vector<2x4xf32> -> vector<2x4xf32>
    %cst_69 = arith.constant dense<0.000000e+00> : vector<2x2xf32>
    %64 = tpu.matmul %63, %5, %cst_69 {dimension_numbers = #tpu.dot_dimension_numbers<[1], [0], [0], [1], [0, 0, 1, 1], [], []>} : vector<2x4xf32>, vector<4x2xf32>, vector<2x2xf32> -> vector<2x2xf32>
    %c3_70 = arith.constant 3 : index
    %c0_71 = arith.constant 0 : index
    %c0_72 = arith.constant 0 : index
    %65 = vector.load %arg8[%c3_70, %c0_71, %c0_72] : memref<6x8x8xf32, #tpu.memory_space<vmem>>, vector<1x8x8xf32>
    %66 = vector.shape_cast %65 : vector<1x8x8xf32> to vector<8x8xf32>
    %67 = vector.shape_cast %60 : vector<8x8xf32> to vector<1x8x8xf32>
    tpu.vector_store %arg8[%c3_70, %c0_71, %c0_72], %67 {strides = array<i32>} : memref<6x8x8xf32, #tpu.memory_space<vmem>>, vector<1x8x8xf32>,
    %c3_73 = arith.constant 3 : index
    %c0_74 = arith.constant 0 : index
    %c0_75 = arith.constant 0 : index
    %68 = vector.load %arg9[%c3_73, %c0_74, %c0_75] : memref<6x4x4xf32, #tpu.memory_space<vmem>>, vector<1x4x4xf32>
    %69 = vector.shape_cast %68 : vector<1x4x4xf32> to vector<4x4xf32>
    %70 = vector.shape_cast %62 : vector<4x4xf32> to vector<1x4x4xf32>
    tpu.vector_store %arg9[%c3_73, %c0_74, %c0_75], %70 {strides = array<i32>} : memref<6x4x4xf32, #tpu.memory_space<vmem>>, vector<1x4x4xf32>,
    %c3_76 = arith.constant 3 : index
    %c0_77 = arith.constant 0 : index
    %c0_78 = arith.constant 0 : index
    %71 = vector.load %arg10[%c3_76, %c0_77, %c0_78] : memref<6x2x2xf32, #tpu.memory_space<vmem>>, vector<1x2x2xf32>
    %72 = vector.shape_cast %71 : vector<1x2x2xf32> to vector<2x2xf32>
    %73 = vector.shape_cast %64 : vector<2x2xf32> to vector<1x2x2xf32>
    tpu.vector_store %arg10[%c3_76, %c0_77, %c0_78], %73 {strides = array<i32>} : memref<6x2x2xf32, #tpu.memory_space<vmem>>, vector<1x2x2xf32>,
    %c4 = arith.constant 4 : index
    %c0_79 = arith.constant 0 : index
    %c0_80 = arith.constant 0 : index
    %74 = vector.load %arg1[%c4, %c0_79, %c0_80] : memref<6x16x16xf32, #tpu.memory_space<vmem>>, vector<1x16x16xf32>
    %75 = vector.shape_cast %74 : vector<1x16x16xf32> to vector<16x16xf32>
    %cst_81 = arith.constant dense<0.000000e+00> : vector<8x16xf32>
    %76 = tpu.matmul %0, %75, %cst_81 {dimension_numbers = #tpu.dot_dimension_numbers<[1], [0], [0], [1], [0, 0, 1, 1], [], []>} : vector<8x16xf32>, vector<16x16xf32>, vector<8x16xf32> -> vector<8x16xf32>
    %cst_82 = arith.constant dense<0.000000e+00> : vector<8x8xf32>
    %77 = tpu.matmul %76, %1, %cst_82 {dimension_numbers = #tpu.dot_dimension_numbers<[1], [0], [0], [1], [0, 0, 1, 1], [], []>} : vector<8x16xf32>, vector<16x8xf32>, vector<8x8xf32> -> vector<8x8xf32>
    %cst_83 = arith.constant dense<0.000000e+00> : vector<4x8xf32>
    %78 = tpu.matmul %2, %77, %cst_83 {dimension_numbers = #tpu.dot_dimension_numbers<[1], [0], [0], [1], [0, 0, 1, 1], [], []>} : vector<4x8xf32>, vector<8x8xf32>, vector<4x8xf32> -> vector<4x8xf32>
    %cst_84 = arith.constant dense<0.000000e+00> : vector<4x4xf32>
    %79 = tpu.matmul %78, %3, %cst_84 {dimension_numbers = #tpu.dot_dimension_numbers<[1], [0], [0], [1], [0, 0, 1, 1], [], []>} : vector<4x8xf32>, vector<8x4xf32>, vector<4x4xf32> -> vector<4x4xf32>
    %cst_85 = arith.constant dense<0.000000e+00> : vector<2x4xf32>
    %80 = tpu.matmul %4, %79, %cst_85 {dimension_numbers = #tpu.dot_dimension_numbers<[1], [0], [0], [1], [0, 0, 1, 1], [], []>} : vector<2x4xf32>, vector<4x4xf32>, vector<2x4xf32> -> vector<2x4xf32>
    %cst_86 = arith.constant dense<0.000000e+00> : vector<2x2xf32>
    %81 = tpu.matmul %80, %5, %cst_86 {dimension_numbers = #tpu.dot_dimension_numbers<[1], [0], [0], [1], [0, 0, 1, 1], [], []>} : vector<2x4xf32>, vector<4x2xf32>, vector<2x2xf32> -> vector<2x2xf32>
    %c4_87 = arith.constant 4 : index
    %c0_88 = arith.constant 0 : index
    %c0_89 = arith.constant 0 : index
    %82 = vector.load %arg8[%c4_87, %c0_88, %c0_89] : memref<6x8x8xf32, #tpu.memory_space<vmem>>, vector<1x8x8xf32>
    %83 = vector.shape_cast %82 : vector<1x8x8xf32> to vector<8x8xf32>
    %84 = vector.shape_cast %77 : vector<8x8xf32> to vector<1x8x8xf32>
    tpu.vector_store %arg8[%c4_87, %c0_88, %c0_89], %84 {strides = array<i32>} : memref<6x8x8xf32, #tpu.memory_space<vmem>>, vector<1x8x8xf32>,
    %c4_90 = arith.constant 4 : index
    %c0_91 = arith.constant 0 : index
    %c0_92 = arith.constant 0 : index
    %85 = vector.load %arg9[%c4_90, %c0_91, %c0_92] : memref<6x4x4xf32, #tpu.memory_space<vmem>>, vector<1x4x4xf32>
    %86 = vector.shape_cast %85 : vector<1x4x4xf32> to vector<4x4xf32>
    %87 = vector.shape_cast %79 : vector<4x4xf32> to vector<1x4x4xf32>
    tpu.vector_store %arg9[%c4_90, %c0_91, %c0_92], %87 {strides = array<i32>} : memref<6x4x4xf32, #tpu.memory_space<vmem>>, vector<1x4x4xf32>,
    %c4_93 = arith.constant 4 : index
    %c0_94 = arith.constant 0 : index
    %c0_95 = arith.constant 0 : index
    %88 = vector.load %arg10[%c4_93, %c0_94, %c0_95] : memref<6x2x2xf32, #tpu.memory_space<vmem>>, vector<1x2x2xf32>
    %89 = vector.shape_cast %88 : vector<1x2x2xf32> to vector<2x2xf32>
    %90 = vector.shape_cast %81 : vector<2x2xf32> to vector<1x2x2xf32>
    tpu.vector_store %arg10[%c4_93, %c0_94, %c0_95], %90 {strides = array<i32>} : memref<6x2x2xf32, #tpu.memory_space<vmem>>, vector<1x2x2xf32>,
    %c5 = arith.constant 5 : index
    %c0_96 = arith.constant 0 : index
    %c0_97 = arith.constant 0 : index
    %91 = vector.load %arg1[%c5, %c0_96, %c0_97] : memref<6x16x16xf32, #tpu.memory_space<vmem>>, vector<1x16x16xf32>
    %92 = vector.shape_cast %91 : vector<1x16x16xf32> to vector<16x16xf32>
    %cst_98 = arith.constant dense<0.000000e+00> : vector<8x16xf32>
    %93 = tpu.matmul %0, %92, %cst_98 {dimension_numbers = #tpu.dot_dimension_numbers<[1], [0], [0], [1], [0, 0, 1, 1], [], []>} : vector<8x16xf32>, vector<16x16xf32>, vector<8x16xf32> -> vector<8x16xf32>
    %cst_99 = arith.constant dense<0.000000e+00> : vector<8x8xf32>
    %94 = tpu.matmul %93, %1, %cst_99 {dimension_numbers = #tpu.dot_dimension_numbers<[1], [0], [0], [1], [0, 0, 1, 1], [], []>} : vector<8x16xf32>, vector<16x8xf32>, vector<8x8xf32> -> vector<8x8xf32>
    %cst_100 = arith.constant dense<0.000000e+00> : vector<4x8xf32>
    %95 = tpu.matmul %2, %94, %cst_100 {dimension_numbers = #tpu.dot_dimension_numbers<[1], [0], [0], [1], [0, 0, 1, 1], [], []>} : vector<4x8xf32>, vector<8x8xf32>, vector<4x8xf32> -> vector<4x8xf32>
    %cst_101 = arith.constant dense<0.000000e+00> : vector<4x4xf32>
    %96 = tpu.matmul %95, %3, %cst_101 {dimension_numbers = #tpu.dot_dimension_numbers<[1], [0], [0], [1], [0, 0, 1, 1], [], []>} : vector<4x8xf32>, vector<8x4xf32>, vector<4x4xf32> -> vector<4x4xf32>
    %cst_102 = arith.constant dense<0.000000e+00> : vector<2x4xf32>
    %97 = tpu.matmul %4, %96, %cst_102 {dimension_numbers = #tpu.dot_dimension_numbers<[1], [0], [0], [1], [0, 0, 1, 1], [], []>} : vector<2x4xf32>, vector<4x4xf32>, vector<2x4xf32> -> vector<2x4xf32>
    %cst_103 = arith.constant dense<0.000000e+00> : vector<2x2xf32>
    %98 = tpu.matmul %97, %5, %cst_103 {dimension_numbers = #tpu.dot_dimension_numbers<[1], [0], [0], [1], [0, 0, 1, 1], [], []>} : vector<2x4xf32>, vector<4x2xf32>, vector<2x2xf32> -> vector<2x2xf32>
    %c5_104 = arith.constant 5 : index
    %c0_105 = arith.constant 0 : index
    %c0_106 = arith.constant 0 : index
    %99 = vector.load %arg8[%c5_104, %c0_105, %c0_106] : memref<6x8x8xf32, #tpu.memory_space<vmem>>, vector<1x8x8xf32>
    %100 = vector.shape_cast %99 : vector<1x8x8xf32> to vector<8x8xf32>
    %101 = vector.shape_cast %94 : vector<8x8xf32> to vector<1x8x8xf32>
    tpu.vector_store %arg8[%c5_104, %c0_105, %c0_106], %101 {strides = array<i32>} : memref<6x8x8xf32, #tpu.memory_space<vmem>>, vector<1x8x8xf32>,
    %c5_107 = arith.constant 5 : index
    %c0_108 = arith.constant 0 : index
    %c0_109 = arith.constant 0 : index
    %102 = vector.load %arg9[%c5_107, %c0_108, %c0_109] : memref<6x4x4xf32, #tpu.memory_space<vmem>>, vector<1x4x4xf32>
    %103 = vector.shape_cast %102 : vector<1x4x4xf32> to vector<4x4xf32>
    %104 = vector.shape_cast %96 : vector<4x4xf32> to vector<1x4x4xf32>
    tpu.vector_store %arg9[%c5_107, %c0_108, %c0_109], %104 {strides = array<i32>} : memref<6x4x4xf32, #tpu.memory_space<vmem>>, vector<1x4x4xf32>,
    %c5_110 = arith.constant 5 : index
    %c0_111 = arith.constant 0 : index
    %c0_112 = arith.constant 0 : index
    %105 = vector.load %arg10[%c5_110, %c0_111, %c0_112] : memref<6x2x2xf32, #tpu.memory_space<vmem>>, vector<1x2x2xf32>
    %106 = vector.shape_cast %105 : vector<1x2x2xf32> to vector<2x2xf32>
    %107 = vector.shape_cast %98 : vector<2x2xf32> to vector<1x2x2xf32>
    tpu.vector_store %arg10[%c5_110, %c0_111, %c0_112], %107 {strides = array<i32>} : memref<6x2x2xf32, #tpu.memory_space<vmem>>, vector<1x2x2xf32>,
    return
  }
  func.func @transform_0(%arg0: i32) -> (i32, i32, i32) {
    %c0_i32 = arith.constant 0 : i32
    %c0_i32_0 = arith.constant 0 : i32
    %c0_i32_1 = arith.constant 0 : i32
    return %arg0, %c0_i32, %c0_i32_0 : i32, i32, i32
  }
  func.func @transform_1(%arg0: i32) -> (i32, i32) {
    %c0_i32 = arith.constant 0 : i32
    %c0_i32_0 = arith.constant 0 : i32
    %c0_i32_1 = arith.constant 0 : i32
    return %c0_i32, %c0_i32_0 : i32, i32
  }
  func.func @transform_2(%arg0: i32) -> (i32, i32) {
    %c0_i32 = arith.constant 0 : i32
    %c0_i32_0 = arith.constant 0 : i32
    %c0_i32_1 = arith.constant 0 : i32
    return %c0_i32, %c0_i32_0 : i32, i32
  }
  func.func @transform_3(%arg0: i32) -> (i32, i32) {
    %c0_i32 = arith.constant 0 : i32
    %c0_i32_0 = arith.constant 0 : i32
    %c0_i32_1 = arith.constant 0 : i32
    return %c0_i32, %c0_i32_0 : i32, i32
  }
  func.func @transform_4(%arg0: i32) -> (i32, i32) {
    %c0_i32 = arith.constant 0 : i32
    %c0_i32_0 = arith.constant 0 : i32
    %c0_i32_1 = arith.constant 0 : i32
    return %c0_i32, %c0_i32_0 : i32, i32
  }
  func.func @transform_5(%arg0: i32) -> (i32, i32) {
    %c0_i32 = arith.constant 0 : i32
    %c0_i32_0 = arith.constant 0 : i32
    %c0_i32_1 = arith.constant 0 : i32
    return %c0_i32, %c0_i32_0 : i32, i32
  }
  func.func @transform_6(%arg0: i32) -> (i32, i32) {
    %c0_i32 = arith.constant 0 : i32
    %c0_i32_0 = arith.constant 0 : i32
    %c0_i32_1 = arith.constant 0 : i32
    return %c0_i32, %c0_i32_0 : i32, i32
  }
  func.func @transform_7(%arg0: i32) -> (i32, i32, i32) {
    %c0_i32 = arith.constant 0 : i32
    %c0_i32_0 = arith.constant 0 : i32
    %c0_i32_1 = arith.constant 0 : i32
    return %arg0, %c0_i32, %c0_i32_0 : i32, i32, i32
  }
  func.func @transform_8(%arg0: i32) -> (i32, i32, i32) {
    %c0_i32 = arith.constant 0 : i32
    %c0_i32_0 = arith.constant 0 : i32
    %c0_i32_1 = arith.constant 0 : i32
    return %arg0, %c0_i32, %c0_i32_0 : i32, i32, i32
  }
  func.func @transform_9(%arg0: i32) -> (i32, i32, i32) {
    %c0_i32 = arith.constant 0 : i32
    %c0_i32_0 = arith.constant 0 : i32
    %c0_i32_1 = arith.constant 0 : i32
    return %arg0, %c0_i32, %c0_i32_0 : i32, i32, i32
  }
}

</mosaic_0001>

<llo_original>
// kernel: avgpool_pyramid.1
$region0: #{avgpool_pyramid.1}
  #allocation0 [shape = 'u32[]', space=smem, size = 0x4, offset = 0x4, fixed_abs, tag = 'smem constant byte address 0x4 - core index']
  #allocation1 [shape = 'u32[144,128]{1,0:T(1,128)}', space=vmem, size = 0x12000, scoped, tag = 'internal scratch']
  %s0 = inlined_call_operand.hbm [shape: f32[12,16,16], index: 0, kind: input, shape index: {}]
  %s1 = inlined_call_operand.hbm [shape: f32[8,16], index: 1, kind: input, shape index: {}]
  %s2 = inlined_call_operand.hbm [shape: f32[16,8], index: 2, kind: input, shape index: {}]
  %s3 = inlined_call_operand.hbm [shape: f32[4,8], index: 3, kind: input, shape index: {}]
  %s4 = inlined_call_operand.vmem [shape: f32[8,4], index: 4, kind: input, shape index: {}]
  %s5 = inlined_call_operand.hbm [shape: f32[2,4], index: 5, kind: input, shape index: {}]
  %s6 = inlined_call_operand.vmem [shape: f32[4,2], index: 6, kind: input, shape index: {}]
  %s7 = inlined_call_operand.hbm [shape: f32[12,8,8], index: 7, kind: output, shape index: {0}]
  %s8 = inlined_call_operand.hbm [shape: f32[12,4,4], index: 8, kind: output, shape index: {1}]
  %s9 = inlined_call_operand.vmem [shape: f32[12,2,2], index: 9, kind: output, shape index: {2}]
  %10 = xla_tuple %s7, %s8, %s9
  %s11 = sld [smem:[#allocation0]]
  $region97: #{avgpool_pyramid.1} parent=0
    _
  %s13 = ssub.s32 1, %s11
  %s14 = scalar_select 0, %s13, %s11
  $region1: #{avgpool_pyramid.1} parent=0
    #allocation2 [shape = 'u8[98304]{0}', space=vmem, size = 0x18000, scoped, tag = 'input window, operand 0']
    #allocation3 [shape = 's32[2]{0}', space=sflag, size = 0x8, scoped, tag = 'scoped memory for avgpool_pyramid.1']
    #allocation4 [shape = 's32[2]{0}', space=sflag, size = 0x8, scoped, tag = 'scoped memory for avgpool_pyramid.1']
    #allocation5 [shape = 'u8[4096]{0}', space=vmem, size = 0x1000, scoped, tag = 'input window, operand 1, single buffered']
    #allocation6 [shape = 's32[1]{0}', space=sflag, size = 0x4, scoped, tag = 'scoped memory for avgpool_pyramid.1']
    #allocation7 [shape = 'u8[8192]{0}', space=vmem, size = 0x2000, scoped, tag = 'input window, operand 2, single buffered']
    #allocation8 [shape = 'u8[2048]{0}', space=vmem, size = 0x800, scoped, tag = 'input window, operand 3, single buffered']
    #allocation9 [shape = 's32[1]{0}', space=sflag, size = 0x4, scoped, tag = 'scoped memory for avgpool_pyramid.1']
    #allocation10 [shape = 'u8[1024]{0}', space=vmem, size = 0x400, scoped, tag = 'input window, operand 5, single buffered']
    #allocation11 [shape = 'u8[49152]{0}', space=vmem, size = 0xc000, scoped, tag = 'output window, operand 0']
    #allocation12 [shape = 'u8[24576]{0}', space=vmem, size = 0x6000, scoped, tag = 'output window, operand 1']
    #allocation13 [shape = 's32[2]{0}', space=sflag, size = 0x8, scoped, tag = 'scoped memory for avgpool_pyramid.1']
    %15 = vsyncpa [#allocation3], 0
    %s16 = scalar_lea.sflag [#allocation3], 1
    %17 = vsyncpa %s16, 0
    %18 = vsyncpa [#allocation6], 0
    %19 = vsyncpa [#allocation9], 0
    %20 = vsyncpa [#allocation4], 0
    %s21 = scalar_lea.sflag [#allocation4], 1
    %22 = vsyncpa %s21, 0
    %23 = vsyncpa [#allocation13], 0
    %s24 = scalar_lea.sflag [#allocation13], 1
    %25 = vsyncpa %s24, 0
    loop: start=0, step=1, limit=4
    $region2: #{avgpool_pyramid.1} parent=1 // loop_pre_header
      _
    $region3: #{avgpool_pyramid.1} parent=1 // loop_header
      %s27 = sphi 0, %s31
      %p28 = scmp.ge.s32.totalorder %s27, 4
      %s37 = sphi 0, %s39
      %s40 = sphi 0, %s37
      %s41 = sphi 0, %s40
      %s57 = sphi 0, %s41
      %s61 = sphi 0, %s61
      %s63 = sphi 0, %s61
      %s64 = sphi 0, %s63
      %s78 = sphi 0, %s64
      %s82 = sphi 0, %s82
      %s84 = sphi 0, %s82
      %s85 = sphi 0, %s84
      %s99 = sphi 0, %s85
      %s103 = sphi 0, %s103
      %s105 = sphi 0, %s103
      %s106 = sphi 0, %s105
      %s120 = sphi 0, %s106
      %s124 = sphi 0, %s124
      %s126 = sphi 0, %s124
      %s127 = sphi 0, %s126
      %s141 = sphi 0, %s127
      %s145 = sphi 0, %s145
      %s147 = sphi 0, %s145
      %s148 = sphi 0, %s147
      %s162 = sphi 0, %s148
      %s166 = sphi 0, %s166
      %s168 = sphi 0, %s166
      %s169 = sphi 0, %s168
      %s183 = sphi 0, %s169
      %s189 = sphi 0, %s191
      %s192 = sphi 0, %s189
      %s193 = sphi 0, %s192
      %s209 = sphi 0, %s193
      %s215 = sphi 0, %s217
      %s218 = sphi 0, %s215
      %s219 = sphi 0, %s218
      %s235 = sphi 0, %s219
      %s241 = sphi 0, %s243
      %s244 = sphi 0, %s241
      %s245 = sphi 0, %s244
      %s261 = sphi 0, %s245
    $region4: #{avgpool_pyramid.1} parent=1 // loop_header_branch
      %30 = sbr.rel (%p28) target = $region8
    $region5: #{avgpool_pyramid.1} parent=1 // loop_body
      %s32 = ssub.s32 %s27, 1
      %s33 = ssub.s32 %s27, 2
      %s34 = sadd.s32 %s27, 1
      %s35 = ssub.s32 %s27, %s34
      %p36 = scmp.eq.s32.totalorder %s35, 0
      %s38 = sadd.s32 %s37, 1
      %s39 = scalar_select %p36, %s37, %s38
      %p42 = pneg %p36
      %p43 = scmp.eq.s32.totalorder %s27, 1
      %p44 = por %p42, %p43
      %p45 = scmp.ne.s32.totalorder %s37, %s40
      %p46 = scmp.eq.s32.totalorder %s27, 0
      %p47 = por %p45, %p46
      %p48 = scmp.ne.s32.totalorder %s37, %s40
      %p49 = scmp.eq.s32.totalorder %s32, 1
      %p50 = por %p48, %p49
      %p51 = scmp.ne.s32.totalorder %s40, %s41
      %p52 = scmp.eq.s32.totalorder %s32, 0
      %p53 = por %p51, %p52
      %p54 = scmp.ne.s32.totalorder %s40, %s41
      %p55 = scmp.eq.s32.totalorder %s33, 1
      %p56 = por %p54, %p55
      %p58 = scmp.ne.s32.totalorder %s41, %s57
      %p59 = scmp.eq.s32.totalorder %s33, 0
      %p60 = por %p58, %p59
      %s62 = sadd.s32 %s61, 1
      %p65 = scmp.eq.s32.totalorder %s27, 1
      %p66 = scmp.ne.s32.totalorder %s61, %s63
      %p67 = scmp.eq.s32.totalorder %s27, 0
      %p68 = por %p66, %p67
      %p69 = scmp.ne.s32.totalorder %s61, %s63
      %p70 = scmp.eq.s32.totalorder %s32, 1
      %p71 = por %p69, %p70
      %p72 = scmp.ne.s32.totalorder %s63, %s64
      %p73 = scmp.eq.s32.totalorder %s32, 0
      %p74 = por %p72, %p73
      %p75 = scmp.ne.s32.totalorder %s63, %s64
      %p76 = scmp.eq.s32.totalorder %s33, 1
      %p77 = por %p75, %p76
      %p79 = scmp.ne.s32.totalorder %s64, %s78
      %p80 = scmp.eq.s32.totalorder %s33, 0
      %p81 = por %p79, %p80
      %s83 = sadd.s32 %s82, 1
      %p86 = scmp.eq.s32.totalorder %s27, 1
      %p87 = scmp.ne.s32.totalorder %s82, %s84
      %p88 = scmp.eq.s32.totalorder %s27, 0
      %p89 = por %p87, %p88
      %p90 = scmp.ne.s32.totalorder %s82, %s84
      %p91 = scmp.eq.s32.totalorder %s32, 1
      %p92 = por %p90, %p91
      %p93 = scmp.ne.s32.totalorder %s84, %s85
      %p94 = scmp.eq.s32.totalorder %s32, 0
      %p95 = por %p93, %p94
      %p96 = scmp.ne.s32.totalorder %s84, %s85
      %p97 = scmp.eq.s32.totalorder %s33, 1
      %p98 = por %p96, %p97
      %p100 = scmp.ne.s32.totalorder %s85, %s99
      %p101 = scmp.eq.s32.totalorder %s33, 0
      %p102 = por %p100, %p101
      %s104 = sadd.s32 %s103, 1
      %p107 = scmp.eq.s32.totalorder %s27, 1
      %p108 = scmp.ne.s32.totalorder %s103, %s105
      %p109 = scmp.eq.s32.totalorder %s27, 0
      %p110 = por %p108, %p109
      %p111 = scmp.ne.s32.totalorder %s103, %s105
      %p112 = scmp.eq.s32.totalorder %s32, 1
      %p113 = por %p111, %p112
      %p114 = scmp.ne.s32.totalorder %s105, %s106
      %p115 = scmp.eq.s32.totalorder %s32, 0
      %p116 = por %p114, %p115
      %p117 = scmp.ne.s32.totalorder %s105, %s106
      %p118 = scmp.eq.s32.totalorder %s33, 1
      %p119 = por %p117, %p118
      %p121 = scmp.ne.s32.totalorder %s106, %s120
      %p122 = scmp.eq.s32.totalorder %s33, 0
      %p123 = por %p121, %p122
      %s125 = sadd.s32 %s124, 1
      %p128 = scmp.eq.s32.totalorder %s27, 1
      %p129 = scmp.ne.s32.totalorder %s124, %s126
      %p130 = scmp.eq.s32.totalorder %s27, 0
      %p131 = por %p129, %p130
      %p132 = scmp.ne.s32.totalorder %s124, %s126
      %p133 = scmp.eq.s32.totalorder %s32, 1
      %p134 = por %p132, %p133
      %p135 = scmp.ne.s32.totalorder %s126, %s127
      %p136 = scmp.eq.s32.totalorder %s32, 0
      %p137 = por %p135, %p136
      %p138 = scmp.ne.s32.totalorder %s126, %s127
      %p139 = scmp.eq.s32.totalorder %s33, 1
      %p140 = por %p138, %p139
      %p142 = scmp.ne.s32.totalorder %s127, %s141
      %p143 = scmp.eq.s32.totalorder %s33, 0
      %p144 = por %p142, %p143
      %s146 = sadd.s32 %s145, 1
      %p149 = scmp.eq.s32.totalorder %s27, 1
      %p150 = scmp.ne.s32.totalorder %s145, %s147
      %p151 = scmp.eq.s32.totalorder %s27, 0
      %p152 = por %p150, %p151
      %p153 = scmp.ne.s32.totalorder %s145, %s147
      %p154 = scmp.eq.s32.totalorder %s32, 1
      %p155 = por %p153, %p154
      %p156 = scmp.ne.s32.totalorder %s147, %s148
      %p157 = scmp.eq.s32.totalorder %s32, 0
      %p158 = por %p156, %p157
      %p159 = scmp.ne.s32.totalorder %s147, %s148
      %p160 = scmp.eq.s32.totalorder %s33, 1
      %p161 = por %p159, %p160
      %p163 = scmp.ne.s32.totalorder %s148, %s162
      %p164 = scmp.eq.s32.totalorder %s33, 0
      %p165 = por %p163, %p164
      %s167 = sadd.s32 %s166, 1
      %p170 = scmp.eq.s32.totalorder %s27, 1
      %p171 = scmp.ne.s32.totalorder %s166, %s168
      %p172 = scmp.eq.s32.totalorder %s27, 0
      %p173 = por %p171, %p172
      %p174 = scmp.ne.s32.totalorder %s166, %s168
      %p175 = scmp.eq.s32.totalorder %s32, 1
      %p176 = por %p174, %p175
      %p177 = scmp.ne.s32.totalorder %s168, %s169
      %p178 = scmp.eq.s32.totalorder %s32, 0
      %p179 = por %p177, %p178
      %p180 = scmp.ne.s32.totalorder %s168, %s169
      %p181 = scmp.eq.s32.totalorder %s33, 1
      %p182 = por %p180, %p181
      %p184 = scmp.ne.s32.totalorder %s169, %s183
      %p185 = scmp.eq.s32.totalorder %s33, 0
      %p186 = por %p184, %p185
      %s187 = ssub.s32 %s27, %s34
      %p188 = scmp.eq.s32.totalorder %s187, 0
      %s190 = sadd.s32 %s189, 1
      %s191 = scalar_select %p188, %s189, %s190
      %p194 = pneg %p188
      %p195 = scmp.eq.s32.totalorder %s27, 1
      %p196 = por %p194, %p195
      %p197 = scmp.ne.s32.totalorder %s189, %s192
      %p198 = scmp.eq.s32.totalorder %s27, 0
      %p199 = por %p197, %p198
      %p200 = scmp.ne.s32.totalorder %s189, %s192
      %p201 = scmp.eq.s32.totalorder %s32, 1
      %p202 = por %p200, %p201
      %p203 = scmp.ne.s32.totalorder %s192, %s193
      %p204 = scmp.eq.s32.totalorder %s32, 0
      %p205 = por %p203, %p204
      %p206 = scmp.ne.s32.totalorder %s192, %s193
      %p207 = scmp.eq.s32.totalorder %s33, 1
      %p208 = por %p206, %p207
      %p210 = scmp.ne.s32.totalorder %s193, %s209
      %p211 = scmp.eq.s32.totalorder %s33, 0
      %p212 = por %p210, %p211
      %s213 = ssub.s32 %s27, %s34
      %p214 = scmp.eq.s32.totalorder %s213, 0
      %s216 = sadd.s32 %s215, 1
      %s217 = scalar_select %p214, %s215, %s216
      %p220 = pneg %p214
      %p221 = scmp.eq.s32.totalorder %s27, 1
      %p222 = por %p220, %p221
      %p223 = scmp.ne.s32.totalorder %s215, %s218
      %p224 = scmp.eq.s32.totalorder %s27, 0
      %p225 = por %p223, %p224
      %p226 = scmp.ne.s32.totalorder %s215, %s218
      %p227 = scmp.eq.s32.totalorder %s32, 1
      %p228 = por %p226, %p227
      %p229 = scmp.ne.s32.totalorder %s218, %s219
      %p230 = scmp.eq.s32.totalorder %s32, 0
      %p231 = por %p229, %p230
      %p232 = scmp.ne.s32.totalorder %s218, %s219
      %p233 = scmp.eq.s32.totalorder %s33, 1
      %p234 = por %p232, %p233
      %p236 = scmp.ne.s32.totalorder %s219, %s235
      %p237 = scmp.eq.s32.totalorder %s33, 0
      %p238 = por %p236, %p237
      %s239 = ssub.s32 %s27, %s34
      %p240 = scmp.eq.s32.totalorder %s239, 0
      %s242 = sadd.s32 %s241, 1
      %s243 = scalar_select %p240, %s241, %s242
      %p246 = pneg %p240
      %p247 = scmp.eq.s32.totalorder %s27, 1
      %p248 = por %p246, %p247
      %p249 = scmp.ne.s32.totalorder %s241, %s244
      %p250 = scmp.eq.s32.totalorder %s27, 0
      %p251 = por %p249, %p250
      %p252 = scmp.ne.s32.totalorder %s241, %s244
      %p253 = scmp.eq.s32.totalorder %s32, 1
      %p254 = por %p252, %p253
      %p255 = scmp.ne.s32.totalorder %s244, %s245
      %p256 = scmp.eq.s32.totalorder %s32, 0
      %p257 = por %p255, %p256
      %p258 = scmp.ne.s32.totalorder %s244, %s245
      %p259 = scmp.eq.s32.totalorder %s33, 1
      %p260 = por %p258, %p259
      %p262 = scmp.ne.s32.totalorder %s245, %s261
      %p263 = scmp.eq.s32.totalorder %s33, 0
      %p264 = por %p262, %p263
      %p265 = scmp.le.s32.totalorder 1, %s27
      %p266 = scmp.lt.s32.totalorder %s27, 3
      %p267 = pnand %p265, %p266
      %p268 = pneg %p267
      // Predicated region
      $region9: #{avgpool_pyramid.1} parent=5 // pred_check
        _
      $region10: #{avgpool_pyramid.1} parent=5 // pred_check_branch
        %270 = sbr.rel (%p267) target = $region12
      $region11: #{avgpool_pyramid.1} parent=5 // pred_region
        %s271 = ssub.s32 %s27, 1
        // Predicated region
        $region13: #{avgpool_pyramid.1} parent=11 // pred_check
          %p272 = pneg %p74
        $region14: #{avgpool_pyramid.1} parent=11 // pred_check_branch
          %274 = sbr.rel (%p272) target = $region16
        $region15: #{avgpool_pyramid.1} parent=11 // pred_region
          %s276 = ssub.s32 128, 128
          %277 = vsyncadd [#allocation6], %s276
          %s279 = sshll.u32 [#allocation5], 4
          %s280 = int_to_ptr.vmem [resolvable:$true] %s279
          %282 = dma.hbm_to_vmem [thread:$0]  %s1, 128, %s280, [#allocation6]
        $region16: #{avgpool_pyramid.1} parent=11 // pred_fallthru
          _
        // Predicated region
        $region17: #{avgpool_pyramid.1} parent=11 // pred_check
          %p283 = pneg %p95
        $region18: #{avgpool_pyramid.1} parent=11 // pred_check_branch
          %285 = sbr.rel (%p283) target = $region20
        $region19: #{avgpool_pyramid.1} parent=11 // pred_region
          %s287 = ssub.s32 256, 256
          %288 = vsyncadd [#allocation6], %s287
          %s289 = sshll.u32 [#allocation7], 4
          %s290 = int_to_ptr.vmem [resolvable:$true] %s289
          %295 = dma.hbm_to_vmem [thread:$0]  %s2, 256, %s290, [#allocation6], 128, 128, 8
        $region20: #{avgpool_pyramid.1} parent=11 // pred_fallthru
          _
        // Predicated region
        $region21: #{avgpool_pyramid.1} parent=11 // pred_check
          %p296 = pneg %p116
        $region22: #{avgpool_pyramid.1} parent=11 // pred_check_branch
          %298 = sbr.rel (%p296) target = $region24
        $region23: #{avgpool_pyramid.1} parent=11 // pred_region
          %s300 = ssub.s32 64, 64
          %301 = vsyncadd [#allocation9], %s300
          %s303 = sshll.u32 [#allocation8], 4
          %s304 = int_to_ptr.vmem [resolvable:$true] %s303
          %306 = dma.hbm_to_vmem [thread:$0]  %s3, 64, %s304, [#allocation9]
        $region24: #{avgpool_pyramid.1} parent=11 // pred_fallthru
          _
        // Predicated region
        $region25: #{avgpool_pyramid.1} parent=11 // pred_check
          %p307 = pneg %p137
        $region26: #{avgpool_pyramid.1} parent=11 // pred_check_branch
          %309 = sbr.rel (%p307) target = $region28
        $region27: #{avgpool_pyramid.1} parent=11 // pred_region
          _
        $region28: #{avgpool_pyramid.1} parent=11 // pred_fallthru
          _
        // Predicated region
        $region29: #{avgpool_pyramid.1} parent=11 // pred_check
          %p310 = pneg %p158
        $region30: #{avgpool_pyramid.1} parent=11 // pred_check_branch
          %312 = sbr.rel (%p310) target = $region32
        $region31: #{avgpool_pyramid.1} parent=11 // pred_region
          %s314 = ssub.s32 32, 32
          %315 = vsyncadd [#allocation9], %s314
          %s317 = sshll.u32 [#allocation10], 4
          %s318 = int_to_ptr.vmem [resolvable:$true] %s317
          %320 = dma.hbm_to_vmem [thread:$0]  %s5, 32, %s318, [#allocation9]
        $region32: #{avgpool_pyramid.1} parent=11 // pred_fallthru
          _
        // Predicated region
        $region33: #{avgpool_pyramid.1} parent=11 // pred_check
          %p321 = pneg %p179
        $region34: #{avgpool_pyramid.1} parent=11 // pred_check_branch
          %323 = sbr.rel (%p321) target = $region36
        $region35: #{avgpool_pyramid.1} parent=11 // pred_region
          _
        $region36: #{avgpool_pyramid.1} parent=11 // pred_fallthru
          _
      $region12: #{avgpool_pyramid.1} parent=5 // pred_fallthru
        _
      %p324 = scmp.lt.s32.totalorder %s27, 2
      // Predicated region
      $region37: #{avgpool_pyramid.1} parent=5 // pred_check
        %p325 = pneg %p324
      $region38: #{avgpool_pyramid.1} parent=5 // pred_check_branch
        %327 = sbr.rel (%p325) target = $region40
      $region39: #{avgpool_pyramid.1} parent=5 // pred_region
        // Predicated region
        $region41: #{avgpool_pyramid.1} parent=39 // pred_check
          %p328 = pneg %p47
        $region42: #{avgpool_pyramid.1} parent=39 // pred_check_branch
          %330 = sbr.rel (%p328) target = $region44
        $region43: #{avgpool_pyramid.1} parent=39 // pred_region
          %s331 = sand.u32 %s37, 1
          %s332 = scalar_lea.sflag [#allocation3], %s331
          %s333 = sand.u32 %s37, 1
          %s334 = smul.addr %s333, 96
          %s335 = scalar_lea.vmem [#allocation2], %s334
          %s336 = smul.u32 6, %s27
          %s338 = ssub.s32 1536, 1536
          %339 = vsyncadd %s332, %s338
          %s340 = smul.addr %s336, 2
          %s341 = smul.addr %s340, 128
          %s342 = scalar_lea.hbm %s0, %s341
          %s343 = sshll.u32 %s335, 4
          %s344 = int_to_ptr.vmem [resolvable:$true] %s343
          %349 = dma.hbm_to_vmem [thread:$0]  %s342, 1536, %s344, %s332, 128, 128, 8
        $region44: #{avgpool_pyramid.1} parent=39 // pred_fallthru
          _
      $region40: #{avgpool_pyramid.1} parent=5 // pred_fallthru
        _
      %p350 = scmp.le.s32.totalorder 1, %s27
      %p351 = scmp.lt.s32.totalorder %s27, 3
      %p352 = pnand %p350, %p351
      %p353 = pneg %p352
      // Predicated region
      $region45: #{avgpool_pyramid.1} parent=5 // pred_check
        _
      $region46: #{avgpool_pyramid.1} parent=5 // pred_check_branch
        %355 = sbr.rel (%p352) target = $region48
      $region47: #{avgpool_pyramid.1} parent=5 // pred_region
        %s356 = ssub.s32 %s27, 1
        %s357 = sand.u32 %s40, 1
        %s358 = scalar_lea.sflag [#allocation3], %s357
        %s359 = sand.u32 %s40, 1
        %s360 = smul.addr %s359, 96
        %s361 = scalar_lea.vmem [#allocation2], %s360
        // Predicated region
        $region49: #{avgpool_pyramid.1} parent=47 // pred_check
          %p362 = pneg %p53
        $region50: #{avgpool_pyramid.1} parent=47 // pred_check_branch
          %364 = sbr.rel (%p362) target = $region52
        $region51: #{avgpool_pyramid.1} parent=47 // pred_region
          %365 = dma.done %s358, 1536
        $region52: #{avgpool_pyramid.1} parent=47 // pred_fallthru
          _
        // Predicated region
        $region53: #{avgpool_pyramid.1} parent=47 // pred_check
          %p366 = pneg %p74
        $region54: #{avgpool_pyramid.1} parent=47 // pred_check_branch
          %368 = sbr.rel (%p366) target = $region56
        $region55: #{avgpool_pyramid.1} parent=47 // pred_region
          %369 = dma.done [#allocation6], 128
        $region56: #{avgpool_pyramid.1} parent=47 // pred_fallthru
          _
        // Predicated region
        $region57: #{avgpool_pyramid.1} parent=47 // pred_check
          %p370 = pneg %p95
        $region58: #{avgpool_pyramid.1} parent=47 // pred_check_branch
          %372 = sbr.rel (%p370) target = $region60
        $region59: #{avgpool_pyramid.1} parent=47 // pred_region
          %373 = dma.done [#allocation6], 256
        $region60: #{avgpool_pyramid.1} parent=47 // pred_fallthru
          _
        // Predicated region
        $region61: #{avgpool_pyramid.1} parent=47 // pred_check
          %p374 = pneg %p116
        $region62: #{avgpool_pyramid.1} parent=47 // pred_check_branch
          %376 = sbr.rel (%p374) target = $region64
        $region63: #{avgpool_pyramid.1} parent=47 // pred_region
          %377 = dma.done [#allocation9], 64
        $region64: #{avgpool_pyramid.1} parent=47 // pred_fallthru
          _
        // Predicated region
        $region65: #{avgpool_pyramid.1} parent=47 // pred_check
          %p378 = pneg %p158
        $region66: #{avgpool_pyramid.1} parent=47 // pred_check_branch
          %380 = sbr.rel (%p378) target = $region68
        $region67: #{avgpool_pyramid.1} parent=47 // pred_region
          %381 = dma.done [#allocation9], 32
        $region68: #{avgpool_pyramid.1} parent=47 // pred_fallthru
          _
        %s382 = sand.u32 %s40, 1
        %s383 = scalar_lea.sflag [#allocation3], %s382
        %s384 = sand.u32 %s40, 1
        %s385 = smul.addr %s384, 96
        %s386 = scalar_lea.vmem [#allocation2], %s385
        %p387 = pneg %p53
        %p388 = pneg %p50
        %p389 = pneg %p74
        %p390 = pneg %p71
        %p391 = pneg %p95
        %p392 = pneg %p92
        %p393 = pneg %p116
        %p394 = pneg %p113
        %p395 = pneg %p137
        %p396 = pneg %p134
        %p397 = pneg %p158
        %p398 = pneg %p155
        %p399 = pneg %p179
        %p400 = pneg %p176
        %p401 = pneg %p205
        %p402 = pneg %p202
        %s403 = sand.u32 %s192, 1
        %s404 = scalar_lea.sflag [#allocation4], %s403
        %s405 = sand.u32 %s192, 1
        %s406 = smul.addr %s405, 48
        %s407 = scalar_lea.vmem [#allocation11], %s406
        %p408 = pneg %p231
        %p409 = pneg %p228
        %s410 = sand.u32 %s218, 1
        %s411 = scalar_lea.sflag [#allocation13], %s410
        %s412 = sand.u32 %s218, 1
        %s413 = smul.addr %s412, 24
        %s414 = scalar_lea.vmem [#allocation12], %s413
        %p415 = pneg %p257
        %p416 = pneg %p254
        %s417 = smul.u32 6, %s32
        %p418 = scmp.lt.s32.totalorder %s417, 11
        %s419 = scalar_select %p418, %s417, 11
        %s420 = smul.addr %s419, 2
        %s421 = scalar_lea.vmem %s9, %s420
        %s422 = smul.u32 6, %s32
        %s423 = smul.u32 6, %s32
        %s424 = smul.u32 6, %s32
        %s425 = smul.u32 6, %s32
        %p426 = scmp.lt.s32.totalorder %s425, 11
        %s427 = scalar_select %p426, %s425, 11
        %s428 = smul.addr %s427, 2
        %s429 = scalar_lea.vmem %s9, %s428
        %s430 = smul.u32 6, %s32
        %v431 = vld [vmem:[#allocation5] sm:$0xff]
        %v432 = vld [vmem:[#allocation7] sm:$0xff]
        %v433 = vld [vmem:[#allocation7 + $0x8] sm:$0xff]
        %v434 = vld [vmem:[#allocation8] sm:$0xf]
        %v435 = vld [vmem:[%s4] sm:$0xff]
        %v436 = vld [vmem:[#allocation10] sm:$0x3]
        %v437 = vld [vmem:[%s6] sm:$0xf]
        %v438 = vld [vmem:[%s361] sm:$0xff]
        %v439 = vld [vmem:[%s361 + $0x8] sm:$0xff]
        %vm440 = vcmask 130048
        %v442 = vsel %vm440, %v431, 0
        %444 = vmatprep.subr.mxu0 0.0
        %445 = vmatpush1.msra.mxu0 0.0
        %446 = vmatprep.subr.mxu0 0.0
        %447 = vmatpush1.msra.mxu0 0.0
        %448 = vmatprep.subr.mxu0 0.0
        %449 = vmatpush1.msra.mxu0 0.0
        %450 = vmatprep.subr.mxu0 0.0
        %451 = vmatpush1.msra.mxu0 0.0
        %452 = vmatprep.subr.mxu0 0.0
        %453 = vmatpush1.msra.mxu0 0.0
        %454 = vmatprep.subr.mxu0 0.0
        %455 = vmatpush1.msra.mxu0 0.0
        %456 = vmatprep.subr.mxu0 0.0
        %457 = vmatpush1.msra.mxu0 0.0
        %458 = vmatprep.subr.mxu0 0.0
        %459 = vmatpush1.msra.mxu0 0.0
        %460 = vmatprep.subr.mxu0 0.0
        %461 = vmatpush1.msra.mxu0 0.0
        %462 = vmatprep.subr.mxu0 0.0
        %463 = vmatpush1.msra.mxu0 0.0
        %464 = vmatprep.subr.mxu0 0.0
        %465 = vmatpush1.msra.mxu0 0.0
        %466 = vmatprep.subr.mxu0 0.0
        %467 = vmatpush1.msra.mxu0 0.0
        %468 = vmatprep.subr.mxu0 0.0
        %469 = vmatpush1.msra.mxu0 0.0
        %470 = vmatprep.subr.mxu0 0.0
        %471 = vmatpush1.msra.mxu0 0.0
        %472 = vmatprep.subr.mxu0 0.0
        %473 = vmatpush1.msra.mxu0 %v439
        %474 = vmatprep.subr.mxu0 0.0
        %475 = vmatpush1.msra.mxu0 %v438
        %476 = vmatprep.subr.mxu0 0.0
        %477 = vmatpush2.msra.mxu0 0.0
        %478 = vmatprep.subr.mxu0 0.0
        %479 = vmatpush2.msra.mxu0 0.0
        %480 = vmatprep.subr.mxu0 0.0
        %481 = vmatpush2.msra.mxu0 0.0
        %482 = vmatprep.subr.mxu0 0.0
        %483 = vmatpush2.msra.mxu0 0.0
        %484 = vmatprep.subr.mxu0 0.0
        %485 = vmatpush2.msra.mxu0 0.0
        %486 = vmatprep.subr.mxu0 0.0
        %487 = vmatpush2.msra.mxu0 0.0
        %488 = vmatprep.subr.mxu0 0.0
        %489 = vmatpush2.msra.mxu0 0.0
        %490 = vmatprep.subr.mxu0 0.0
        %491 = vmatpush2.msra.mxu0 0.0
        %492 = vmatprep.subr.mxu0 0.0
        %493 = vmatpush2.msra.mxu0 0.0
        %494 = vmatprep.subr.mxu0 0.0
        %495 = vmatpush2.msra.mxu0 0.0
        %496 = vmatprep.subr.mxu0 0.0
        %497 = vmatpush2.msra.mxu0 0.0
        %498 = vmatprep.subr.mxu0 0.0
        %499 = vmatpush2.msra.mxu0 0.0
        %500 = vmatprep.subr.mxu0 0.0
        %501 = vmatpush2.msra.mxu0 0.0
        %502 = vmatprep.subr.mxu0 0.0
        %503 = vmatpush2.msra.mxu0 0.0
        %504 = vmatprep.subr.mxu0 0.0
        %505 = vmatpush2.msra.mxu0 0.0
        %506 = vmatprep.subr.mxu0 0.0
        %507 = vmatpush2.msra.mxu0 0.0
        %508 = vmatprep.mubr.f32.mxu0 0.0
        %509 = vmatmul.mubr.f32.gmra.mxu0 %v442
        %v510 = vpop.f32.mrf.mxu0
        %v511 = vadd.f32 0.0, %v510
        %v512 = vpop.f32.mrf.mxu0
        %513 = vdwg.mxu0
        %v515 = vsel %vm440, %v511, 0
        %517 = vmatprep.subr.mxu0 0.0
        %518 = vmatpush1.msra.mxu0 0.0
        %519 = vmatprep.subr.mxu0 0.0
        %520 = vmatpush1.msra.mxu0 0.0
        %521 = vmatprep.subr.mxu0 0.0
        %522 = vmatpush1.msra.mxu0 0.0
        %523 = vmatprep.subr.mxu0 0.0
        %524 = vmatpush1.msra.mxu0 0.0
        %525 = vmatprep.subr.mxu0 0.0
        %526 = vmatpush1.msra.mxu0 0.0
        %527 = vmatprep.subr.mxu0 0.0
        %528 = vmatpush1.msra.mxu0 0.0
        %529 = vmatprep.subr.mxu0 0.0
        %530 = vmatpush1.msra.mxu0 0.0
        %531 = vmatprep.subr.mxu0 0.0
        %532 = vmatpush1.msra.mxu0 0.0
        %533 = vmatprep.subr.mxu0 0.0
        %534 = vmatpush1.msra.mxu0 0.0
        %535 = vmatprep.subr.mxu0 0.0
        %536 = vmatpush1.msra.mxu0 0.0
        %537 = vmatprep.subr.mxu0 0.0
        %538 = vmatpush1.msra.mxu0 0.0
        %539 = vmatprep.subr.mxu0 0.0
        %540 = vmatpush1.msra.mxu0 0.0
        %541 = vmatprep.subr.mxu0 0.0
        %542 = vmatpush1.msra.mxu0 0.0
        %543 = vmatprep.subr.mxu0 0.0
        %544 = vmatpush1.msra.mxu0 0.0
        %545 = vmatprep.subr.mxu0 0.0
        %546 = vmatpush1.msra.mxu0 %v433
        %547 = vmatprep.subr.mxu0 0.0
        %548 = vmatpush1.msra.mxu0 %v432
        %549 = vmatprep.subr.mxu0 0.0
        %550 = vmatpush2.msra.mxu0 0.0
        %551 = vmatprep.subr.mxu0 0.0
        %552 = vmatpush2.msra.mxu0 0.0
        %553 = vmatprep.subr.mxu0 0.0
        %554 = vmatpush2.msra.mxu0 0.0
        %555 = vmatprep.subr.mxu0 0.0
        %556 = vmatpush2.msra.mxu0 0.0
        %557 = vmatprep.subr.mxu0 0.0
        %558 = vmatpush2.msra.mxu0 0.0
        %559 = vmatprep.subr.mxu0 0.0
        %560 = vmatpush2.msra.mxu0 0.0
        %561 = vmatprep.subr.mxu0 0.0
        %562 = vmatpush2.msra.mxu0 0.0
        %563 = vmatprep.subr.mxu0 0.0
        %564 = vmatpush2.msra.mxu0 0.0
        %565 = vmatprep.subr.mxu0 0.0
        %566 = vmatpush2.msra.mxu0 0.0
        %567 = vmatprep.subr.mxu0 0.0
        %568 = vmatpush2.msra.mxu0 0.0
        %569 = vmatprep.subr.mxu0 0.0
        %570 = vmatpush2.msra.mxu0 0.0
        %571 = vmatprep.subr.mxu0 0.0
        %572 = vmatpush2.msra.mxu0 0.0
        %573 = vmatprep.subr.mxu0 0.0
        %574 = vmatpush2.msra.mxu0 0.0
        %575 = vmatprep.subr.mxu0 0.0
        %576 = vmatpush2.msra.mxu0 0.0
        %577 = vmatprep.subr.mxu0 0.0
        %578 = vmatpush2.msra.mxu0 0.0
        %579 = vmatprep.subr.mxu0 0.0
        %580 = vmatpush2.msra.mxu0 0.0
        %581 = vmatprep.mubr.f32.mxu0 0.0
        %582 = vmatmul.mubr.f32.gmra.mxu0 %v515
        %v583 = vpop.f32.mrf.mxu0
        %v584 = vadd.f32 0.0, %v583
        %v585 = vpop.f32.mrf.mxu0
        %586 = vdwg.mxu0
        %vm587 = vcmask 64512
        %v589 = vsel %vm587, %v434, 0
        %591 = vmatprep.subr.mxu0 0.0
        %592 = vmatpush1.msra.mxu0 0.0
        %593 = vmatprep.subr.mxu0 0.0
        %594 = vmatpush1.msra.mxu0 0.0
        %595 = vmatprep.subr.mxu0 0.0
        %596 = vmatpush1.msra.mxu0 0.0
        %597 = vmatprep.subr.mxu0 0.0
        %598 = vmatpush1.msra.mxu0 0.0
        %599 = vmatprep.subr.mxu0 0.0
        %600 = vmatpush1.msra.mxu0 0.0
        %601 = vmatprep.subr.mxu0 0.0
        %602 = vmatpush1.msra.mxu0 0.0
        %603 = vmatprep.subr.mxu0 0.0
        %604 = vmatpush1.msra.mxu0 0.0
        %605 = vmatprep.subr.mxu0 0.0
        %606 = vmatpush1.msra.mxu0 0.0
        %607 = vmatprep.subr.mxu0 0.0
        %608 = vmatpush1.msra.mxu0 0.0
        %609 = vmatprep.subr.mxu0 0.0
        %610 = vmatpush1.msra.mxu0 0.0
        %611 = vmatprep.subr.mxu0 0.0
        %612 = vmatpush1.msra.mxu0 0.0
        %613 = vmatprep.subr.mxu0 0.0
        %614 = vmatpush1.msra.mxu0 0.0
        %615 = vmatprep.subr.mxu0 0.0
        %616 = vmatpush1.msra.mxu0 0.0
        %617 = vmatprep.subr.mxu0 0.0
        %618 = vmatpush1.msra.mxu0 0.0
        %619 = vmatprep.subr.mxu0 0.0
        %620 = vmatpush1.msra.mxu0 0.0
        %621 = vmatprep.subr.mxu0 0.0
        %622 = vmatpush1.msra.mxu0 %v584
        %623 = vmatprep.subr.mxu0 0.0
        %624 = vmatpush2.msra.mxu0 0.0
        %625 = vmatprep.subr.mxu0 0.0
        %626 = vmatpush2.msra.mxu0 0.0
        %627 = vmatprep.subr.mxu0 0.0
        %628 = vmatpush2.msra.mxu0 0.0
        %629 = vmatprep.subr.mxu0 0.0
        %630 = vmatpush2.msra.mxu0 0.0
        %631 = vmatprep.subr.mxu0 0.0
        %632 = vmatpush2.msra.mxu0 0.0
        %633 = vmatprep.subr.mxu0 0.0
        %634 = vmatpush2.msra.mxu0 0.0
        %635 = vmatprep.subr.mxu0 0.0
        %636 = vmatpush2.msra.mxu0 0.0
        %637 = vmatprep.subr.mxu0 0.0
        %638 = vmatpush2.msra.mxu0 0.0
        %639 = vmatprep.subr.mxu0 0.0
        %640 = vmatpush2.msra.mxu0 0.0
        %641 = vmatprep.subr.mxu0 0.0
        %642 = vmatpush2.msra.mxu0 0.0
        %643 = vmatprep.subr.mxu0 0.0
        %644 = vmatpush2.msra.mxu0 0.0
        %645 = vmatprep.subr.mxu0 0.0
        %646 = vmatpush2.msra.mxu0 0.0
        %647 = vmatprep.subr.mxu0 0.0
        %648 = vmatpush2.msra.mxu0 0.0
        %649 = vmatprep.subr.mxu0 0.0
        %650 = vmatpush2.msra.mxu0 0.0
        %651 = vmatprep.subr.mxu0 0.0
        %652 = vmatpush2.msra.mxu0 0.0
        %653 = vmatprep.subr.mxu0 0.0
        %654 = vmatpush2.msra.mxu0 0.0
        %655 = vmatprep.mubr.f32.mxu0 0.0
        %656 = vmatmul.mubr.f32.gmra.mxu0 %v589
        %v657 = vpop.f32.mrf.mxu0
        %v658 = vadd.f32 0.0, %v657
        %v659 = vpop.f32.mrf.mxu0
        %660 = vdwg.mxu0
        %v662 = vsel %vm587, %v658, 0
        %664 = vmatprep.subr.mxu0 0.0
        %665 = vmatpush1.msra.mxu0 0.0
        %666 = vmatprep.subr.mxu0 0.0
        %667 = vmatpush1.msra.mxu0 0.0
        %668 = vmatprep.subr.mxu0 0.0
        %669 = vmatpush1.msra.mxu0 0.0
        %670 = vmatprep.subr.mxu0 0.0
        %671 = vmatpush1.msra.mxu0 0.0
        %672 = vmatprep.subr.mxu0 0.0
        %673 = vmatpush1.msra.mxu0 0.0
        %674 = vmatprep.subr.mxu0 0.0
        %675 = vmatpush1.msra.mxu0 0.0
        %676 = vmatprep.subr.mxu0 0.0
        %677 = vmatpush1.msra.mxu0 0.0
        %678 = vmatprep.subr.mxu0 0.0
        %679 = vmatpush1.msra.mxu0 0.0
        %680 = vmatprep.subr.mxu0 0.0
        %681 = vmatpush1.msra.mxu0 0.0
        %682 = vmatprep.subr.mxu0 0.0
        %683 = vmatpush1.msra.mxu0 0.0
        %684 = vmatprep.subr.mxu0 0.0
        %685 = vmatpush1.msra.mxu0 0.0
        %686 = vmatprep.subr.mxu0 0.0
        %687 = vmatpush1.msra.mxu0 0.0
        %688 = vmatprep.subr.mxu0 0.0
        %689 = vmatpush1.msra.mxu0 0.0
        %690 = vmatprep.subr.mxu0 0.0
        %691 = vmatpush1.msra.mxu0 0.0
        %692 = vmatprep.subr.mxu0 0.0
        %693 = vmatpush1.msra.mxu0 0.0
        %694 = vmatprep.subr.mxu0 0.0
        %695 = vmatpush1.msra.mxu0 %v435
        %696 = vmatprep.subr.mxu0 0.0
        %697 = vmatpush2.msra.mxu0 0.0
        %698 = vmatprep.subr.mxu0 0.0
        %699 = vmatpush2.msra.mxu0 0.0
        %700 = vmatprep.subr.mxu0 0.0
        %701 = vmatpush2.msra.mxu0 0.0
        %702 = vmatprep.subr.mxu0 0.0
        %703 = vmatpush2.msra.mxu0 0.0
        %704 = vmatprep.subr.mxu0 0.0
        %705 = vmatpush2.msra.mxu0 0.0
        %706 = vmatprep.subr.mxu0 0.0
        %707 = vmatpush2.msra.mxu0 0.0
        %708 = vmatprep.subr.mxu0 0.0
        %709 = vmatpush2.msra.mxu0 0.0
        %710 = vmatprep.subr.mxu0 0.0
        %711 = vmatpush2.msra.mxu0 0.0
        %712 = vmatprep.subr.mxu0 0.0
        %713 = vmatpush2.msra.mxu0 0.0
        %714 = vmatprep.subr.mxu0 0.0
        %715 = vmatpush2.msra.mxu0 0.0
        %716 = vmatprep.subr.mxu0 0.0
        %717 = vmatpush2.msra.mxu0 0.0
        %718 = vmatprep.subr.mxu0 0.0
        %719 = vmatpush2.msra.mxu0 0.0
        %720 = vmatprep.subr.mxu0 0.0
        %721 = vmatpush2.msra.mxu0 0.0
        %722 = vmatprep.subr.mxu0 0.0
        %723 = vmatpush2.msra.mxu0 0.0
        %724 = vmatprep.subr.mxu0 0.0
        %725 = vmatpush2.msra.mxu0 0.0
        %726 = vmatprep.subr.mxu0 0.0
        %727 = vmatpush2.msra.mxu0 0.0
        %728 = vmatprep.mubr.f32.mxu0 0.0
        %729 = vmatmul.mubr.f32.gmra.mxu0 %v662
        %v730 = vpop.f32.mrf.mxu0
        %v731 = vadd.f32 0.0, %v730
        %v732 = vpop.f32.mrf.mxu0
        %733 = vdwg.mxu0
        %vm734 = vcmask 31744
        %v736 = vsel %vm734, %v436, 0
        %vm738 = vcmask 1043456
        %v740 = vsel %vm738, %v731, 0
        %742 = vmatprep.subr.mxu0 0.0
        %743 = vmatpush1.msra.mxu0 0.0
        %744 = vmatprep.subr.mxu0 0.0
        %745 = vmatpush1.msra.mxu0 0.0
        %746 = vmatprep.subr.mxu0 0.0
        %747 = vmatpush1.msra.mxu0 0.0
        %748 = vmatprep.subr.mxu0 0.0
        %749 = vmatpush1.msra.mxu0 0.0
        %750 = vmatprep.subr.mxu0 0.0
        %751 = vmatpush1.msra.mxu0 0.0
        %752 = vmatprep.subr.mxu0 0.0
        %753 = vmatpush1.msra.mxu0 0.0
        %754 = vmatprep.subr.mxu0 0.0
        %755 = vmatpush1.msra.mxu0 0.0
        %756 = vmatprep.subr.mxu0 0.0
        %757 = vmatpush1.msra.mxu0 0.0
        %758 = vmatprep.subr.mxu0 0.0
        %759 = vmatpush1.msra.mxu0 0.0
        %760 = vmatprep.subr.mxu0 0.0
        %761 = vmatpush1.msra.mxu0 0.0
        %762 = vmatprep.subr.mxu0 0.0
        %763 = vmatpush1.msra.mxu0 0.0
        %764 = vmatprep.subr.mxu0 0.0
        %765 = vmatpush1.msra.mxu0 0.0
        %766 = vmatprep.subr.mxu0 0.0
        %767 = vmatpush1.msra.mxu0 0.0
        %768 = vmatprep.subr.mxu0 0.0
        %769 = vmatpush1.msra.mxu0 0.0
        %770 = vmatprep.subr.mxu0 0.0
        %771 = vmatpush1.msra.mxu0 0.0
        %772 = vmatprep.subr.mxu0 0.0
        %773 = vmatpush1.msra.mxu0 %v740
        %774 = vmatprep.subr.mxu0 0.0
        %775 = vmatpush2.msra.mxu0 0.0
        %776 = vmatprep.subr.mxu0 0.0
        %777 = vmatpush2.msra.mxu0 0.0
        %778 = vmatprep.subr.mxu0 0.0
        %779 = vmatpush2.msra.mxu0 0.0
        %780 = vmatprep.subr.mxu0 0.0
        %781 = vmatpush2.msra.mxu0 0.0
        %782 = vmatprep.subr.mxu0 0.0
        %783 = vmatpush2.msra.mxu0 0.0
        %784 = vmatprep.subr.mxu0 0.0
        %785 = vmatpush2.msra.mxu0 0.0
        %786 = vmatprep.subr.mxu0 0.0
        %787 = vmatpush2.msra.mxu0 0.0
        %788 = vmatprep.subr.mxu0 0.0
        %789 = vmatpush2.msra.mxu0 0.0
        %790 = vmatprep.subr.mxu0 0.0
        %791 = vmatpush2.msra.mxu0 0.0
        %792 = vmatprep.subr.mxu0 0.0
        %793 = vmatpush2.msra.mxu0 0.0
        %794 = vmatprep.subr.mxu0 0.0
        %795 = vmatpush2.msra.mxu0 0.0
        %796 = vmatprep.subr.mxu0 0.0
        %797 = vmatpush2.msra.mxu0 0.0
        %798 = vmatprep.subr.mxu0 0.0
        %799 = vmatpush2.msra.mxu0 0.0
        %800 = vmatprep.subr.mxu0 0.0
        %801 = vmatpush2.msra.mxu0 0.0
        %802 = vmatprep.subr.mxu0 0.0
        %803 = vmatpush2.msra.mxu0 0.0
        %804 = vmatprep.subr.mxu0 0.0
        %805 = vmatpush2.msra.mxu0 0.0
        %806 = vmatprep.mubr.f32.mxu0 0.0
        %807 = vmatmul.mubr.f32.gmra.mxu0 %v736
        %v808 = vpop.f32.mrf.mxu0
        %v809 = vadd.f32 0.0, %v808
        %v810 = vpop.f32.mrf.mxu0
        %811 = vdwg.mxu0
        %v813 = vsel %vm734, %v809, 0
        %v816 = vsel %vm738, %v437, 0
        %818 = vmatprep.subr.mxu0 0.0
        %819 = vmatpush1.msra.mxu0 0.0
        %820 = vmatprep.subr.mxu0 0.0
        %821 = vmatpush1.msra.mxu0 0.0
        %822 = vmatprep.subr.mxu0 0.0
        %823 = vmatpush1.msra.mxu0 0.0
        %824 = vmatprep.subr.mxu0 0.0
        %825 = vmatpush1.msra.mxu0 0.0
        %826 = vmatprep.subr.mxu0 0.0
        %827 = vmatpush1.msra.mxu0 0.0
        %828 = vmatprep.subr.mxu0 0.0
        %829 = vmatpush1.msra.mxu0 0.0
        %830 = vmatprep.subr.mxu0 0.0
        %831 = vmatpush1.msra.mxu0 0.0
        %832 = vmatprep.subr.mxu0 0.0
        %833 = vmatpush1.msra.mxu0 0.0
        %834 = vmatprep.subr.mxu0 0.0
        %835 = vmatpush1.msra.mxu0 0.0
        %836 = vmatprep.subr.mxu0 0.0
        %837 = vmatpush1.msra.mxu0 0.0
        %838 = vmatprep.subr.mxu0 0.0
        %839 = vmatpush1.msra.mxu0 0.0
        %840 = vmatprep.subr.mxu0 0.0
        %841 = vmatpush1.msra.mxu0 0.0
        %842 = vmatprep.subr.mxu0 0.0
        %843 = vmatpush1.msra.mxu0 0.0
        %844 = vmatprep.subr.mxu0 0.0
        %845 = vmatpush1.msra.mxu0 0.0
        %846 = vmatprep.subr.mxu0 0.0
        %847 = vmatpush1.msra.mxu0 0.0
        %848 = vmatprep.subr.mxu0 0.0
        %849 = vmatpush1.msra.mxu0 %v816
        %850 = vmatprep.subr.mxu0 0.0
        %851 = vmatpush2.msra.mxu0 0.0
        %852 = vmatprep.subr.mxu0 0.0
        %853 = vmatpush2.msra.mxu0 0.0
        %854 = vmatprep.subr.mxu0 0.0
        %855 = vmatpush2.msra.mxu0 0.0
        %856 = vmatprep.subr.mxu0 0.0
        %857 = vmatpush2.msra.mxu0 0.0
        %858 = vmatprep.subr.mxu0 0.0
        %859 = vmatpush2.msra.mxu0 0.0
        %860 = vmatprep.subr.mxu0 0.0
        %861 = vmatpush2.msra.mxu0 0.0
        %862 = vmatprep.subr.mxu0 0.0
        %863 = vmatpush2.msra.mxu0 0.0
        %864 = vmatprep.subr.mxu0 0.0
        %865 = vmatpush2.msra.mxu0 0.0
        %866 = vmatprep.subr.mxu0 0.0
        %867 = vmatpush2.msra.mxu0 0.0
        %868 = vmatprep.subr.mxu0 0.0
        %869 = vmatpush2.msra.mxu0 0.0
        %870 = vmatprep.subr.mxu0 0.0
        %871 = vmatpush2.msra.mxu0 0.0
        %872 = vmatprep.subr.mxu0 0.0
        %873 = vmatpush2.msra.mxu0 0.0
        %874 = vmatprep.subr.mxu0 0.0
        %875 = vmatpush2.msra.mxu0 0.0
        %876 = vmatprep.subr.mxu0 0.0
        %877 = vmatpush2.msra.mxu0 0.0
        %878 = vmatprep.subr.mxu0 0.0
        %879 = vmatpush2.msra.mxu0 0.0
        %880 = vmatprep.subr.mxu0 0.0
        %881 = vmatpush2.msra.mxu0 0.0
        %882 = vmatprep.mubr.f32.mxu0 0.0
        %883 = vmatmul.mubr.f32.gmra.mxu0 %v813
        %v884 = vpop.f32.mrf.mxu0
        %v885 = vadd.f32 0.0, %v884
        %v886 = vpop.f32.mrf.mxu0
        %887 = vdwg.mxu0
        %888 = vst.msk [vmem:[%s407] sm:$0xff] %vm587, %v584
        %vm889 = vcmask 27648
        %890 = vst.msk [vmem:[%s414] sm:$0xf] %vm889, %v731
        %vm891 = vcmask 9216
        %892 = vst.msk [vmem:[%s429] sm:$0x3] %vm891, %v885
        %s893 = scalar_lea.vmem %s361, 16 [#allocation2]
        %v894 = vld [vmem:[%s893] sm:$0xff]
        %v895 = vld [vmem:[%s893 + $0x8] sm:$0xff]
        %896 = vmatprep.subr.mxu0 0.0
        %897 = vmatpush1.msra.mxu0 0.0
        %898 = vmatprep.subr.mxu0 0.0
        %899 = vmatpush1.msra.mxu0 0.0
        %900 = vmatprep.subr.mxu0 0.0
        %901 = vmatpush1.msra.mxu0 0.0
        %902 = vmatprep.subr.mxu0 0.0
        %903 = vmatpush1.msra.mxu0 0.0
        %904 = vmatprep.subr.mxu0 0.0
        %905 = vmatpush1.msra.mxu0 0.0
        %906 = vmatprep.subr.mxu0 0.0
        %907 = vmatpush1.msra.mxu0 0.0
        %908 = vmatprep.subr.mxu0 0.0
        %909 = vmatpush1.msra.mxu0 0.0
        %910 = vmatprep.subr.mxu0 0.0
        %911 = vmatpush1.msra.mxu0 0.0
        %912 = vmatprep.subr.mxu0 0.0
        %913 = vmatpush1.msra.mxu0 0.0
        %914 = vmatprep.subr.mxu0 0.0
        %915 = vmatpush1.msra.mxu0 0.0
        %916 = vmatprep.subr.mxu0 0.0
        %917 = vmatpush1.msra.mxu0 0.0
        %918 = vmatprep.subr.mxu0 0.0
        %919 = vmatpush1.msra.mxu0 0.0
        %920 = vmatprep.subr.mxu0 0.0
        %921 = vmatpush1.msra.mxu0 0.0
        %922 = vmatprep.subr.mxu0 0.0
        %923 = vmatpush1.msra.mxu0 0.0
        %924 = vmatprep.subr.mxu0 0.0
        %925 = vmatpush1.msra.mxu0 %v895
        %926 = vmatprep.subr.mxu0 0.0
        %927 = vmatpush1.msra.mxu0 %v894
        %928 = vmatprep.subr.mxu0 0.0
        %929 = vmatpush2.msra.mxu0 0.0
        %930 = vmatprep.subr.mxu0 0.0
        %931 = vmatpush2.msra.mxu0 0.0
        %932 = vmatprep.subr.mxu0 0.0
        %933 = vmatpush2.msra.mxu0 0.0
        %934 = vmatprep.subr.mxu0 0.0
        %935 = vmatpush2.msra.mxu0 0.0
        %936 = vmatprep.subr.mxu0 0.0
        %937 = vmatpush2.msra.mxu0 0.0
        %938 = vmatprep.subr.mxu0 0.0
        %939 = vmatpush2.msra.mxu0 0.0
        %940 = vmatprep.subr.mxu0 0.0
        %941 = vmatpush2.msra.mxu0 0.0
        %942 = vmatprep.subr.mxu0 0.0
        %943 = vmatpush2.msra.mxu0 0.0
        %944 = vmatprep.subr.mxu0 0.0
        %945 = vmatpush2.msra.mxu0 0.0
        %946 = vmatprep.subr.mxu0 0.0
        %947 = vmatpush2.msra.mxu0 0.0
        %948 = vmatprep.subr.mxu0 0.0
        %949 = vmatpush2.msra.mxu0 0.0
        %950 = vmatprep.subr.mxu0 0.0
        %951 = vmatpush2.msra.mxu0 0.0
        %952 = vmatprep.subr.mxu0 0.0
        %953 = vmatpush2.msra.mxu0 0.0
        %954 = vmatprep.subr.mxu0 0.0
        %955 = vmatpush2.msra.mxu0 0.0
        %956 = vmatprep.subr.mxu0 0.0
        %957 = vmatpush2.msra.mxu0 0.0
        %958 = vmatprep.subr.mxu0 0.0
        %959 = vmatpush2.msra.mxu0 0.0
        %960 = vmatprep.mubr.f32.mxu0 0.0
        %961 = vmatmul.mubr.f32.gmra.mxu0 %v442
        %v962 = vpop.f32.mrf.mxu0
        %v963 = vadd.f32 0.0, %v962
        %v964 = vpop.f32.mrf.mxu0
        %965 = vdwg.mxu0
        %v967 = vsel %vm440, %v963, 0
        %969 = vmatprep.subr.mxu0 0.0
        %970 = vmatpush1.msra.mxu0 0.0
        %971 = vmatprep.subr.mxu0 0.0
        %972 = vmatpush1.msra.mxu0 0.0
        %973 = vmatprep.subr.mxu0 0.0
        %974 = vmatpush1.msra.mxu0 0.0
        %975 = vmatprep.subr.mxu0 0.0
        %976 = vmatpush1.msra.mxu0 0.0
        %977 = vmatprep.subr.mxu0 0.0
        %978 = vmatpush1.msra.mxu0 0.0
        %979 = vmatprep.subr.mxu0 0.0
        %980 = vmatpush1.msra.mxu0 0.0
        %981 = vmatprep.subr.mxu0 0.0
        %982 = vmatpush1.msra.mxu0 0.0
        %983 = vmatprep.subr.mxu0 0.0
        %984 = vmatpush1.msra.mxu0 0.0
        %985 = vmatprep.subr.mxu0 0.0
        %986 = vmatpush1.msra.mxu0 0.0
        %987 = vmatprep.subr.mxu0 0.0
        %988 = vmatpush1.msra.mxu0 0.0
        %989 = vmatprep.subr.mxu0 0.0
        %990 = vmatpush1.msra.mxu0 0.0
        %991 = vmatprep.subr.mxu0 0.0
        %992 = vmatpush1.msra.mxu0 0.0
        %993 = vmatprep.subr.mxu0 0.0
        %994 = vmatpush1.msra.mxu0 0.0
        %995 = vmatprep.subr.mxu0 0.0
        %996 = vmatpush1.msra.mxu0 0.0
        %997 = vmatprep.subr.mxu0 0.0
        %998 = vmatpush1.msra.mxu0 %v433
        %999 = vmatprep.subr.mxu0 0.0
        %1000 = vmatpush1.msra.mxu0 %v432
        %1001 = vmatprep.subr.mxu0 0.0
        %1002 = vmatpush2.msra.mxu0 0.0
        %1003 = vmatprep.subr.mxu0 0.0
        %1004 = vmatpush2.msra.mxu0 0.0
        %1005 = vmatprep.subr.mxu0 0.0
        %1006 = vmatpush2.msra.mxu0 0.0
        %1007 = vmatprep.subr.mxu0 0.0
        %1008 = vmatpush2.msra.mxu0 0.0
        %1009 = vmatprep.subr.mxu0 0.0
        %1010 = vmatpush2.msra.mxu0 0.0
        %1011 = vmatprep.subr.mxu0 0.0
        %1012 = vmatpush2.msra.mxu0 0.0
        %1013 = vmatprep.subr.mxu0 0.0
        %1014 = vmatpush2.msra.mxu0 0.0
        %1015 = vmatprep.subr.mxu0 0.0
        %1016 = vmatpush2.msra.mxu0 0.0
        %1017 = vmatprep.subr.mxu0 0.0
        %1018 = vmatpush2.msra.mxu0 0.0
        %1019 = vmatprep.subr.mxu0 0.0
        %1020 = vmatpush2.msra.mxu0 0.0
        %1021 = vmatprep.subr.mxu0 0.0
        %1022 = vmatpush2.msra.mxu0 0.0
        %1023 = vmatprep.subr.mxu0 0.0
        %1024 = vmatpush2.msra.mxu0 0.0
        %1025 = vmatprep.subr.mxu0 0.0
        %1026 = vmatpush2.msra.mxu0 0.0
        %1027 = vmatprep.subr.mxu0 0.0
        %1028 = vmatpush2.msra.mxu0 0.0
        %1029 = vmatprep.subr.mxu0 0.0
        %1030 = vmatpush2.msra.mxu0 0.0
        %1031 = vmatprep.subr.mxu0 0.0
        %1032 = vmatpush2.msra.mxu0 0.0
        %1033 = vmatprep.mubr.f32.mxu0 0.0
        %1034 = vmatmul.mubr.f32.gmra.mxu0 %v967
        %v1035 = vpop.f32.mrf.mxu0
        %v1036 = vadd.f32 0.0, %v1035
        %v1037 = vpop.f32.mrf.mxu0
        %1038 = vdwg.mxu0
        %1039 = vmatprep.subr.mxu0 0.0
        %1040 = vmatpush1.msra.mxu0 0.0
        %1041 = vmatprep.subr.mxu0 0.0
        %1042 = vmatpush1.msra.mxu0 0.0
        %1043 = vmatprep.subr.mxu0 0.0
        %1044 = vmatpush1.msra.mxu0 0.0
        %1045 = vmatprep.subr.mxu0 0.0
        %1046 = vmatpush1.msra.mxu0 0.0
        %1047 = vmatprep.subr.mxu0 0.0
        %1048 = vmatpush1.msra.mxu0 0.0
        %1049 = vmatprep.subr.mxu0 0.0
        %1050 = vmatpush1.msra.mxu0 0.0
        %1051 = vmatprep.subr.mxu0 0.0
        %1052 = vmatpush1.msra.mxu0 0.0
        %1053 = vmatprep.subr.mxu0 0.0
        %1054 = vmatpush1.msra.mxu0 0.0
        %1055 = vmatprep.subr.mxu0 0.0
        %1056 = vmatpush1.msra.mxu0 0.0
        %1057 = vmatprep.subr.mxu0 0.0
        %1058 = vmatpush1.msra.mxu0 0.0
        %1059 = vmatprep.subr.mxu0 0.0
        %1060 = vmatpush1.msra.mxu0 0.0
        %1061 = vmatprep.subr.mxu0 0.0
        %1062 = vmatpush1.msra.mxu0 0.0
        %1063 = vmatprep.subr.mxu0 0.0
        %1064 = vmatpush1.msra.mxu0 0.0
        %1065 = vmatprep.subr.mxu0 0.0
        %1066 = vmatpush1.msra.mxu0 0.0
        %1067 = vmatprep.subr.mxu0 0.0
        %1068 = vmatpush1.msra.mxu0 0.0
        %1069 = vmatprep.subr.mxu0 0.0
        %1070 = vmatpush1.msra.mxu0 %v1036
        %1071 = vmatprep.subr.mxu0 0.0
        %1072 = vmatpush2.msra.mxu0 0.0
        %1073 = vmatprep.subr.mxu0 0.0
        %1074 = vmatpush2.msra.mxu0 0.0
        %1075 = vmatprep.subr.mxu0 0.0
        %1076 = vmatpush2.msra.mxu0 0.0
        %1077 = vmatprep.subr.mxu0 0.0
        %1078 = vmatpush2.msra.mxu0 0.0
        %1079 = vmatprep.subr.mxu0 0.0
        %1080 = vmatpush2.msra.mxu0 0.0
        %1081 = vmatprep.subr.mxu0 0.0
        %1082 = vmatpush2.msra.mxu0 0.0
        %1083 = vmatprep.subr.mxu0 0.0
        %1084 = vmatpush2.msra.mxu0 0.0
        %1085 = vmatprep.subr.mxu0 0.0
        %1086 = vmatpush2.msra.mxu0 0.0
        %1087 = vmatprep.subr.mxu0 0.0
        %1088 = vmatpush2.msra.mxu0 0.0
        %1089 = vmatprep.subr.mxu0 0.0
        %1090 = vmatpush2.msra.mxu0 0.0
        %1091 = vmatprep.subr.mxu0 0.0
        %1092 = vmatpush2.msra.mxu0 0.0
        %1093 = vmatprep.subr.mxu0 0.0
        %1094 = vmatpush2.msra.mxu0 0.0
        %1095 = vmatprep.subr.mxu0 0.0
        %1096 = vmatpush2.msra.mxu0 0.0
        %1097 = vmatprep.subr.mxu0 0.0
        %1098 = vmatpush2.msra.mxu0 0.0
        %1099 = vmatprep.subr.mxu0 0.0
        %1100 = vmatpush2.msra.mxu0 0.0
        %1101 = vmatprep.subr.mxu0 0.0
        %1102 = vmatpush2.msra.mxu0 0.0
        %1103 = vmatprep.mubr.f32.mxu0 0.0
        %1104 = vmatmul.mubr.f32.gmra.mxu0 %v589
        %v1105 = vpop.f32.mrf.mxu0
        %v1106 = vadd.f32 0.0, %v1105
        %v1107 = vpop.f32.mrf.mxu0
        %1108 = vdwg.mxu0
        %v1110 = vsel %vm587, %v1106, 0
        %1112 = vmatprep.subr.mxu0 0.0
        %1113 = vmatpush1.msra.mxu0 0.0
        %1114 = vmatprep.subr.mxu0 0.0
        %1115 = vmatpush1.msra.mxu0 0.0
        %1116 = vmatprep.subr.mxu0 0.0
        %1117 = vmatpush1.msra.mxu0 0.0
        %1118 = vmatprep.subr.mxu0 0.0
        %1119 = vmatpush1.msra.mxu0 0.0
        %1120 = vmatprep.subr.mxu0 0.0
        %1121 = vmatpush1.msra.mxu0 0.0
        %1122 = vmatprep.subr.mxu0 0.0
        %1123 = vmatpush1.msra.mxu0 0.0
        %1124 = vmatprep.subr.mxu0 0.0
        %1125 = vmatpush1.msra.mxu0 0.0
        %1126 = vmatprep.subr.mxu0 0.0
        %1127 = vmatpush1.msra.mxu0 0.0
        %1128 = vmatprep.subr.mxu0 0.0
        %1129 = vmatpush1.msra.mxu0 0.0
        %1130 = vmatprep.subr.mxu0 0.0
        %1131 = vmatpush1.msra.mxu0 0.0
        %1132 = vmatprep.subr.mxu0 0.0
        %1133 = vmatpush1.msra.mxu0 0.0
        %1134 = vmatprep.subr.mxu0 0.0
        %1135 = vmatpush1.msra.mxu0 0.0
        %1136 = vmatprep.subr.mxu0 0.0
        %1137 = vmatpush1.msra.mxu0 0.0
        %1138 = vmatprep.subr.mxu0 0.0
        %1139 = vmatpush1.msra.mxu0 0.0
        %1140 = vmatprep.subr.mxu0 0.0
        %1141 = vmatpush1.msra.mxu0 0.0
        %1142 = vmatprep.subr.mxu0 0.0
        %1143 = vmatpush1.msra.mxu0 %v435
        %1144 = vmatprep.subr.mxu0 0.0
        %1145 = vmatpush2.msra.mxu0 0.0
        %1146 = vmatprep.subr.mxu0 0.0
        %1147 = vmatpush2.msra.mxu0 0.0
        %1148 = vmatprep.subr.mxu0 0.0
        %1149 = vmatpush2.msra.mxu0 0.0
        %1150 = vmatprep.subr.mxu0 0.0
        %1151 = vmatpush2.msra.mxu0 0.0
        %1152 = vmatprep.subr.mxu0 0.0
        %1153 = vmatpush2.msra.mxu0 0.0
        %1154 = vmatprep.subr.mxu0 0.0
        %1155 = vmatpush2.msra.mxu0 0.0
        %1156 = vmatprep.subr.mxu0 0.0
        %1157 = vmatpush2.msra.mxu0 0.0
        %1158 = vmatprep.subr.mxu0 0.0
        %1159 = vmatpush2.msra.mxu0 0.0
        %1160 = vmatprep.subr.mxu0 0.0
        %1161 = vmatpush2.msra.mxu0 0.0
        %1162 = vmatprep.subr.mxu0 0.0
        %1163 = vmatpush2.msra.mxu0 0.0
        %1164 = vmatprep.subr.mxu0 0.0
        %1165 = vmatpush2.msra.mxu0 0.0
        %1166 = vmatprep.subr.mxu0 0.0
        %1167 = vmatpush2.msra.mxu0 0.0
        %1168 = vmatprep.subr.mxu0 0.0
        %1169 = vmatpush2.msra.mxu0 0.0
        %1170 = vmatprep.subr.mxu0 0.0
        %1171 = vmatpush2.msra.mxu0 0.0
        %1172 = vmatprep.subr.mxu0 0.0
        %1173 = vmatpush2.msra.mxu0 0.0
        %1174 = vmatprep.subr.mxu0 0.0
        %1175 = vmatpush2.msra.mxu0 0.0
        %1176 = vmatprep.mubr.f32.mxu0 0.0
        %1177 = vmatmul.mubr.f32.gmra.mxu0 %v1110
        %v1178 = vpop.f32.mrf.mxu0
        %v1179 = vadd.f32 0.0, %v1178
        %v1180 = vpop.f32.mrf.mxu0
        %1181 = vdwg.mxu0
        %v1183 = vsel %vm738, %v1179, 0
        %1185 = vmatprep.subr.mxu0 0.0
        %1186 = vmatpush1.msra.mxu0 0.0
        %1187 = vmatprep.subr.mxu0 0.0
        %1188 = vmatpush1.msra.mxu0 0.0
        %1189 = vmatprep.subr.mxu0 0.0
        %1190 = vmatpush1.msra.mxu0 0.0
        %1191 = vmatprep.subr.mxu0 0.0
        %1192 = vmatpush1.msra.mxu0 0.0
        %1193 = vmatprep.subr.mxu0 0.0
        %1194 = vmatpush1.msra.mxu0 0.0
        %1195 = vmatprep.subr.mxu0 0.0
        %1196 = vmatpush1.msra.mxu0 0.0
        %1197 = vmatprep.subr.mxu0 0.0
        %1198 = vmatpush1.msra.mxu0 0.0
        %1199 = vmatprep.subr.mxu0 0.0
        %1200 = vmatpush1.msra.mxu0 0.0
        %1201 = vmatprep.subr.mxu0 0.0
        %1202 = vmatpush1.msra.mxu0 0.0
        %1203 = vmatprep.subr.mxu0 0.0
        %1204 = vmatpush1.msra.mxu0 0.0
        %1205 = vmatprep.subr.mxu0 0.0
        %1206 = vmatpush1.msra.mxu0 0.0
        %1207 = vmatprep.subr.mxu0 0.0
        %1208 = vmatpush1.msra.mxu0 0.0
        %1209 = vmatprep.subr.mxu0 0.0
        %1210 = vmatpush1.msra.mxu0 0.0
        %1211 = vmatprep.subr.mxu0 0.0
        %1212 = vmatpush1.msra.mxu0 0.0
        %1213 = vmatprep.subr.mxu0 0.0
        %1214 = vmatpush1.msra.mxu0 0.0
        %1215 = vmatprep.subr.mxu0 0.0
        %1216 = vmatpush1.msra.mxu0 %v1183
        %1217 = vmatprep.subr.mxu0 0.0
        %1218 = vmatpush2.msra.mxu0 0.0
        %1219 = vmatprep.subr.mxu0 0.0
        %1220 = vmatpush2.msra.mxu0 0.0
        %1221 = vmatprep.subr.mxu0 0.0
        %1222 = vmatpush2.msra.mxu0 0.0
        %1223 = vmatprep.subr.mxu0 0.0
        %1224 = vmatpush2.msra.mxu0 0.0
        %1225 = vmatprep.subr.mxu0 0.0
        %1226 = vmatpush2.msra.mxu0 0.0
        %1227 = vmatprep.subr.mxu0 0.0
        %1228 = vmatpush2.msra.mxu0 0.0
        %1229 = vmatprep.subr.mxu0 0.0
        %1230 = vmatpush2.msra.mxu0 0.0
        %1231 = vmatprep.subr.mxu0 0.0
        %1232 = vmatpush2.msra.mxu0 0.0
        %1233 = vmatprep.subr.mxu0 0.0
        %1234 = vmatpush2.msra.mxu0 0.0
        %1235 = vmatprep.subr.mxu0 0.0
        %1236 = vmatpush2.msra.mxu0 0.0
        %1237 = vmatprep.subr.mxu0 0.0
        %1238 = vmatpush2.msra.mxu0 0.0
        %1239 = vmatprep.subr.mxu0 0.0
        %1240 = vmatpush2.msra.mxu0 0.0
        %1241 = vmatprep.subr.mxu0 0.0
        %1242 = vmatpush2.msra.mxu0 0.0
        %1243 = vmatprep.subr.mxu0 0.0
        %1244 = vmatpush2.msra.mxu0 0.0
        %1245 = vmatprep.subr.mxu0 0.0
        %1246 = vmatpush2.msra.mxu0 0.0
        %1247 = vmatprep.subr.mxu0 0.0
        %1248 = vmatpush2.msra.mxu0 0.0
        %1249 = vmatprep.mubr.f32.mxu0 0.0
        %1250 = vmatmul.mubr.f32.gmra.mxu0 %v736
        %v1251 = vpop.f32.mrf.mxu0
        %v1252 = vadd.f32 0.0, %v1251
        %v1253 = vpop.f32.mrf.mxu0
        %1254 = vdwg.mxu0
        %v1256 = vsel %vm734, %v1252, 0
        %1258 = vmatprep.subr.mxu0 0.0
        %1259 = vmatpush1.msra.mxu0 0.0
        %1260 = vmatprep.subr.mxu0 0.0
        %1261 = vmatpush1.msra.mxu0 0.0
        %1262 = vmatprep.subr.mxu0 0.0
        %1263 = vmatpush1.msra.mxu0 0.0
        %1264 = vmatprep.subr.mxu0 0.0
        %1265 = vmatpush1.msra.mxu0 0.0
        %1266 = vmatprep.subr.mxu0 0.0
        %1267 = vmatpush1.msra.mxu0 0.0
        %1268 = vmatprep.subr.mxu0 0.0
        %1269 = vmatpush1.msra.mxu0 0.0
        %1270 = vmatprep.subr.mxu0 0.0
        %1271 = vmatpush1.msra.mxu0 0.0
        %1272 = vmatprep.subr.mxu0 0.0
        %1273 = vmatpush1.msra.mxu0 0.0
        %1274 = vmatprep.subr.mxu0 0.0
        %1275 = vmatpush1.msra.mxu0 0.0
        %1276 = vmatprep.subr.mxu0 0.0
        %1277 = vmatpush1.msra.mxu0 0.0
        %1278 = vmatprep.subr.mxu0 0.0
        %1279 = vmatpush1.msra.mxu0 0.0
        %1280 = vmatprep.subr.mxu0 0.0
        %1281 = vmatpush1.msra.mxu0 0.0
        %1282 = vmatprep.subr.mxu0 0.0
        %1283 = vmatpush1.msra.mxu0 0.0
        %1284 = vmatprep.subr.mxu0 0.0
        %1285 = vmatpush1.msra.mxu0 0.0
        %1286 = vmatprep.subr.mxu0 0.0
        %1287 = vmatpush1.msra.mxu0 0.0
        %1288 = vmatprep.subr.mxu0 0.0
        %1289 = vmatpush1.msra.mxu0 %v816
        %1290 = vmatprep.subr.mxu0 0.0
        %1291 = vmatpush2.msra.mxu0 0.0
        %1292 = vmatprep.subr.mxu0 0.0
        %1293 = vmatpush2.msra.mxu0 0.0
        %1294 = vmatprep.subr.mxu0 0.0
        %1295 = vmatpush2.msra.mxu0 0.0
        %1296 = vmatprep.subr.mxu0 0.0
        %1297 = vmatpush2.msra.mxu0 0.0
        %1298 = vmatprep.subr.mxu0 0.0
        %1299 = vmatpush2.msra.mxu0 0.0
        %1300 = vmatprep.subr.mxu0 0.0
        %1301 = vmatpush2.msra.mxu0 0.0
        %1302 = vmatprep.subr.mxu0 0.0
        %1303 = vmatpush2.msra.mxu0 0.0
        %1304 = vmatprep.subr.mxu0 0.0
        %1305 = vmatpush2.msra.mxu0 0.0
        %1306 = vmatprep.subr.mxu0 0.0
        %1307 = vmatpush2.msra.mxu0 0.0
        %1308 = vmatprep.subr.mxu0 0.0
        %1309 = vmatpush2.msra.mxu0 0.0
        %1310 = vmatprep.subr.mxu0 0.0
        %1311 = vmatpush2.msra.mxu0 0.0
        %1312 = vmatprep.subr.mxu0 0.0
        %1313 = vmatpush2.msra.mxu0 0.0
        %1314 = vmatprep.subr.mxu0 0.0
        %1315 = vmatpush2.msra.mxu0 0.0
        %1316 = vmatprep.subr.mxu0 0.0
        %1317 = vmatpush2.msra.mxu0 0.0
        %1318 = vmatprep.subr.mxu0 0.0
        %1319 = vmatpush2.msra.mxu0 0.0
        %1320 = vmatprep.subr.mxu0 0.0
        %1321 = vmatpush2.msra.mxu0 0.0
        %1322 = vmatprep.mubr.f32.mxu0 0.0
        %1323 = vmatmul.mubr.f32.gmra.mxu0 %v1256
        %v1324 = vpop.f32.mrf.mxu0
        %v1325 = vadd.f32 0.0, %v1324
        %v1326 = vpop.f32.mrf.mxu0
        %1327 = vdwg.mxu0
        %s1328 = scalar_lea.vmem %s407, 8 [#allocation11]
        %1329 = vst.msk [vmem:[%s1328] sm:$0xff] %vm587, %v1036
        %s1330 = scalar_lea.vmem %s414, 4 [#allocation12]
        %1331 = vst.msk [vmem:[%s1330] sm:$0xf] %vm889, %v1179
        %s1332 = scalar_lea.vmem %s429, 2
        %1333 = vst.msk [vmem:[%s1332] sm:$0x3] %vm891, %v1325
        %s1334 = scalar_lea.vmem %s361, 32 [#allocation2]
        %v1335 = vld [vmem:[%s1334] sm:$0xff]
        %v1336 = vld [vmem:[%s1334 + $0x8] sm:$0xff]
        %1337 = vmatprep.subr.mxu0 0.0
        %1338 = vmatpush1.msra.mxu0 0.0
        %1339 = vmatprep.subr.mxu0 0.0
        %1340 = vmatpush1.msra.mxu0 0.0
        %1341 = vmatprep.subr.mxu0 0.0
        %1342 = vmatpush1.msra.mxu0 0.0
        %1343 = vmatprep.subr.mxu0 0.0
        %1344 = vmatpush1.msra.mxu0 0.0
        %1345 = vmatprep.subr.mxu0 0.0
        %1346 = vmatpush1.msra.mxu0 0.0
        %1347 = vmatprep.subr.mxu0 0.0
        %1348 = vmatpush1.msra.mxu0 0.0
        %1349 = vmatprep.subr.mxu0 0.0
        %1350 = vmatpush1.msra.mxu0 0.0
        %1351 = vmatprep.subr.mxu0 0.0
        %1352 = vmatpush1.msra.mxu0 0.0
        %1353 = vmatprep.subr.mxu0 0.0
        %1354 = vmatpush1.msra.mxu0 0.0
        %1355 = vmatprep.subr.mxu0 0.0
        %1356 = vmatpush1.msra.mxu0 0.0
        %1357 = vmatprep.subr.mxu0 0.0
        %1358 = vmatpush1.msra.mxu0 0.0
        %1359 = vmatprep.subr.mxu0 0.0
        %1360 = vmatpush1.msra.mxu0 0.0
        %1361 = vmatprep.subr.mxu0 0.0
        %1362 = vmatpush1.msra.mxu0 0.0
        %1363 = vmatprep.subr.mxu0 0.0
        %1364 = vmatpush1.msra.mxu0 0.0
        %1365 = vmatprep.subr.mxu0 0.0
        %1366 = vmatpush1.msra.mxu0 %v1336
        %1367 = vmatprep.subr.mxu0 0.0
        %1368 = vmatpush1.msra.mxu0 %v1335
        %1369 = vmatprep.subr.mxu0 0.0
        %1370 = vmatpush2.msra.mxu0 0.0
        %1371 = vmatprep.subr.mxu0 0.0
        %1372 = vmatpush2.msra.mxu0 0.0
        %1373 = vmatprep.subr.mxu0 0.0
        %1374 = vmatpush2.msra.mxu0 0.0
        %1375 = vmatprep.subr.mxu0 0.0
        %1376 = vmatpush2.msra.mxu0 0.0
        %1377 = vmatprep.subr.mxu0 0.0
        %1378 = vmatpush2.msra.mxu0 0.0
        %1379 = vmatprep.subr.mxu0 0.0
        %1380 = vmatpush2.msra.mxu0 0.0
        %1381 = vmatprep.subr.mxu0 0.0
        %1382 = vmatpush2.msra.mxu0 0.0
        %1383 = vmatprep.subr.mxu0 0.0
        %1384 = vmatpush2.msra.mxu0 0.0
        %1385 = vmatprep.subr.mxu0 0.0
        %1386 = vmatpush2.msra.mxu0 0.0
        %1387 = vmatprep.subr.mxu0 0.0
        %1388 = vmatpush2.msra.mxu0 0.0
        %1389 = vmatprep.subr.mxu0 0.0
        %1390 = vmatpush2.msra.mxu0 0.0
        %1391 = vmatprep.subr.mxu0 0.0
        %1392 = vmatpush2.msra.mxu0 0.0
        %1393 = vmatprep.subr.mxu0 0.0
        %1394 = vmatpush2.msra.mxu0 0.0
        %1395 = vmatprep.subr.mxu0 0.0
        %1396 = vmatpush2.msra.mxu0 0.0
        %1397 = vmatprep.subr.mxu0 0.0
        %1398 = vmatpush2.msra.mxu0 0.0
        %1399 = vmatprep.subr.mxu0 0.0
        %1400 = vmatpush2.msra.mxu0 0.0
        %1401 = vmatprep.mubr.f32.mxu0 0.0
        %1402 = vmatmul.mubr.f32.gmra.mxu0 %v442
        %v1403 = vpop.f32.mrf.mxu0
        %v1404 = vadd.f32 0.0, %v1403
        %v1405 = vpop.f32.mrf.mxu0
        %1406 = vdwg.mxu0
        %v1408 = vsel %vm440, %v1404, 0
        %1410 = vmatprep.subr.mxu0 0.0
        %1411 = vmatpush1.msra.mxu0 0.0
        %1412 = vmatprep.subr.mxu0 0.0
        %1413 = vmatpush1.msra.mxu0 0.0
        %1414 = vmatprep.subr.mxu0 0.0
        %1415 = vmatpush1.msra.mxu0 0.0
        %1416 = vmatprep.subr.mxu0 0.0
        %1417 = vmatpush1.msra.mxu0 0.0
        %1418 = vmatprep.subr.mxu0 0.0
        %1419 = vmatpush1.msra.mxu0 0.0
        %1420 = vmatprep.subr.mxu0 0.0
        %1421 = vmatpush1.msra.mxu0 0.0
        %1422 = vmatprep.subr.mxu0 0.0
        %1423 = vmatpush1.msra.mxu0 0.0
        %1424 = vmatprep.subr.mxu0 0.0
        %1425 = vmatpush1.msra.mxu0 0.0
        %1426 = vmatprep.subr.mxu0 0.0
        %1427 = vmatpush1.msra.mxu0 0.0
        %1428 = vmatprep.subr.mxu0 0.0
        %1429 = vmatpush1.msra.mxu0 0.0
        %1430 = vmatprep.subr.mxu0 0.0
        %1431 = vmatpush1.msra.mxu0 0.0
        %1432 = vmatprep.subr.mxu0 0.0
        %1433 = vmatpush1.msra.mxu0 0.0
        %1434 = vmatprep.subr.mxu0 0.0
        %1435 = vmatpush1.msra.mxu0 0.0
        %1436 = vmatprep.subr.mxu0 0.0
        %1437 = vmatpush1.msra.mxu0 0.0
        %1438 = vmatprep.subr.mxu0 0.0
        %1439 = vmatpush1.msra.mxu0 %v433
        %1440 = vmatprep.subr.mxu0 0.0
        %1441 = vmatpush1.msra.mxu0 %v432
        %1442 = vmatprep.subr.mxu0 0.0
        %1443 = vmatpush2.msra.mxu0 0.0
        %1444 = vmatprep.subr.mxu0 0.0
        %1445 = vmatpush2.msra.mxu0 0.0
        %1446 = vmatprep.subr.mxu0 0.0
        %1447 = vmatpush2.msra.mxu0 0.0
        %1448 = vmatprep.subr.mxu0 0.0
        %1449 = vmatpush2.msra.mxu0 0.0
        %1450 = vmatprep.subr.mxu0 0.0
        %1451 = vmatpush2.msra.mxu0 0.0
        %1452 = vmatprep.subr.mxu0 0.0
        %1453 = vmatpush2.msra.mxu0 0.0
        %1454 = vmatprep.subr.mxu0 0.0
        %1455 = vmatpush2.msra.mxu0 0.0
        %1456 = vmatprep.subr.mxu0 0.0
        %1457 = vmatpush2.msra.mxu0 0.0
        %1458 = vmatprep.subr.mxu0 0.0
        %1459 = vmatpush2.msra.mxu0 0.0
        %1460 = vmatprep.subr.mxu0 0.0
        %1461 = vmatpush2.msra.mxu0 0.0
        %1462 = vmatprep.subr.mxu0 0.0
        %1463 = vmatpush2.msra.mxu0 0.0
        %1464 = vmatprep.subr.mxu0 0.0
        %1465 = vmatpush2.msra.mxu0 0.0
        %1466 = vmatprep.subr.mxu0 0.0
        %1467 = vmatpush2.msra.mxu0 0.0
        %1468 = vmatprep.subr.mxu0 0.0
        %1469 = vmatpush2.msra.mxu0 0.0
        %1470 = vmatprep.subr.mxu0 0.0
        %1471 = vmatpush2.msra.mxu0 0.0
        %1472 = vmatprep.subr.mxu0 0.0
        %1473 = vmatpush2.msra.mxu0 0.0
        %1474 = vmatprep.mubr.f32.mxu0 0.0
        %1475 = vmatmul.mubr.f32.gmra.mxu0 %v1408
        %v1476 = vpop.f32.mrf.mxu0
        %v1477 = vadd.f32 0.0, %v1476
        %v1478 = vpop.f32.mrf.mxu0
        %1479 = vdwg.mxu0
        %1480 = vmatprep.subr.mxu0 0.0
        %1481 = vmatpush1.msra.mxu0 0.0
        %1482 = vmatprep.subr.mxu0 0.0
        %1483 = vmatpush1.msra.mxu0 0.0
        %1484 = vmatprep.subr.mxu0 0.0
        %1485 = vmatpush1.msra.mxu0 0.0
        %1486 = vmatprep.subr.mxu0 0.0
        %1487 = vmatpush1.msra.mxu0 0.0
        %1488 = vmatprep.subr.mxu0 0.0
        %1489 = vmatpush1.msra.mxu0 0.0
        %1490 = vmatprep.subr.mxu0 0.0
        %1491 = vmatpush1.msra.mxu0 0.0
        %1492 = vmatprep.subr.mxu0 0.0
        %1493 = vmatpush1.msra.mxu0 0.0
        %1494 = vmatprep.subr.mxu0 0.0
        %1495 = vmatpush1.msra.mxu0 0.0
        %1496 = vmatprep.subr.mxu0 0.0
        %1497 = vmatpush1.msra.mxu0 0.0
        %1498 = vmatprep.subr.mxu0 0.0
        %1499 = vmatpush1.msra.mxu0 0.0
        %1500 = vmatprep.subr.mxu0 0.0
        %1501 = vmatpush1.msra.mxu0 0.0
        %1502 = vmatprep.subr.mxu0 0.0
        %1503 = vmatpush1.msra.mxu0 0.0
        %1504 = vmatprep.subr.mxu0 0.0
        %1505 = vmatpush1.msra.mxu0 0.0
        %1506 = vmatprep.subr.mxu0 0.0
        %1507 = vmatpush1.msra.mxu0 0.0
        %1508 = vmatprep.subr.mxu0 0.0
        %1509 = vmatpush1.msra.mxu0 0.0
        %1510 = vmatprep.subr.mxu0 0.0
        %1511 = vmatpush1.msra.mxu0 %v1477
        %1512 = vmatprep.subr.mxu0 0.0
        %1513 = vmatpush2.msra.mxu0 0.0
        %1514 = vmatprep.subr.mxu0 0.0
        %1515 = vmatpush2.msra.mxu0 0.0
        %1516 = vmatprep.subr.mxu0 0.0
        %1517 = vmatpush2.msra.mxu0 0.0
        %1518 = vmatprep.subr.mxu0 0.0
        %1519 = vmatpush2.msra.mxu0 0.0
        %1520 = vmatprep.subr.mxu0 0.0
        %1521 = vmatpush2.msra.mxu0 0.0
        %1522 = vmatprep.subr.mxu0 0.0
        %1523 = vmatpush2.msra.mxu0 0.0
        %1524 = vmatprep.subr.mxu0 0.0
        %1525 = vmatpush2.msra.mxu0 0.0
        %1526 = vmatprep.subr.mxu0 0.0
        %1527 = vmatpush2.msra.mxu0 0.0
        %1528 = vmatprep.subr.mxu0 0.0
        %1529 = vmatpush2.msra.mxu0 0.0
        %1530 = vmatprep.subr.mxu0 0.0
        %1531 = vmatpush2.msra.mxu0 0.0
        %1532 = vmatprep.subr.mxu0 0.0
        %1533 = vmatpush2.msra.mxu0 0.0
        %1534 = vmatprep.subr.mxu0 0.0
        %1535 = vmatpush2.msra.mxu0 0.0
        %1536 = vmatprep.subr.mxu0 0.0
        %1537 = vmatpush2.msra.mxu0 0.0
        %1538 = vmatprep.subr.mxu0 0.0
        %1539 = vmatpush2.msra.mxu0 0.0
        %1540 = vmatprep.subr.mxu0 0.0
        %1541 = vmatpush2.msra.mxu0 0.0
        %1542 = vmatprep.subr.mxu0 0.0
        %1543 = vmatpush2.msra.mxu0 0.0
        %1544 = vmatprep.mubr.f32.mxu0 0.0
        %1545 = vmatmul.mubr.f32.gmra.mxu0 %v589
        %v1546 = vpop.f32.mrf.mxu0
        %v1547 = vadd.f32 0.0, %v1546
        %v1548 = vpop.f32.mrf.mxu0
        %1549 = vdwg.mxu0
        %v1551 = vsel %vm587, %v1547, 0
        %1553 = vmatprep.subr.mxu0 0.0
        %1554 = vmatpush1.msra.mxu0 0.0
        %1555 = vmatprep.subr.mxu0 0.0
        %1556 = vmatpush1.msra.mxu0 0.0
        %1557 = vmatprep.subr.mxu0 0.0
        %1558 = vmatpush1.msra.mxu0 0.0
        %1559 = vmatprep.subr.mxu0 0.0
        %1560 = vmatpush1.msra.mxu0 0.0
        %1561 = vmatprep.subr.mxu0 0.0
        %1562 = vmatpush1.msra.mxu0 0.0
        %1563 = vmatprep.subr.mxu0 0.0
        %1564 = vmatpush1.msra.mxu0 0.0
        %1565 = vmatprep.subr.mxu0 0.0
        %1566 = vmatpush1.msra.mxu0 0.0
        %1567 = vmatprep.subr.mxu0 0.0
        %1568 = vmatpush1.msra.mxu0 0.0
        %1569 = vmatprep.subr.mxu0 0.0
        %1570 = vmatpush1.msra.mxu0 0.0
        %1571 = vmatprep.subr.mxu0 0.0
        %1572 = vmatpush1.msra.mxu0 0.0
        %1573 = vmatprep.subr.mxu0 0.0
        %1574 = vmatpush1.msra.mxu0 0.0
        %1575 = vmatprep.subr.mxu0 0.0
        %1576 = vmatpush1.msra.mxu0 0.0
        %1577 = vmatprep.subr.mxu0 0.0
        %1578 = vmatpush1.msra.mxu0 0.0
        %1579 = vmatprep.subr.mxu0 0.0
        %1580 = vmatpush1.msra.mxu0 0.0
        %1581 = vmatprep.subr.mxu0 0.0
        %1582 = vmatpush1.msra.mxu0 0.0
        %1583 = vmatprep.subr.mxu0 0.0
        %1584 = vmatpush1.msra.mxu0 %v435
        %1585 = vmatprep.subr.mxu0 0.0
        %1586 = vmatpush2.msra.mxu0 0.0
        %1587 = vmatprep.subr.mxu0 0.0
        %1588 = vmatpush2.msra.mxu0 0.0
        %1589 = vmatprep.subr.mxu0 0.0
        %1590 = vmatpush2.msra.mxu0 0.0
        %1591 = vmatprep.subr.mxu0 0.0
        %1592 = vmatpush2.msra.mxu0 0.0
        %1593 = vmatprep.subr.mxu0 0.0
        %1594 = vmatpush2.msra.mxu0 0.0
        %1595 = vmatprep.subr.mxu0 0.0
        %1596 = vmatpush2.msra.mxu0 0.0
        %1597 = vmatprep.subr.mxu0 0.0
        %1598 = vmatpush2.msra.mxu0 0.0
        %1599 = vmatprep.subr.mxu0 0.0
        %1600 = vmatpush2.msra.mxu0 0.0
        %1601 = vmatprep.subr.mxu0 0.0
        %1602 = vmatpush2.msra.mxu0 0.0
        %1603 = vmatprep.subr.mxu0 0.0
        %1604 = vmatpush2.msra.mxu0 0.0
        %1605 = vmatprep.subr.mxu0 0.0
        %1606 = vmatpush2.msra.mxu0 0.0
        %1607 = vmatprep.subr.mxu0 0.0
        %1608 = vmatpush2.msra.mxu0 0.0
        %1609 = vmatprep.subr.mxu0 0.0
        %1610 = vmatpush2.msra.mxu0 0.0
        %1611 = vmatprep.subr.mxu0 0.0
        %1612 = vmatpush2.msra.mxu0 0.0
        %1613 = vmatprep.subr.mxu0 0.0
        %1614 = vmatpush2.msra.mxu0 0.0
        %1615 = vmatprep.subr.mxu0 0.0
        %1616 = vmatpush2.msra.mxu0 0.0
        %1617 = vmatprep.mubr.f32.mxu0 0.0
        %1618 = vmatmul.mubr.f32.gmra.mxu0 %v1551
        %v1619 = vpop.f32.mrf.mxu0
        %v1620 = vadd.f32 0.0, %v1619
        %v1621 = vpop.f32.mrf.mxu0
        %1622 = vdwg.mxu0
        %v1624 = vsel %vm738, %v1620, 0
        %1626 = vmatprep.subr.mxu0 0.0
        %1627 = vmatpush1.msra.mxu0 0.0
        %1628 = vmatprep.subr.mxu0 0.0
        %1629 = vmatpush1.msra.mxu0 0.0
        %1630 = vmatprep.subr.mxu0 0.0
        %1631 = vmatpush1.msra.mxu0 0.0
        %1632 = vmatprep.subr.mxu0 0.0
        %1633 = vmatpush1.msra.mxu0 0.0
        %1634 = vmatprep.subr.mxu0 0.0
        %1635 = vmatpush1.msra.mxu0 0.0
        %1636 = vmatprep.subr.mxu0 0.0
        %1637 = vmatpush1.msra.mxu0 0.0
        %1638 = vmatprep.subr.mxu0 0.0
        %1639 = vmatpush1.msra.mxu0 0.0
        %1640 = vmatprep.subr.mxu0 0.0
        %1641 = vmatpush1.msra.mxu0 0.0
        %1642 = vmatprep.subr.mxu0 0.0
        %1643 = vmatpush1.msra.mxu0 0.0
        %1644 = vmatprep.subr.mxu0 0.0
        %1645 = vmatpush1.msra.mxu0 0.0
        %1646 = vmatprep.subr.mxu0 0.0
        %1647 = vmatpush1.msra.mxu0 0.0
        %1648 = vmatprep.subr.mxu0 0.0
        %1649 = vmatpush1.msra.mxu0 0.0
        %1650 = vmatprep.subr.mxu0 0.0
        %1651 = vmatpush1.msra.mxu0 0.0
        %1652 = vmatprep.subr.mxu0 0.0
        %1653 = vmatpush1.msra.mxu0 0.0
        %1654 = vmatprep.subr.mxu0 0.0
        %1655 = vmatpush1.msra.mxu0 0.0
        %1656 = vmatprep.subr.mxu0 0.0
        %1657 = vmatpush1.msra.mxu0 %v1624
        %1658 = vmatprep.subr.mxu0 0.0
        %1659 = vmatpush2.msra.mxu0 0.0
        %1660 = vmatprep.subr.mxu0 0.0
        %1661 = vmatpush2.msra.mxu0 0.0
        %1662 = vmatprep.subr.mxu0 0.0
        %1663 = vmatpush2.msra.mxu0 0.0
        %1664 = vmatprep.subr.mxu0 0.0
        %1665 = vmatpush2.msra.mxu0 0.0
        %1666 = vmatprep.subr.mxu0 0.0
        %1667 = vmatpush2.msra.mxu0 0.0
        %1668 = vmatprep.subr.mxu0 0.0
        %1669 = vmatpush2.msra.mxu0 0.0
        %1670 = vmatprep.subr.mxu0 0.0
        %1671 = vmatpush2.msra.mxu0 0.0
        %1672 = vmatprep.subr.mxu0 0.0
        %1673 = vmatpush2.msra.mxu0 0.0
        %1674 = vmatprep.subr.mxu0 0.0
        %1675 = vmatpush2.msra.mxu0 0.0
        %1676 = vmatprep.subr.mxu0 0.0
        %1677 = vmatpush2.msra.mxu0 0.0
        %1678 = vmatprep.subr.mxu0 0.0
        %1679 = vmatpush2.msra.mxu0 0.0
        %1680 = vmatprep.subr.mxu0 0.0
        %1681 = vmatpush2.msra.mxu0 0.0
        %1682 = vmatprep.subr.mxu0 0.0
        %1683 = vmatpush2.msra.mxu0 0.0
        %1684 = vmatprep.subr.mxu0 0.0
        %1685 = vmatpush2.msra.mxu0 0.0
        %1686 = vmatprep.subr.mxu0 0.0
        %1687 = vmatpush2.msra.mxu0 0.0
        %1688 = vmatprep.subr.mxu0 0.0
        %1689 = vmatpush2.msra.mxu0 0.0
        %1690 = vmatprep.mubr.f32.mxu0 0.0
        %1691 = vmatmul.mubr.f32.gmra.mxu0 %v736
        %v1692 = vpop.f32.mrf.mxu0
        %v1693 = vadd.f32 0.0, %v1692
        %v1694 = vpop.f32.mrf.mxu0
        %1695 = vdwg.mxu0
        %v1697 = vsel %vm734, %v1693, 0
        %1699 = vmatprep.subr.mxu0 0.0
        %1700 = vmatpush1.msra.mxu0 0.0
        %1701 = vmatprep.subr.mxu0 0.0
        %1702 = vmatpush1.msra.mxu0 0.0
        %1703 = vmatprep.subr.mxu0 0.0
        %1704 = vmatpush1.msra.mxu0 0.0
        %1705 = vmatprep.subr.mxu0 0.0
        %1706 = vmatpush1.msra.mxu0 0.0
        %1707 = vmatprep.subr.mxu0 0.0
        %1708 = vmatpush1.msra.mxu0 0.0
        %1709 = vmatprep.subr.mxu0 0.0
        %1710 = vmatpush1.msra.mxu0 0.0
        %1711 = vmatprep.subr.mxu0 0.0
        %1712 = vmatpush1.msra.mxu0 0.0
        %1713 = vmatprep.subr.mxu0 0.0
        %1714 = vmatpush1.msra.mxu0 0.0
        %1715 = vmatprep.subr.mxu0 0.0
        %1716 = vmatpush1.msra.mxu0 0.0
        %1717 = vmatprep.subr.mxu0 0.0
        %1718 = vmatpush1.msra.mxu0 0.0
        %1719 = vmatprep.subr.mxu0 0.0
        %1720 = vmatpush1.msra.mxu0 0.0
        %1721 = vmatprep.subr.mxu0 0.0
        %1722 = vmatpush1.msra.mxu0 0.0
        %1723 = vmatprep.subr.mxu0 0.0
        %1724 = vmatpush1.msra.mxu0 0.0
        %1725 = vmatprep.subr.mxu0 0.0
        %1726 = vmatpush1.msra.mxu0 0.0
        %1727 = vmatprep.subr.mxu0 0.0
        %1728 = vmatpush1.msra.mxu0 0.0
        %1729 = vmatprep.subr.mxu0 0.0
        %1730 = vmatpush1.msra.mxu0 %v816
        %1731 = vmatprep.subr.mxu0 0.0
        %1732 = vmatpush2.msra.mxu0 0.0
        %1733 = vmatprep.subr.mxu0 0.0
        %1734 = vmatpush2.msra.mxu0 0.0
        %1735 = vmatprep.subr.mxu0 0.0
        %1736 = vmatpush2.msra.mxu0 0.0
        %1737 = vmatprep.subr.mxu0 0.0
        %1738 = vmatpush2.msra.mxu0 0.0
        %1739 = vmatprep.subr.mxu0 0.0
        %1740 = vmatpush2.msra.mxu0 0.0
        %1741 = vmatprep.subr.mxu0 0.0
        %1742 = vmatpush2.msra.mxu0 0.0
        %1743 = vmatprep.subr.mxu0 0.0
        %1744 = vmatpush2.msra.mxu0 0.0
        %1745 = vmatprep.subr.mxu0 0.0
        %1746 = vmatpush2.msra.mxu0 0.0
        %1747 = vmatprep.subr.mxu0 0.0
        %1748 = vmatpush2.msra.mxu0 0.0
        %1749 = vmatprep.subr.mxu0 0.0
        %1750 = vmatpush2.msra.mxu0 0.0
        %1751 = vmatprep.subr.mxu0 0.0
        %1752 = vmatpush2.msra.mxu0 0.0
        %1753 = vmatprep.subr.mxu0 0.0
        %1754 = vmatpush2.msra.mxu0 0.0
        %1755 = vmatprep.subr.mxu0 0.0
        %1756 = vmatpush2.msra.mxu0 0.0
        %1757 = vmatprep.subr.mxu0 0.0
        %1758 = vmatpush2.msra.mxu0 0.0
        %1759 = vmatprep.subr.mxu0 0.0
        %1760 = vmatpush2.msra.mxu0 0.0
        %1761 = vmatprep.subr.mxu0 0.0
        %1762 = vmatpush2.msra.mxu0 0.0
        %1763 = vmatprep.mubr.f32.mxu0 0.0
        %1764 = vmatmul.mubr.f32.gmra.mxu0 %v1697
        %v1765 = vpop.f32.mrf.mxu0
        %v1766 = vadd.f32 0.0, %v1765
        %v1767 = vpop.f32.mrf.mxu0
        %1768 = vdwg.mxu0
        %s1769 = scalar_lea.vmem %s407, 16 [#allocation11]
        %1770 = vst.msk [vmem:[%s1769] sm:$0xff] %vm587, %v1477
        %s1771 = scalar_lea.vmem %s414, 8 [#allocation12]
        %1772 = vst.msk [vmem:[%s1771] sm:$0xf] %vm889, %v1620
        %s1773 = scalar_lea.vmem %s429, 4
        %1774 = vst.msk [vmem:[%s1773] sm:$0x3] %vm891, %v1766
        %s1775 = scalar_lea.vmem %s361, 48 [#allocation2]
        %v1776 = vld [vmem:[%s1775] sm:$0xff]
        %v1777 = vld [vmem:[%s1775 + $0x8] sm:$0xff]
        %1778 = vmatprep.subr.mxu0 0.0
        %1779 = vmatpush1.msra.mxu0 0.0
        %1780 = vmatprep.subr.mxu0 0.0
        %1781 = vmatpush1.msra.mxu0 0.0
        %1782 = vmatprep.subr.mxu0 0.0
        %1783 = vmatpush1.msra.mxu0 0.0
        %1784 = vmatprep.subr.mxu0 0.0
        %1785 = vmatpush1.msra.mxu0 0.0
        %1786 = vmatprep.subr.mxu0 0.0
        %1787 = vmatpush1.msra.mxu0 0.0
        %1788 = vmatprep.subr.mxu0 0.0
        %1789 = vmatpush1.msra.mxu0 0.0
        %1790 = vmatprep.subr.mxu0 0.0
        %1791 = vmatpush1.msra.mxu0 0.0
        %1792 = vmatprep.subr.mxu0 0.0
        %1793 = vmatpush1.msra.mxu0 0.0
        %1794 = vmatprep.subr.mxu0 0.0
        %1795 = vmatpush1.msra.mxu0 0.0
        %1796 = vmatprep.subr.mxu0 0.0
        %1797 = vmatpush1.msra.mxu0 0.0
        %1798 = vmatprep.subr.mxu0 0.0
        %1799 = vmatpush1.msra.mxu0 0.0
        %1800 = vmatprep.subr.mxu0 0.0
        %1801 = vmatpush1.msra.mxu0 0.0
        %1802 = vmatprep.subr.mxu0 0.0
        %1803 = vmatpush1.msra.mxu0 0.0
        %1804 = vmatprep.subr.mxu0 0.0
        %1805 = vmatpush1.msra.mxu0 0.0
        %1806 = vmatprep.subr.mxu0 0.0
        %1807 = vmatpush1.msra.mxu0 %v1777
        %1808 = vmatprep.subr.mxu0 0.0
        %1809 = vmatpush1.msra.mxu0 %v1776
        %1810 = vmatprep.subr.mxu0 0.0
        %1811 = vmatpush2.msra.mxu0 0.0
        %1812 = vmatprep.subr.mxu0 0.0
        %1813 = vmatpush2.msra.mxu0 0.0
        %1814 = vmatprep.subr.mxu0 0.0
        %1815 = vmatpush2.msra.mxu0 0.0
        %1816 = vmatprep.subr.mxu0 0.0
        %1817 = vmatpush2.msra.mxu0 0.0
        %1818 = vmatprep.subr.mxu0 0.0
        %1819 = vmatpush2.msra.mxu0 0.0
        %1820 = vmatprep.subr.mxu0 0.0
        %1821 = vmatpush2.msra.mxu0 0.0
        %1822 = vmatprep.subr.mxu0 0.0
        %1823 = vmatpush2.msra.mxu0 0.0
        %1824 = vmatprep.subr.mxu0 0.0
        %1825 = vmatpush2.msra.mxu0 0.0
        %1826 = vmatprep.subr.mxu0 0.0
        %1827 = vmatpush2.msra.mxu0 0.0
        %1828 = vmatprep.subr.mxu0 0.0
        %1829 = vmatpush2.msra.mxu0 0.0
        %1830 = vmatprep.subr.mxu0 0.0
        %1831 = vmatpush2.msra.mxu0 0.0
        %1832 = vmatprep.subr.mxu0 0.0
        %1833 = vmatpush2.msra.mxu0 0.0
        %1834 = vmatprep.subr.mxu0 0.0
        %1835 = vmatpush2.msra.mxu0 0.0
        %1836 = vmatprep.subr.mxu0 0.0
        %1837 = vmatpush2.msra.mxu0 0.0
        %1838 = vmatprep.subr.mxu0 0.0
        %1839 = vmatpush2.msra.mxu0 0.0
        %1840 = vmatprep.subr.mxu0 0.0
        %1841 = vmatpush2.msra.mxu0 0.0
        %1842 = vmatprep.mubr.f32.mxu0 0.0
        %1843 = vmatmul.mubr.f32.gmra.mxu0 %v442
        %v1844 = vpop.f32.mrf.mxu0
        %v1845 = vadd.f32 0.0, %v1844
        %v1846 = vpop.f32.mrf.mxu0
        %1847 = vdwg.mxu0
        %v1849 = vsel %vm440, %v1845, 0
        %1851 = vmatprep.subr.mxu0 0.0
        %1852 = vmatpush1.msra.mxu0 0.0
        %1853 = vmatprep.subr.mxu0 0.0
        %1854 = vmatpush1.msra.mxu0 0.0
        %1855 = vmatprep.subr.mxu0 0.0
        %1856 = vmatpush1.msra.mxu0 0.0
        %1857 = vmatprep.subr.mxu0 0.0
        %1858 = vmatpush1.msra.mxu0 0.0
        %1859 = vmatprep.subr.mxu0 0.0
        %1860 = vmatpush1.msra.mxu0 0.0
        %1861 = vmatprep.subr.mxu0 0.0
        %1862 = vmatpush1.msra.mxu0 0.0
        %1863 = vmatprep.subr.mxu0 0.0
        %1864 = vmatpush1.msra.mxu0 0.0
        %1865 = vmatprep.subr.mxu0 0.0
        %1866 = vmatpush1.msra.mxu0 0.0
        %1867 = vmatprep.subr.mxu0 0.0
        %1868 = vmatpush1.msra.mxu0 0.0
        %1869 = vmatprep.subr.mxu0 0.0
        %1870 = vmatpush1.msra.mxu0 0.0
        %1871 = vmatprep.subr.mxu0 0.0
        %1872 = vmatpush1.msra.mxu0 0.0
        %1873 = vmatprep.subr.mxu0 0.0
        %1874 = vmatpush1.msra.mxu0 0.0
        %1875 = vmatprep.subr.mxu0 0.0
        %1876 = vmatpush1.msra.mxu0 0.0
        %1877 = vmatprep.subr.mxu0 0.0
        %1878 = vmatpush1.msra.mxu0 0.0
        %1879 = vmatprep.subr.mxu0 0.0
        %1880 = vmatpush1.msra.mxu0 %v433
        %1881 = vmatprep.subr.mxu0 0.0
        %1882 = vmatpush1.msra.mxu0 %v432
        %1883 = vmatprep.subr.mxu0 0.0
        %1884 = vmatpush2.msra.mxu0 0.0
        %1885 = vmatprep.subr.mxu0 0.0
        %1886 = vmatpush2.msra.mxu0 0.0
        %1887 = vmatprep.subr.mxu0 0.0
        %1888 = vmatpush2.msra.mxu0 0.0
        %1889 = vmatprep.subr.mxu0 0.0
        %1890 = vmatpush2.msra.mxu0 0.0
        %1891 = vmatprep.subr.mxu0 0.0
        %1892 = vmatpush2.msra.mxu0 0.0
        %1893 = vmatprep.subr.mxu0 0.0
        %1894 = vmatpush2.msra.mxu0 0.0
        %1895 = vmatprep.subr.mxu0 0.0
        %1896 = vmatpush2.msra.mxu0 0.0
        %1897 = vmatprep.subr.mxu0 0.0
        %1898 = vmatpush2.msra.mxu0 0.0
        %1899 = vmatprep.subr.mxu0 0.0
        %1900 = vmatpush2.msra.mxu0 0.0
        %1901 = vmatprep.subr.mxu0 0.0
        %1902 = vmatpush2.msra.mxu0 0.0
        %1903 = vmatprep.subr.mxu0 0.0
        %1904 = vmatpush2.msra.mxu0 0.0
        %1905 = vmatprep.subr.mxu0 0.0
        %1906 = vmatpush2.msra.mxu0 0.0
        %1907 = vmatprep.subr.mxu0 0.0
        %1908 = vmatpush2.msra.mxu0 0.0
        %1909 = vmatprep.subr.mxu0 0.0
        %1910 = vmatpush2.msra.mxu0 0.0
        %1911 = vmatprep.subr.mxu0 0.0
        %1912 = vmatpush2.msra.mxu0 0.0
        %1913 = vmatprep.subr.mxu0 0.0
        %1914 = vmatpush2.msra.mxu0 0.0
        %1915 = vmatprep.mubr.f32.mxu0 0.0
        %1916 = vmatmul.mubr.f32.gmra.mxu0 %v1849
        %v1917 = vpop.f32.mrf.mxu0
        %v1918 = vadd.f32 0.0, %v1917
        %v1919 = vpop.f32.mrf.mxu0
        %1920 = vdwg.mxu0
        %1921 = vmatprep.subr.mxu0 0.0
        %1922 = vmatpush1.msra.mxu0 0.0
        %1923 = vmatprep.subr.mxu0 0.0
        %1924 = vmatpush1.msra.mxu0 0.0
        %1925 = vmatprep.subr.mxu0 0.0
        %1926 = vmatpush1.msra.mxu0 0.0
        %1927 = vmatprep.subr.mxu0 0.0
        %1928 = vmatpush1.msra.mxu0 0.0
        %1929 = vmatprep.subr.mxu0 0.0
        %1930 = vmatpush1.msra.mxu0 0.0
        %1931 = vmatprep.subr.mxu0 0.0
        %1932 = vmatpush1.msra.mxu0 0.0
        %1933 = vmatprep.subr.mxu0 0.0
        %1934 = vmatpush1.msra.mxu0 0.0
        %1935 = vmatprep.subr.mxu0 0.0
        %1936 = vmatpush1.msra.mxu0 0.0
        %1937 = vmatprep.subr.mxu0 0.0
        %1938 = vmatpush1.msra.mxu0 0.0
        %1939 = vmatprep.subr.mxu0 0.0
        %1940 = vmatpush1.msra.mxu0 0.0
        %1941 = vmatprep.subr.mxu0 0.0
        %1942 = vmatpush1.msra.mxu0 0.0
        %1943 = vmatprep.subr.mxu0 0.0
        %1944 = vmatpush1.msra.mxu0 0.0
        %1945 = vmatprep.subr.mxu0 0.0
        %1946 = vmatpush1.msra.mxu0 0.0
        %1947 = vmatprep.subr.mxu0 0.0
        %1948 = vmatpush1.msra.mxu0 0.0
        %1949 = vmatprep.subr.mxu0 0.0
        %1950 = vmatpush1.msra.mxu0 0.0
        %1951 = vmatprep.subr.mxu0 0.0
        %1952 = vmatpush1.msra.mxu0 %v1918
        %1953 = vmatprep.subr.mxu0 0.0
        %1954 = vmatpush2.msra.mxu0 0.0
        %1955 = vmatprep.subr.mxu0 0.0
        %1956 = vmatpush2.msra.mxu0 0.0
        %1957 = vmatprep.subr.mxu0 0.0
        %1958 = vmatpush2.msra.mxu0 0.0
        %1959 = vmatprep.subr.mxu0 0.0
        %1960 = vmatpush2.msra.mxu0 0.0
        %1961 = vmatprep.subr.mxu0 0.0
        %1962 = vmatpush2.msra.mxu0 0.0
        %1963 = vmatprep.subr.mxu0 0.0
        %1964 = vmatpush2.msra.mxu0 0.0
        %1965 = vmatprep.subr.mxu0 0.0
        %1966 = vmatpush2.msra.mxu0 0.0
        %1967 = vmatprep.subr.mxu0 0.0
        %1968 = vmatpush2.msra.mxu0 0.0
        %1969 = vmatprep.subr.mxu0 0.0
        %1970 = vmatpush2.msra.mxu0 0.0
        %1971 = vmatprep.subr.mxu0 0.0
        %1972 = vmatpush2.msra.mxu0 0.0
        %1973 = vmatprep.subr.mxu0 0.0
        %1974 = vmatpush2.msra.mxu0 0.0
        %1975 = vmatprep.subr.mxu0 0.0
        %1976 = vmatpush2.msra.mxu0 0.0
        %1977 = vmatprep.subr.mxu0 0.0
        %1978 = vmatpush2.msra.mxu0 0.0
        %1979 = vmatprep.subr.mxu0 0.0
        %1980 = vmatpush2.msra.mxu0 0.0
        %1981 = vmatprep.subr.mxu0 0.0
        %1982 = vmatpush2.msra.mxu0 0.0
        %1983 = vmatprep.subr.mxu0 0.0
        %1984 = vmatpush2.msra.mxu0 0.0
        %1985 = vmatprep.mubr.f32.mxu0 0.0
        %1986 = vmatmul.mubr.f32.gmra.mxu0 %v589
        %v1987 = vpop.f32.mrf.mxu0
        %v1988 = vadd.f32 0.0, %v1987
        %v1989 = vpop.f32.mrf.mxu0
        %1990 = vdwg.mxu0
        %v1992 = vsel %vm587, %v1988, 0
        %1994 = vmatprep.subr.mxu0 0.0
        %1995 = vmatpush1.msra.mxu0 0.0
        %1996 = vmatprep.subr.mxu0 0.0
        %1997 = vmatpush1.msra.mxu0 0.0
        %1998 = vmatprep.subr.mxu0 0.0
        %1999 = vmatpush1.msra.mxu0 0.0
        %2000 = vmatprep.subr.mxu0 0.0
        %2001 = vmatpush1.msra.mxu0 0.0
        %2002 = vmatprep.subr.mxu0 0.0
        %2003 = vmatpush1.msra.mxu0 0.0
        %2004 = vmatprep.subr.mxu0 0.0
        %2005 = vmatpush1.msra.mxu0 0.0
        %2006 = vmatprep.subr.mxu0 0.0
        %2007 = vmatpush1.msra.mxu0 0.0
        %2008 = vmatprep.subr.mxu0 0.0
        %2009 = vmatpush1.msra.mxu0 0.0
        %2010 = vmatprep.subr.mxu0 0.0
        %2011 = vmatpush1.msra.mxu0 0.0
        %2012 = vmatprep.subr.mxu0 0.0
        %2013 = vmatpush1.msra.mxu0 0.0
        %2014 = vmatprep.subr.mxu0 0.0
        %2015 = vmatpush1.msra.mxu0 0.0
        %2016 = vmatprep.subr.mxu0 0.0
        %2017 = vmatpush1.msra.mxu0 0.0
        %2018 = vmatprep.subr.mxu0 0.0
        %2019 = vmatpush1.msra.mxu0 0.0
        %2020 = vmatprep.subr.mxu0 0.0
        %2021 = vmatpush1.msra.mxu0 0.0
        %2022 = vmatprep.subr.mxu0 0.0
        %2023 = vmatpush1.msra.mxu0 0.0
        %2024 = vmatprep.subr.mxu0 0.0
        %2025 = vmatpush1.msra.mxu0 %v435
        %2026 = vmatprep.subr.mxu0 0.0
        %2027 = vmatpush2.msra.mxu0 0.0
        %2028 = vmatprep.subr.mxu0 0.0
        %2029 = vmatpush2.msra.mxu0 0.0
        %2030 = vmatprep.subr.mxu0 0.0
        %2031 = vmatpush2.msra.mxu0 0.0
        %2032 = vmatprep.subr.mxu0 0.0
        %2033 = vmatpush2.msra.mxu0 0.0
        %2034 = vmatprep.subr.mxu0 0.0
        %2035 = vmatpush2.msra.mxu0 0.0
        %2036 = vmatprep.subr.mxu0 0.0
        %2037 = vmatpush2.msra.mxu0 0.0
        %2038 = vmatprep.subr.mxu0 0.0
        %2039 = vmatpush2.msra.mxu0 0.0
        %2040 = vmatprep.subr.mxu0 0.0
        %2041 = vmatpush2.msra.mxu0 0.0
        %2042 = vmatprep.subr.mxu0 0.0
        %2043 = vmatpush2.msra.mxu0 0.0
        %2044 = vmatprep.subr.mxu0 0.0
        %2045 = vmatpush2.msra.mxu0 0.0
        %2046 = vmatprep.subr.mxu0 0.0
        %2047 = vmatpush2.msra.mxu0 0.0
        %2048 = vmatprep.subr.mxu0 0.0
        %2049 = vmatpush2.msra.mxu0 0.0
        %2050 = vmatprep.subr.mxu0 0.0
        %2051 = vmatpush2.msra.mxu0 0.0
        %2052 = vmatprep.subr.mxu0 0.0
        %2053 = vmatpush2.msra.mxu0 0.0
        %2054 = vmatprep.subr.mxu0 0.0
        %2055 = vmatpush2.msra.mxu0 0.0
        %2056 = vmatprep.subr.mxu0 0.0
        %2057 = vmatpush2.msra.mxu0 0.0
        %2058 = vmatprep.mubr.f32.mxu0 0.0
        %2059 = vmatmul.mubr.f32.gmra.mxu0 %v1992
        %v2060 = vpop.f32.mrf.mxu0
        %v2061 = vadd.f32 0.0, %v2060
        %v2062 = vpop.f32.mrf.mxu0
        %2063 = vdwg.mxu0
        %v2065 = vsel %vm738, %v2061, 0
        %2067 = vmatprep.subr.mxu0 0.0
        %2068 = vmatpush1.msra.mxu0 0.0
        %2069 = vmatprep.subr.mxu0 0.0
        %2070 = vmatpush1.msra.mxu0 0.0
        %2071 = vmatprep.subr.mxu0 0.0
        %2072 = vmatpush1.msra.mxu0 0.0
        %2073 = vmatprep.subr.mxu0 0.0
        %2074 = vmatpush1.msra.mxu0 0.0
        %2075 = vmatprep.subr.mxu0 0.0
        %2076 = vmatpush1.msra.mxu0 0.0
        %2077 = vmatprep.subr.mxu0 0.0
        %2078 = vmatpush1.msra.mxu0 0.0
        %2079 = vmatprep.subr.mxu0 0.0
        %2080 = vmatpush1.msra.mxu0 0.0
        %2081 = vmatprep.subr.mxu0 0.0
        %2082 = vmatpush1.msra.mxu0 0.0
        %2083 = vmatprep.subr.mxu0 0.0
        %2084 = vmatpush1.msra.mxu0 0.0
        %2085 = vmatprep.subr.mxu0 0.0
        %2086 = vmatpush1.msra.mxu0 0.0
        %2087 = vmatprep.subr.mxu0 0.0
        %2088 = vmatpush1.msra.mxu0 0.0
        %2089 = vmatprep.subr.mxu0 0.0
        %2090 = vmatpush1.msra.mxu0 0.0
        %2091 = vmatprep.subr.mxu0 0.0
        %2092 = vmatpush1.msra.mxu0 0.0
        %2093 = vmatprep.subr.mxu0 0.0
        %2094 = vmatpush1.msra.mxu0 0.0
        %2095 = vmatprep.subr.mxu0 0.0
        %2096 = vmatpush1.msra.mxu0 0.0
        %2097 = vmatprep.subr.mxu0 0.0
        %2098 = vmatpush1.msra.mxu0 %v2065
        %2099 = vmatprep.subr.mxu0 0.0
        %2100 = vmatpush2.msra.mxu0 0.0
        %2101 = vmatprep.subr.mxu0 0.0
        %2102 = vmatpush2.msra.mxu0 0.0
        %2103 = vmatprep.subr.mxu0 0.0
        %2104 = vmatpush2.msra.mxu0 0.0
        %2105 = vmatprep.subr.mxu0 0.0
        %2106 = vmatpush2.msra.mxu0 0.0
        %2107 = vmatprep.subr.mxu0 0.0
        %2108 = vmatpush2.msra.mxu0 0.0
        %2109 = vmatprep.subr.mxu0 0.0
        %2110 = vmatpush2.msra.mxu0 0.0
        %2111 = vmatprep.subr.mxu0 0.0
        %2112 = vmatpush2.msra.mxu0 0.0
        %2113 = vmatprep.subr.mxu0 0.0
        %2114 = vmatpush2.msra.mxu0 0.0
        %2115 = vmatprep.subr.mxu0 0.0
        %2116 = vmatpush2.msra.mxu0 0.0
        %2117 = vmatprep.subr.mxu0 0.0
        %2118 = vmatpush2.msra.mxu0 0.0
        %2119 = vmatprep.subr.mxu0 0.0
        %2120 = vmatpush2.msra.mxu0 0.0
        %2121 = vmatprep.subr.mxu0 0.0
        %2122 = vmatpush2.msra.mxu0 0.0
        %2123 = vmatprep.subr.mxu0 0.0
        %2124 = vmatpush2.msra.mxu0 0.0
        %2125 = vmatprep.subr.mxu0 0.0
        %2126 = vmatpush2.msra.mxu0 0.0
        %2127 = vmatprep.subr.mxu0 0.0
        %2128 = vmatpush2.msra.mxu0 0.0
        %2129 = vmatprep.subr.mxu0 0.0
        %2130 = vmatpush2.msra.mxu0 0.0
        %2131 = vmatprep.mubr.f32.mxu0 0.0
        %2132 = vmatmul.mubr.f32.gmra.mxu0 %v736
        %v2133 = vpop.f32.mrf.mxu0
        %v2134 = vadd.f32 0.0, %v2133
        %v2135 = vpop.f32.mrf.mxu0
        %2136 = vdwg.mxu0
        %v2138 = vsel %vm734, %v2134, 0
        %2140 = vmatprep.subr.mxu0 0.0
        %2141 = vmatpush1.msra.mxu0 0.0
        %2142 = vmatprep.subr.mxu0 0.0
        %2143 = vmatpush1.msra.mxu0 0.0
        %2144 = vmatprep.subr.mxu0 0.0
        %2145 = vmatpush1.msra.mxu0 0.0
        %2146 = vmatprep.subr.mxu0 0.0
        %2147 = vmatpush1.msra.mxu0 0.0
        %2148 = vmatprep.subr.mxu0 0.0
        %2149 = vmatpush1.msra.mxu0 0.0
        %2150 = vmatprep.subr.mxu0 0.0
        %2151 = vmatpush1.msra.mxu0 0.0
        %2152 = vmatprep.subr.mxu0 0.0
        %2153 = vmatpush1.msra.mxu0 0.0
        %2154 = vmatprep.subr.mxu0 0.0
        %2155 = vmatpush1.msra.mxu0 0.0
        %2156 = vmatprep.subr.mxu0 0.0
        %2157 = vmatpush1.msra.mxu0 0.0
        %2158 = vmatprep.subr.mxu0 0.0
        %2159 = vmatpush1.msra.mxu0 0.0
        %2160 = vmatprep.subr.mxu0 0.0
        %2161 = vmatpush1.msra.mxu0 0.0
        %2162 = vmatprep.subr.mxu0 0.0
        %2163 = vmatpush1.msra.mxu0 0.0
        %2164 = vmatprep.subr.mxu0 0.0
        %2165 = vmatpush1.msra.mxu0 0.0
        %2166 = vmatprep.subr.mxu0 0.0
        %2167 = vmatpush1.msra.mxu0 0.0
        %2168 = vmatprep.subr.mxu0 0.0
        %2169 = vmatpush1.msra.mxu0 0.0
        %2170 = vmatprep.subr.mxu0 0.0
        %2171 = vmatpush1.msra.mxu0 %v816
        %2172 = vmatprep.subr.mxu0 0.0
        %2173 = vmatpush2.msra.mxu0 0.0
        %2174 = vmatprep.subr.mxu0 0.0
        %2175 = vmatpush2.msra.mxu0 0.0
        %2176 = vmatprep.subr.mxu0 0.0
        %2177 = vmatpush2.msra.mxu0 0.0
        %2178 = vmatprep.subr.mxu0 0.0
        %2179 = vmatpush2.msra.mxu0 0.0
        %2180 = vmatprep.subr.mxu0 0.0
        %2181 = vmatpush2.msra.mxu0 0.0
        %2182 = vmatprep.subr.mxu0 0.0
        %2183 = vmatpush2.msra.mxu0 0.0
        %2184 = vmatprep.subr.mxu0 0.0
        %2185 = vmatpush2.msra.mxu0 0.0
        %2186 = vmatprep.subr.mxu0 0.0
        %2187 = vmatpush2.msra.mxu0 0.0
        %2188 = vmatprep.subr.mxu0 0.0
        %2189 = vmatpush2.msra.mxu0 0.0
        %2190 = vmatprep.subr.mxu0 0.0
        %2191 = vmatpush2.msra.mxu0 0.0
        %2192 = vmatprep.subr.mxu0 0.0
        %2193 = vmatpush2.msra.mxu0 0.0
        %2194 = vmatprep.subr.mxu0 0.0
        %2195 = vmatpush2.msra.mxu0 0.0
        %2196 = vmatprep.subr.mxu0 0.0
        %2197 = vmatpush2.msra.mxu0 0.0
        %2198 = vmatprep.subr.mxu0 0.0
        %2199 = vmatpush2.msra.mxu0 0.0
        %2200 = vmatprep.subr.mxu0 0.0
        %2201 = vmatpush2.msra.mxu0 0.0
        %2202 = vmatprep.subr.mxu0 0.0
        %2203 = vmatpush2.msra.mxu0 0.0
        %2204 = vmatprep.mubr.f32.mxu0 0.0
        %2205 = vmatmul.mubr.f32.gmra.mxu0 %v2138
        %v2206 = vpop.f32.mrf.mxu0
        %v2207 = vadd.f32 0.0, %v2206
        %v2208 = vpop.f32.mrf.mxu0
        %2209 = vdwg.mxu0
        %s2210 = scalar_lea.vmem %s407, 24 [#allocation11]
        %2211 = vst.msk [vmem:[%s2210] sm:$0xff] %vm587, %v1918
        %s2212 = scalar_lea.vmem %s414, 12 [#allocation12]
        %2213 = vst.msk [vmem:[%s2212] sm:$0xf] %vm889, %v2061
        %s2214 = scalar_lea.vmem %s429, 6
        %2215 = vst.msk [vmem:[%s2214] sm:$0x3] %vm891, %v2207
        %s2216 = scalar_lea.vmem %s361, 64 [#allocation2]
        %v2217 = vld [vmem:[%s2216] sm:$0xff]
        %v2218 = vld [vmem:[%s2216 + $0x8] sm:$0xff]
        %2219 = vmatprep.subr.mxu0 0.0
        %2220 = vmatpush1.msra.mxu0 0.0
        %2221 = vmatprep.subr.mxu0 0.0
        %2222 = vmatpush1.msra.mxu0 0.0
        %2223 = vmatprep.subr.mxu0 0.0
        %2224 = vmatpush1.msra.mxu0 0.0
        %2225 = vmatprep.subr.mxu0 0.0
        %2226 = vmatpush1.msra.mxu0 0.0
        %2227 = vmatprep.subr.mxu0 0.0
        %2228 = vmatpush1.msra.mxu0 0.0
        %2229 = vmatprep.subr.mxu0 0.0
        %2230 = vmatpush1.msra.mxu0 0.0
        %2231 = vmatprep.subr.mxu0 0.0
        %2232 = vmatpush1.msra.mxu0 0.0
        %2233 = vmatprep.subr.mxu0 0.0
        %2234 = vmatpush1.msra.mxu0 0.0
        %2235 = vmatprep.subr.mxu0 0.0
        %2236 = vmatpush1.msra.mxu0 0.0
        %2237 = vmatprep.subr.mxu0 0.0
        %2238 = vmatpush1.msra.mxu0 0.0
        %2239 = vmatprep.subr.mxu0 0.0
        %2240 = vmatpush1.msra.mxu0 0.0
        %2241 = vmatprep.subr.mxu0 0.0
        %2242 = vmatpush1.msra.mxu0 0.0
        %2243 = vmatprep.subr.mxu0 0.0
        %2244 = vmatpush1.msra.mxu0 0.0
        %2245 = vmatprep.subr.mxu0 0.0
        %2246 = vmatpush1.msra.mxu0 0.0
        %2247 = vmatprep.subr.mxu0 0.0
        %2248 = vmatpush1.msra.mxu0 %v2218
        %2249 = vmatprep.subr.mxu0 0.0
        %2250 = vmatpush1.msra.mxu0 %v2217
        %2251 = vmatprep.subr.mxu0 0.0
        %2252 = vmatpush2.msra.mxu0 0.0
        %2253 = vmatprep.subr.mxu0 0.0
        %2254 = vmatpush2.msra.mxu0 0.0
        %2255 = vmatprep.subr.mxu0 0.0
        %2256 = vmatpush2.msra.mxu0 0.0
        %2257 = vmatprep.subr.mxu0 0.0
        %2258 = vmatpush2.msra.mxu0 0.0
        %2259 = vmatprep.subr.mxu0 0.0
        %2260 = vmatpush2.msra.mxu0 0.0
        %2261 = vmatprep.subr.mxu0 0.0
        %2262 = vmatpush2.msra.mxu0 0.0
        %2263 = vmatprep.subr.mxu0 0.0
        %2264 = vmatpush2.msra.mxu0 0.0
        %2265 = vmatprep.subr.mxu0 0.0
        %2266 = vmatpush2.msra.mxu0 0.0
        %2267 = vmatprep.subr.mxu0 0.0
        %2268 = vmatpush2.msra.mxu0 0.0
        %2269 = vmatprep.subr.mxu0 0.0
        %2270 = vmatpush2.msra.mxu0 0.0
        %2271 = vmatprep.subr.mxu0 0.0
        %2272 = vmatpush2.msra.mxu0 0.0
        %2273 = vmatprep.subr.mxu0 0.0
        %2274 = vmatpush2.msra.mxu0 0.0
        %2275 = vmatprep.subr.mxu0 0.0
        %2276 = vmatpush2.msra.mxu0 0.0
        %2277 = vmatprep.subr.mxu0 0.0
        %2278 = vmatpush2.msra.mxu0 0.0
        %2279 = vmatprep.subr.mxu0 0.0
        %2280 = vmatpush2.msra.mxu0 0.0
        %2281 = vmatprep.subr.mxu0 0.0
        %2282 = vmatpush2.msra.mxu0 0.0
        %2283 = vmatprep.mubr.f32.mxu0 0.0
        %2284 = vmatmul.mubr.f32.gmra.mxu0 %v442
        %v2285 = vpop.f32.mrf.mxu0
        %v2286 = vadd.f32 0.0, %v2285
        %v2287 = vpop.f32.mrf.mxu0
        %2288 = vdwg.mxu0
        %v2290 = vsel %vm440, %v2286, 0
        %2292 = vmatprep.subr.mxu0 0.0
        %2293 = vmatpush1.msra.mxu0 0.0
        %2294 = vmatprep.subr.mxu0 0.0
        %2295 = vmatpush1.msra.mxu0 0.0
        %2296 = vmatprep.subr.mxu0 0.0
        %2297 = vmatpush1.msra.mxu0 0.0
        %2298 = vmatprep.subr.mxu0 0.0
        %2299 = vmatpush1.msra.mxu0 0.0
        %2300 = vmatprep.subr.mxu0 0.0
        %2301 = vmatpush1.msra.mxu0 0.0
        %2302 = vmatprep.subr.mxu0 0.0
        %2303 = vmatpush1.msra.mxu0 0.0
        %2304 = vmatprep.subr.mxu0 0.0
        %2305 = vmatpush1.msra.mxu0 0.0
        %2306 = vmatprep.subr.mxu0 0.0
        %2307 = vmatpush1.msra.mxu0 0.0
        %2308 = vmatprep.subr.mxu0 0.0
        %2309 = vmatpush1.msra.mxu0 0.0
        %2310 = vmatprep.subr.mxu0 0.0
        %2311 = vmatpush1.msra.mxu0 0.0
        %2312 = vmatprep.subr.mxu0 0.0
        %2313 = vmatpush1.msra.mxu0 0.0
        %2314 = vmatprep.subr.mxu0 0.0
        %2315 = vmatpush1.msra.mxu0 0.0
        %2316 = vmatprep.subr.mxu0 0.0
        %2317 = vmatpush1.msra.mxu0 0.0
        %2318 = vmatprep.subr.mxu0 0.0
        %2319 = vmatpush1.msra.mxu0 0.0
        %2320 = vmatprep.subr.mxu0 0.0
        %2321 = vmatpush1.msra.mxu0 %v433
        %2322 = vmatprep.subr.mxu0 0.0
        %2323 = vmatpush1.msra.mxu0 %v432
        %2324 = vmatprep.subr.mxu0 0.0
        %2325 = vmatpush2.msra.mxu0 0.0
        %2326 = vmatprep.subr.mxu0 0.0
        %2327 = vmatpush2.msra.mxu0 0.0
        %2328 = vmatprep.subr.mxu0 0.0
        %2329 = vmatpush2.msra.mxu0 0.0
        %2330 = vmatprep.subr.mxu0 0.0
        %2331 = vmatpush2.msra.mxu0 0.0
        %2332 = vmatprep.subr.mxu0 0.0
        %2333 = vmatpush2.msra.mxu0 0.0
        %2334 = vmatprep.subr.mxu0 0.0
        %2335 = vmatpush2.msra.mxu0 0.0
        %2336 = vmatprep.subr.mxu0 0.0
        %2337 = vmatpush2.msra.mxu0 0.0
        %2338 = vmatprep.subr.mxu0 0.0
        %2339 = vmatpush2.msra.mxu0 0.0
        %2340 = vmatprep.subr.mxu0 0.0
        %2341 = vmatpush2.msra.mxu0 0.0
        %2342 = vmatprep.subr.mxu0 0.0
        %2343 = vmatpush2.msra.mxu0 0.0
        %2344 = vmatprep.subr.mxu0 0.0
        %2345 = vmatpush2.msra.mxu0 0.0
        %2346 = vmatprep.subr.mxu0 0.0
        %2347 = vmatpush2.msra.mxu0 0.0
        %2348 = vmatprep.subr.mxu0 0.0
        %2349 = vmatpush2.msra.mxu0 0.0
        %2350 = vmatprep.subr.mxu0 0.0
        %2351 = vmatpush2.msra.mxu0 0.0
        %2352 = vmatprep.subr.mxu0 0.0
        %2353 = vmatpush2.msra.mxu0 0.0
        %2354 = vmatprep.subr.mxu0 0.0
        %2355 = vmatpush2.msra.mxu0 0.0
        %2356 = vmatprep.mubr.f32.mxu0 0.0
        %2357 = vmatmul.mubr.f32.gmra.mxu0 %v2290
        %v2358 = vpop.f32.mrf.mxu0
        %v2359 = vadd.f32 0.0, %v2358
        %v2360 = vpop.f32.mrf.mxu0
        %2361 = vdwg.mxu0
        %2362 = vmatprep.subr.mxu0 0.0
        %2363 = vmatpush1.msra.mxu0 0.0
        %2364 = vmatprep.subr.mxu0 0.0
        %2365 = vmatpush1.msra.mxu0 0.0
        %2366 = vmatprep.subr.mxu0 0.0
        %2367 = vmatpush1.msra.mxu0 0.0
        %2368 = vmatprep.subr.mxu0 0.0
        %2369 = vmatpush1.msra.mxu0 0.0
        %2370 = vmatprep.subr.mxu0 0.0
        %2371 = vmatpush1.msra.mxu0 0.0
        %2372 = vmatprep.subr.mxu0 0.0
        %2373 = vmatpush1.msra.mxu0 0.0
        %2374 = vmatprep.subr.mxu0 0.0
        %2375 = vmatpush1.msra.mxu0 0.0
        %2376 = vmatprep.subr.mxu0 0.0
        %2377 = vmatpush1.msra.mxu0 0.0
        %2378 = vmatprep.subr.mxu0 0.0
        %2379 = vmatpush1.msra.mxu0 0.0
        %2380 = vmatprep.subr.mxu0 0.0
        %2381 = vmatpush1.msra.mxu0 0.0
        %2382 = vmatprep.subr.mxu0 0.0
        %2383 = vmatpush1.msra.mxu0 0.0
        %2384 = vmatprep.subr.mxu0 0.0
        %2385 = vmatpush1.msra.mxu0 0.0
        %2386 = vmatprep.subr.mxu0 0.0
        %2387 = vmatpush1.msra.mxu0 0.0
        %2388 = vmatprep.subr.mxu0 0.0
        %2389 = vmatpush1.msra.mxu0 0.0
        %2390 = vmatprep.subr.mxu0 0.0
        %2391 = vmatpush1.msra.mxu0 0.0
        %2392 = vmatprep.subr.mxu0 0.0
        %2393 = vmatpush1.msra.mxu0 %v2359
        %2394 = vmatprep.subr.mxu0 0.0
        %2395 = vmatpush2.msra.mxu0 0.0
        %2396 = vmatprep.subr.mxu0 0.0
        %2397 = vmatpush2.msra.mxu0 0.0
        %2398 = vmatprep.subr.mxu0 0.0
        %2399 = vmatpush2.msra.mxu0 0.0
        %2400 = vmatprep.subr.mxu0 0.0
        %2401 = vmatpush2.msra.mxu0 0.0
        %2402 = vmatprep.subr.mxu0 0.0
        %2403 = vmatpush2.msra.mxu0 0.0
        %2404 = vmatprep.subr.mxu0 0.0
        %2405 = vmatpush2.msra.mxu0 0.0
        %2406 = vmatprep.subr.mxu0 0.0
        %2407 = vmatpush2.msra.mxu0 0.0
        %2408 = vmatprep.subr.mxu0 0.0
        %2409 = vmatpush2.msra.mxu0 0.0
        %2410 = vmatprep.subr.mxu0 0.0
        %2411 = vmatpush2.msra.mxu0 0.0
        %2412 = vmatprep.subr.mxu0 0.0
        %2413 = vmatpush2.msra.mxu0 0.0
        %2414 = vmatprep.subr.mxu0 0.0
        %2415 = vmatpush2.msra.mxu0 0.0
        %2416 = vmatprep.subr.mxu0 0.0
        %2417 = vmatpush2.msra.mxu0 0.0
        %2418 = vmatprep.subr.mxu0 0.0
        %2419 = vmatpush2.msra.mxu0 0.0
        %2420 = vmatprep.subr.mxu0 0.0
        %2421 = vmatpush2.msra.mxu0 0.0
        %2422 = vmatprep.subr.mxu0 0.0
        %2423 = vmatpush2.msra.mxu0 0.0
        %2424 = vmatprep.subr.mxu0 0.0
        %2425 = vmatpush2.msra.mxu0 0.0
        %2426 = vmatprep.mubr.f32.mxu0 0.0
        %2427 = vmatmul.mubr.f32.gmra.mxu0 %v589
        %v2428 = vpop.f32.mrf.mxu0
        %v2429 = vadd.f32 0.0, %v2428
        %v2430 = vpop.f32.mrf.mxu0
        %2431 = vdwg.mxu0
        %v2433 = vsel %vm587, %v2429, 0
        %2435 = vmatprep.subr.mxu0 0.0
        %2436 = vmatpush1.msra.mxu0 0.0
        %2437 = vmatprep.subr.mxu0 0.0
        %2438 = vmatpush1.msra.mxu0 0.0
        %2439 = vmatprep.subr.mxu0 0.0
        %2440 = vmatpush1.msra.mxu0 0.0
        %2441 = vmatprep.subr.mxu0 0.0
        %2442 = vmatpush1.msra.mxu0 0.0
        %2443 = vmatprep.subr.mxu0 0.0
        %2444 = vmatpush1.msra.mxu0 0.0
        %2445 = vmatprep.subr.mxu0 0.0
        %2446 = vmatpush1.msra.mxu0 0.0
        %2447 = vmatprep.subr.mxu0 0.0
        %2448 = vmatpush1.msra.mxu0 0.0
        %2449 = vmatprep.subr.mxu0 0.0
        %2450 = vmatpush1.msra.mxu0 0.0
        %2451 = vmatprep.subr.mxu0 0.0
        %2452 = vmatpush1.msra.mxu0 0.0
        %2453 = vmatprep.subr.mxu0 0.0
        %2454 = vmatpush1.msra.mxu0 0.0
        %2455 = vmatprep.subr.mxu0 0.0
        %2456 = vmatpush1.msra.mxu0 0.0
        %2457 = vmatprep.subr.mxu0 0.0
        %2458 = vmatpush1.msra.mxu0 0.0
        %2459 = vmatprep.subr.mxu0 0.0
        %2460 = vmatpush1.msra.mxu0 0.0
        %2461 = vmatprep.subr.mxu0 0.0
        %2462 = vmatpush1.msra.mxu0 0.0
        %2463 = vmatprep.subr.mxu0 0.0
        %2464 = vmatpush1.msra.mxu0 0.0
        %2465 = vmatprep.subr.mxu0 0.0
        %2466 = vmatpush1.msra.mxu0 %v435
        %2467 = vmatprep.subr.mxu0 0.0
        %2468 = vmatpush2.msra.mxu0 0.0
        %2469 = vmatprep.subr.mxu0 0.0
        %2470 = vmatpush2.msra.mxu0 0.0
        %2471 = vmatprep.subr.mxu0 0.0
        %2472 = vmatpush2.msra.mxu0 0.0
        %2473 = vmatprep.subr.mxu0 0.0
        %2474 = vmatpush2.msra.mxu0 0.0
        %2475 = vmatprep.subr.mxu0 0.0
        %2476 = vmatpush2.msra.mxu0 0.0
        %2477 = vmatprep.subr.mxu0 0.0
        %2478 = vmatpush2.msra.mxu0 0.0
        %2479 = vmatprep.subr.mxu0 0.0
        %2480 = vmatpush2.msra.mxu0 0.0
        %2481 = vmatprep.subr.mxu0 0.0
        %2482 = vmatpush2.msra.mxu0 0.0
        %2483 = vmatprep.subr.mxu0 0.0
        %2484 = vmatpush2.msra.mxu0 0.0
        %2485 = vmatprep.subr.mxu0 0.0
        %2486 = vmatpush2.msra.mxu0 0.0
        %2487 = vmatprep.subr.mxu0 0.0
        %2488 = vmatpush2.msra.mxu0 0.0
        %2489 = vmatprep.subr.mxu0 0.0
        %2490 = vmatpush2.msra.mxu0 0.0
        %2491 = vmatprep.subr.mxu0 0.0
        %2492 = vmatpush2.msra.mxu0 0.0
        %2493 = vmatprep.subr.mxu0 0.0
        %2494 = vmatpush2.msra.mxu0 0.0
        %2495 = vmatprep.subr.mxu0 0.0
        %2496 = vmatpush2.msra.mxu0 0.0
        %2497 = vmatprep.subr.mxu0 0.0
        %2498 = vmatpush2.msra.mxu0 0.0
        %2499 = vmatprep.mubr.f32.mxu0 0.0
        %2500 = vmatmul.mubr.f32.gmra.mxu0 %v2433
        %v2501 = vpop.f32.mrf.mxu0
        %v2502 = vadd.f32 0.0, %v2501
        %v2503 = vpop.f32.mrf.mxu0
        %2504 = vdwg.mxu0
        %v2506 = vsel %vm738, %v2502, 0
        %2508 = vmatprep.subr.mxu0 0.0
        %2509 = vmatpush1.msra.mxu0 0.0
        %2510 = vmatprep.subr.mxu0 0.0
        %2511 = vmatpush1.msra.mxu0 0.0
        %2512 = vmatprep.subr.mxu0 0.0
        %2513 = vmatpush1.msra.mxu0 0.0
        %2514 = vmatprep.subr.mxu0 0.0
        %2515 = vmatpush1.msra.mxu0 0.0
        %2516 = vmatprep.subr.mxu0 0.0
        %2517 = vmatpush1.msra.mxu0 0.0
        %2518 = vmatprep.subr.mxu0 0.0
        %2519 = vmatpush1.msra.mxu0 0.0
        %2520 = vmatprep.subr.mxu0 0.0
        %2521 = vmatpush1.msra.mxu0 0.0
        %2522 = vmatprep.subr.mxu0 0.0
        %2523 = vmatpush1.msra.mxu0 0.0
        %2524 = vmatprep.subr.mxu0 0.0
        %2525 = vmatpush1.msra.mxu0 0.0
        %2526 = vmatprep.subr.mxu0 0.0
        %2527 = vmatpush1.msra.mxu0 0.0
        %2528 = vmatprep.subr.mxu0 0.0
        %2529 = vmatpush1.msra.mxu0 0.0
        %2530 = vmatprep.subr.mxu0 0.0
        %2531 = vmatpush1.msra.mxu0 0.0
        %2532 = vmatprep.subr.mxu0 0.0
        %2533 = vmatpush1.msra.mxu0 0.0
        %2534 = vmatprep.subr.mxu0 0.0
        %2535 = vmatpush1.msra.mxu0 0.0
        %2536 = vmatprep.subr.mxu0 0.0
        %2537 = vmatpush1.msra.mxu0 0.0
        %2538 = vmatprep.subr.mxu0 0.0
        %2539 = vmatpush1.msra.mxu0 %v2506
        %2540 = vmatprep.subr.mxu0 0.0
        %2541 = vmatpush2.msra.mxu0 0.0
        %2542 = vmatprep.subr.mxu0 0.0
        %2543 = vmatpush2.msra.mxu0 0.0
        %2544 = vmatprep.subr.mxu0 0.0
        %2545 = vmatpush2.msra.mxu0 0.0
        %2546 = vmatprep.subr.mxu0 0.0
        %2547 = vmatpush2.msra.mxu0 0.0
        %2548 = vmatprep.subr.mxu0 0.0
        %2549 = vmatpush2.msra.mxu0 0.0
        %2550 = vmatprep.subr.mxu0 0.0
        %2551 = vmatpush2.msra.mxu0 0.0
        %2552 = vmatprep.subr.mxu0 0.0
        %2553 = vmatpush2.msra.mxu0 0.0
        %2554 = vmatprep.subr.mxu0 0.0
        %2555 = vmatpush2.msra.mxu0 0.0
        %2556 = vmatprep.subr.mxu0 0.0
        %2557 = vmatpush2.msra.mxu0 0.0
        %2558 = vmatprep.subr.mxu0 0.0
        %2559 = vmatpush2.msra.mxu0 0.0
        %2560 = vmatprep.subr.mxu0 0.0
        %2561 = vmatpush2.msra.mxu0 0.0
        %2562 = vmatprep.subr.mxu0 0.0
        %2563 = vmatpush2.msra.mxu0 0.0
        %2564 = vmatprep.subr.mxu0 0.0
        %2565 = vmatpush2.msra.mxu0 0.0
        %2566 = vmatprep.subr.mxu0 0.0
        %2567 = vmatpush2.msra.mxu0 0.0
        %2568 = vmatprep.subr.mxu0 0.0
        %2569 = vmatpush2.msra.mxu0 0.0
        %2570 = vmatprep.subr.mxu0 0.0
        %2571 = vmatpush2.msra.mxu0 0.0
        %2572 = vmatprep.mubr.f32.mxu0 0.0
        %2573 = vmatmul.mubr.f32.gmra.mxu0 %v736
        %v2574 = vpop.f32.mrf.mxu0
        %v2575 = vadd.f32 0.0, %v2574
        %v2576 = vpop.f32.mrf.mxu0
        %2577 = vdwg.mxu0
        %v2579 = vsel %vm734, %v2575, 0
        %2581 = vmatprep.subr.mxu0 0.0
        %2582 = vmatpush1.msra.mxu0 0.0
        %2583 = vmatprep.subr.mxu0 0.0
        %2584 = vmatpush1.msra.mxu0 0.0
        %2585 = vmatprep.subr.mxu0 0.0
        %2586 = vmatpush1.msra.mxu0 0.0
        %2587 = vmatprep.subr.mxu0 0.0
        %2588 = vmatpush1.msra.mxu0 0.0
        %2589 = vmatprep.subr.mxu0 0.0
        %2590 = vmatpush1.msra.mxu0 0.0
        %2591 = vmatprep.subr.mxu0 0.0
        %2592 = vmatpush1.msra.mxu0 0.0
        %2593 = vmatprep.subr.mxu0 0.0
        %2594 = vmatpush1.msra.mxu0 0.0
        %2595 = vmatprep.subr.mxu0 0.0
        %2596 = vmatpush1.msra.mxu0 0.0
        %2597 = vmatprep.subr.mxu0 0.0
        %2598 = vmatpush1.msra.mxu0 0.0
        %2599 = vmatprep.subr.mxu0 0.0
        %2600 = vmatpush1.msra.mxu0 0.0
        %2601 = vmatprep.subr.mxu0 0.0
        %2602 = vmatpush1.msra.mxu0 0.0
        %2603 = vmatprep.subr.mxu0 0.0
        %2604 = vmatpush1.msra.mxu0 0.0
        %2605 = vmatprep.subr.mxu0 0.0
        %2606 = vmatpush1.msra.mxu0 0.0
        %2607 = vmatprep.subr.mxu0 0.0
        %2608 = vmatpush1.msra.mxu0 0.0
        %2609 = vmatprep.subr.mxu0 0.0
        %2610 = vmatpush1.msra.mxu0 0.0
        %2611 = vmatprep.subr.mxu0 0.0
        %2612 = vmatpush1.msra.mxu0 %v816
        %2613 = vmatprep.subr.mxu0 0.0
        %2614 = vmatpush2.msra.mxu0 0.0
        %2615 = vmatprep.subr.mxu0 0.0
        %2616 = vmatpush2.msra.mxu0 0.0
        %2617 = vmatprep.subr.mxu0 0.0
        %2618 = vmatpush2.msra.mxu0 0.0
        %2619 = vmatprep.subr.mxu0 0.0
        %2620 = vmatpush2.msra.mxu0 0.0
        %2621 = vmatprep.subr.mxu0 0.0
        %2622 = vmatpush2.msra.mxu0 0.0
        %2623 = vmatprep.subr.mxu0 0.0
        %2624 = vmatpush2.msra.mxu0 0.0
        %2625 = vmatprep.subr.mxu0 0.0
        %2626 = vmatpush2.msra.mxu0 0.0
        %2627 = vmatprep.subr.mxu0 0.0
        %2628 = vmatpush2.msra.mxu0 0.0
        %2629 = vmatprep.subr.mxu0 0.0
        %2630 = vmatpush2.msra.mxu0 0.0
        %2631 = vmatprep.subr.mxu0 0.0
        %2632 = vmatpush2.msra.mxu0 0.0
        %2633 = vmatprep.subr.mxu0 0.0
        %2634 = vmatpush2.msra.mxu0 0.0
        %2635 = vmatprep.subr.mxu0 0.0
        %2636 = vmatpush2.msra.mxu0 0.0
        %2637 = vmatprep.subr.mxu0 0.0
        %2638 = vmatpush2.msra.mxu0 0.0
        %2639 = vmatprep.subr.mxu0 0.0
        %2640 = vmatpush2.msra.mxu0 0.0
        %2641 = vmatprep.subr.mxu0 0.0
        %2642 = vmatpush2.msra.mxu0 0.0
        %2643 = vmatprep.subr.mxu0 0.0
        %2644 = vmatpush2.msra.mxu0 0.0
        %2645 = vmatprep.mubr.f32.mxu0 0.0
        %2646 = vmatmul.mubr.f32.gmra.mxu0 %v2579
        %v2647 = vpop.f32.mrf.mxu0
        %v2648 = vadd.f32 0.0, %v2647
        %v2649 = vpop.f32.mrf.mxu0
        %2650 = vdwg.mxu0
        %s2651 = scalar_lea.vmem %s407, 32 [#allocation11]
        %2652 = vst.msk [vmem:[%s2651] sm:$0xff] %vm587, %v2359
        %s2653 = scalar_lea.vmem %s414, 16 [#allocation12]
        %2654 = vst.msk [vmem:[%s2653] sm:$0xf] %vm889, %v2502
        %s2655 = scalar_lea.vmem %s429, 8
        %2656 = vst.msk [vmem:[%s2655] sm:$0x3] %vm891, %v2648
        %s2657 = scalar_lea.vmem %s361, 80 [#allocation2]
        %v2658 = vld [vmem:[%s2657] sm:$0xff]
        %v2659 = vld [vmem:[%s2657 + $0x8] sm:$0xff]
        %2660 = vmatprep.subr.mxu0 0.0
        %2661 = vmatpush1.msra.mxu0 0.0
        %2662 = vmatprep.subr.mxu0 0.0
        %2663 = vmatpush1.msra.mxu0 0.0
        %2664 = vmatprep.subr.mxu0 0.0
        %2665 = vmatpush1.msra.mxu0 0.0
        %2666 = vmatprep.subr.mxu0 0.0
        %2667 = vmatpush1.msra.mxu0 0.0
        %2668 = vmatprep.subr.mxu0 0.0
        %2669 = vmatpush1.msra.mxu0 0.0
        %2670 = vmatprep.subr.mxu0 0.0
        %2671 = vmatpush1.msra.mxu0 0.0
        %2672 = vmatprep.subr.mxu0 0.0
        %2673 = vmatpush1.msra.mxu0 0.0
        %2674 = vmatprep.subr.mxu0 0.0
        %2675 = vmatpush1.msra.mxu0 0.0
        %2676 = vmatprep.subr.mxu0 0.0
        %2677 = vmatpush1.msra.mxu0 0.0
        %2678 = vmatprep.subr.mxu0 0.0
        %2679 = vmatpush1.msra.mxu0 0.0
        %2680 = vmatprep.subr.mxu0 0.0
        %2681 = vmatpush1.msra.mxu0 0.0
        %2682 = vmatprep.subr.mxu0 0.0
        %2683 = vmatpush1.msra.mxu0 0.0
        %2684 = vmatprep.subr.mxu0 0.0
        %2685 = vmatpush1.msra.mxu0 0.0
        %2686 = vmatprep.subr.mxu0 0.0
        %2687 = vmatpush1.msra.mxu0 0.0
        %2688 = vmatprep.subr.mxu0 0.0
        %2689 = vmatpush1.msra.mxu0 %v2659
        %2690 = vmatprep.subr.mxu0 0.0
        %2691 = vmatpush1.msra.mxu0 %v2658
        %2692 = vmatprep.subr.mxu0 0.0
        %2693 = vmatpush2.msra.mxu0 0.0
        %2694 = vmatprep.subr.mxu0 0.0
        %2695 = vmatpush2.msra.mxu0 0.0
        %2696 = vmatprep.subr.mxu0 0.0
        %2697 = vmatpush2.msra.mxu0 0.0
        %2698 = vmatprep.subr.mxu0 0.0
        %2699 = vmatpush2.msra.mxu0 0.0
        %2700 = vmatprep.subr.mxu0 0.0
        %2701 = vmatpush2.msra.mxu0 0.0
        %2702 = vmatprep.subr.mxu0 0.0
        %2703 = vmatpush2.msra.mxu0 0.0
        %2704 = vmatprep.subr.mxu0 0.0
        %2705 = vmatpush2.msra.mxu0 0.0
        %2706 = vmatprep.subr.mxu0 0.0
        %2707 = vmatpush2.msra.mxu0 0.0
        %2708 = vmatprep.subr.mxu0 0.0
        %2709 = vmatpush2.msra.mxu0 0.0
        %2710 = vmatprep.subr.mxu0 0.0
        %2711 = vmatpush2.msra.mxu0 0.0
        %2712 = vmatprep.subr.mxu0 0.0
        %2713 = vmatpush2.msra.mxu0 0.0
        %2714 = vmatprep.subr.mxu0 0.0
        %2715 = vmatpush2.msra.mxu0 0.0
        %2716 = vmatprep.subr.mxu0 0.0
        %2717 = vmatpush2.msra.mxu0 0.0
        %2718 = vmatprep.subr.mxu0 0.0
        %2719 = vmatpush2.msra.mxu0 0.0
        %2720 = vmatprep.subr.mxu0 0.0
        %2721 = vmatpush2.msra.mxu0 0.0
        %2722 = vmatprep.subr.mxu0 0.0
        %2723 = vmatpush2.msra.mxu0 0.0
        %2724 = vmatprep.mubr.f32.mxu0 0.0
        %2725 = vmatmul.mubr.f32.gmra.mxu0 %v442
        %v2726 = vpop.f32.mrf.mxu0
        %v2727 = vadd.f32 0.0, %v2726
        %v2728 = vpop.f32.mrf.mxu0
        %2729 = vdwg.mxu0
        %v2731 = vsel %vm440, %v2727, 0
        %2733 = vmatprep.subr.mxu0 0.0
        %2734 = vmatpush1.msra.mxu0 0.0
        %2735 = vmatprep.subr.mxu0 0.0
        %2736 = vmatpush1.msra.mxu0 0.0
        %2737 = vmatprep.subr.mxu0 0.0
        %2738 = vmatpush1.msra.mxu0 0.0
        %2739 = vmatprep.subr.mxu0 0.0
        %2740 = vmatpush1.msra.mxu0 0.0
        %2741 = vmatprep.subr.mxu0 0.0
        %2742 = vmatpush1.msra.mxu0 0.0
        %2743 = vmatprep.subr.mxu0 0.0
        %2744 = vmatpush1.msra.mxu0 0.0
        %2745 = vmatprep.subr.mxu0 0.0
        %2746 = vmatpush1.msra.mxu0 0.0
        %2747 = vmatprep.subr.mxu0 0.0
        %2748 = vmatpush1.msra.mxu0 0.0
        %2749 = vmatprep.subr.mxu0 0.0
        %2750 = vmatpush1.msra.mxu0 0.0
        %2751 = vmatprep.subr.mxu0 0.0
        %2752 = vmatpush1.msra.mxu0 0.0
        %2753 = vmatprep.subr.mxu0 0.0
        %2754 = vmatpush1.msra.mxu0 0.0
        %2755 = vmatprep.subr.mxu0 0.0
        %2756 = vmatpush1.msra.mxu0 0.0
        %2757 = vmatprep.subr.mxu0 0.0
        %2758 = vmatpush1.msra.mxu0 0.0
        %2759 = vmatprep.subr.mxu0 0.0
        %2760 = vmatpush1.msra.mxu0 0.0
        %2761 = vmatprep.subr.mxu0 0.0
        %2762 = vmatpush1.msra.mxu0 %v433
        %2763 = vmatprep.subr.mxu0 0.0
        %2764 = vmatpush1.msra.mxu0 %v432
        %2765 = vmatprep.subr.mxu0 0.0
        %2766 = vmatpush2.msra.mxu0 0.0
        %2767 = vmatprep.subr.mxu0 0.0
        %2768 = vmatpush2.msra.mxu0 0.0
        %2769 = vmatprep.subr.mxu0 0.0
        %2770 = vmatpush2.msra.mxu0 0.0
        %2771 = vmatprep.subr.mxu0 0.0
        %2772 = vmatpush2.msra.mxu0 0.0
        %2773 = vmatprep.subr.mxu0 0.0
        %2774 = vmatpush2.msra.mxu0 0.0
        %2775 = vmatprep.subr.mxu0 0.0
        %2776 = vmatpush2.msra.mxu0 0.0
        %2777 = vmatprep.subr.mxu0 0.0
        %2778 = vmatpush2.msra.mxu0 0.0
        %2779 = vmatprep.subr.mxu0 0.0
        %2780 = vmatpush2.msra.mxu0 0.0
        %2781 = vmatprep.subr.mxu0 0.0
        %2782 = vmatpush2.msra.mxu0 0.0
        %2783 = vmatprep.subr.mxu0 0.0
        %2784 = vmatpush2.msra.mxu0 0.0
        %2785 = vmatprep.subr.mxu0 0.0
        %2786 = vmatpush2.msra.mxu0 0.0
        %2787 = vmatprep.subr.mxu0 0.0
        %2788 = vmatpush2.msra.mxu0 0.0
        %2789 = vmatprep.subr.mxu0 0.0
        %2790 = vmatpush2.msra.mxu0 0.0
        %2791 = vmatprep.subr.mxu0 0.0
        %2792 = vmatpush2.msra.mxu0 0.0
        %2793 = vmatprep.subr.mxu0 0.0
        %2794 = vmatpush2.msra.mxu0 0.0
        %2795 = vmatprep.subr.mxu0 0.0
        %2796 = vmatpush2.msra.mxu0 0.0
        %2797 = vmatprep.mubr.f32.mxu0 0.0
        %2798 = vmatmul.mubr.f32.gmra.mxu0 %v2731
        %v2799 = vpop.f32.mrf.mxu0
        %v2800 = vadd.f32 0.0, %v2799
        %v2801 = vpop.f32.mrf.mxu0
        %2802 = vdwg.mxu0
        %2803 = vmatprep.subr.mxu0 0.0
        %2804 = vmatpush1.msra.mxu0 0.0
        %2805 = vmatprep.subr.mxu0 0.0
        %2806 = vmatpush1.msra.mxu0 0.0
        %2807 = vmatprep.subr.mxu0 0.0
        %2808 = vmatpush1.msra.mxu0 0.0
        %2809 = vmatprep.subr.mxu0 0.0
        %2810 = vmatpush1.msra.mxu0 0.0
        %2811 = vmatprep.subr.mxu0 0.0
        %2812 = vmatpush1.msra.mxu0 0.0
        %2813 = vmatprep.subr.mxu0 0.0
        %2814 = vmatpush1.msra.mxu0 0.0
        %2815 = vmatprep.subr.mxu0 0.0
        %2816 = vmatpush1.msra.mxu0 0.0
        %2817 = vmatprep.subr.mxu0 0.0
        %2818 = vmatpush1.msra.mxu0 0.0
        %2819 = vmatprep.subr.mxu0 0.0
        %2820 = vmatpush1.msra.mxu0 0.0
        %2821 = vmatprep.subr.mxu0 0.0
        %2822 = vmatpush1.msra.mxu0 0.0
        %2823 = vmatprep.subr.mxu0 0.0
        %2824 = vmatpush1.msra.mxu0 0.0
        %2825 = vmatprep.subr.mxu0 0.0
        %2826 = vmatpush1.msra.mxu0 0.0
        %2827 = vmatprep.subr.mxu0 0.0
        %2828 = vmatpush1.msra.mxu0 0.0
        %2829 = vmatprep.subr.mxu0 0.0
        %2830 = vmatpush1.msra.mxu0 0.0
        %2831 = vmatprep.subr.mxu0 0.0
        %2832 = vmatpush1.msra.mxu0 0.0
        %2833 = vmatprep.subr.mxu0 0.0
        %2834 = vmatpush1.msra.mxu0 %v2800
        %2835 = vmatprep.subr.mxu0 0.0
        %2836 = vmatpush2.msra.mxu0 0.0
        %2837 = vmatprep.subr.mxu0 0.0
        %2838 = vmatpush2.msra.mxu0 0.0
        %2839 = vmatprep.subr.mxu0 0.0
        %2840 = vmatpush2.msra.mxu0 0.0
        %2841 = vmatprep.subr.mxu0 0.0
        %2842 = vmatpush2.msra.mxu0 0.0
        %2843 = vmatprep.subr.mxu0 0.0
        %2844 = vmatpush2.msra.mxu0 0.0
        %2845 = vmatprep.subr.mxu0 0.0
        %2846 = vmatpush2.msra.mxu0 0.0
        %2847 = vmatprep.subr.mxu0 0.0
        %2848 = vmatpush2.msra.mxu0 0.0
        %2849 = vmatprep.subr.mxu0 0.0
        %2850 = vmatpush2.msra.mxu0 0.0
        %2851 = vmatprep.subr.mxu0 0.0
        %2852 = vmatpush2.msra.mxu0 0.0
        %2853 = vmatprep.subr.mxu0 0.0
        %2854 = vmatpush2.msra.mxu0 0.0
        %2855 = vmatprep.subr.mxu0 0.0
        %2856 = vmatpush2.msra.mxu0 0.0
        %2857 = vmatprep.subr.mxu0 0.0
        %2858 = vmatpush2.msra.mxu0 0.0
        %2859 = vmatprep.subr.mxu0 0.0
        %2860 = vmatpush2.msra.mxu0 0.0
        %2861 = vmatprep.subr.mxu0 0.0
        %2862 = vmatpush2.msra.mxu0 0.0
        %2863 = vmatprep.subr.mxu0 0.0
        %2864 = vmatpush2.msra.mxu0 0.0
        %2865 = vmatprep.subr.mxu0 0.0
        %2866 = vmatpush2.msra.mxu0 0.0
        %2867 = vmatprep.mubr.f32.mxu0 0.0
        %2868 = vmatmul.mubr.f32.gmra.mxu0 %v589
        %v2869 = vpop.f32.mrf.mxu0
        %v2870 = vadd.f32 0.0, %v2869
        %v2871 = vpop.f32.mrf.mxu0
        %2872 = vdwg.mxu0
        %v2874 = vsel %vm587, %v2870, 0
        %2876 = vmatprep.subr.mxu0 0.0
        %2877 = vmatpush1.msra.mxu0 0.0
        %2878 = vmatprep.subr.mxu0 0.0
        %2879 = vmatpush1.msra.mxu0 0.0
        %2880 = vmatprep.subr.mxu0 0.0
        %2881 = vmatpush1.msra.mxu0 0.0
        %2882 = vmatprep.subr.mxu0 0.0
        %2883 = vmatpush1.msra.mxu0 0.0
        %2884 = vmatprep.subr.mxu0 0.0
        %2885 = vmatpush1.msra.mxu0 0.0
        %2886 = vmatprep.subr.mxu0 0.0
        %2887 = vmatpush1.msra.mxu0 0.0
        %2888 = vmatprep.subr.mxu0 0.0
        %2889 = vmatpush1.msra.mxu0 0.0
        %2890 = vmatprep.subr.mxu0 0.0
        %2891 = vmatpush1.msra.mxu0 0.0
        %2892 = vmatprep.subr.mxu0 0.0
        %2893 = vmatpush1.msra.mxu0 0.0
        %2894 = vmatprep.subr.mxu0 0.0
        %2895 = vmatpush1.msra.mxu0 0.0
        %2896 = vmatprep.subr.mxu0 0.0
        %2897 = vmatpush1.msra.mxu0 0.0
        %2898 = vmatprep.subr.mxu0 0.0
        %2899 = vmatpush1.msra.mxu0 0.0
        %2900 = vmatprep.subr.mxu0 0.0
        %2901 = vmatpush1.msra.mxu0 0.0
        %2902 = vmatprep.subr.mxu0 0.0
        %2903 = vmatpush1.msra.mxu0 0.0
        %2904 = vmatprep.subr.mxu0 0.0
        %2905 = vmatpush1.msra.mxu0 0.0
        %2906 = vmatprep.subr.mxu0 0.0
        %2907 = vmatpush1.msra.mxu0 %v435
        %2908 = vmatprep.subr.mxu0 0.0
        %2909 = vmatpush2.msra.mxu0 0.0
        %2910 = vmatprep.subr.mxu0 0.0
        %2911 = vmatpush2.msra.mxu0 0.0
        %2912 = vmatprep.subr.mxu0 0.0
        %2913 = vmatpush2.msra.mxu0 0.0
        %2914 = vmatprep.subr.mxu0 0.0
        %2915 = vmatpush2.msra.mxu0 0.0
        %2916 = vmatprep.subr.mxu0 0.0
        %2917 = vmatpush2.msra.mxu0 0.0
        %2918 = vmatprep.subr.mxu0 0.0
        %2919 = vmatpush2.msra.mxu0 0.0
        %2920 = vmatprep.subr.mxu0 0.0
        %2921 = vmatpush2.msra.mxu0 0.0
        %2922 = vmatprep.subr.mxu0 0.0
        %2923 = vmatpush2.msra.mxu0 0.0
        %2924 = vmatprep.subr.mxu0 0.0
        %2925 = vmatpush2.msra.mxu0 0.0
        %2926 = vmatprep.subr.mxu0 0.0
        %2927 = vmatpush2.msra.mxu0 0.0
        %2928 = vmatprep.subr.mxu0 0.0
        %2929 = vmatpush2.msra.mxu0 0.0
        %2930 = vmatprep.subr.mxu0 0.0
        %2931 = vmatpush2.msra.mxu0 0.0
        %2932 = vmatprep.subr.mxu0 0.0
        %2933 = vmatpush2.msra.mxu0 0.0
        %2934 = vmatprep.subr.mxu0 0.0
        %2935 = vmatpush2.msra.mxu0 0.0
        %2936 = vmatprep.subr.mxu0 0.0
        %2937 = vmatpush2.msra.mxu0 0.0
        %2938 = vmatprep.subr.mxu0 0.0
        %2939 = vmatpush2.msra.mxu0 0.0
        %2940 = vmatprep.mubr.f32.mxu0 0.0
        %2941 = vmatmul.mubr.f32.gmra.mxu0 %v2874
        %v2942 = vpop.f32.mrf.mxu0
        %v2943 = vadd.f32 0.0, %v2942
        %v2944 = vpop.f32.mrf.mxu0
        %2945 = vdwg.mxu0
        %v2947 = vsel %vm738, %v2943, 0
        %2949 = vmatprep.subr.mxu0 0.0
        %2950 = vmatpush1.msra.mxu0 0.0
        %2951 = vmatprep.subr.mxu0 0.0
        %2952 = vmatpush1.msra.mxu0 0.0
        %2953 = vmatprep.subr.mxu0 0.0
        %2954 = vmatpush1.msra.mxu0 0.0
        %2955 = vmatprep.subr.mxu0 0.0
        %2956 = vmatpush1.msra.mxu0 0.0
        %2957 = vmatprep.subr.mxu0 0.0
        %2958 = vmatpush1.msra.mxu0 0.0
        %2959 = vmatprep.subr.mxu0 0.0
        %2960 = vmatpush1.msra.mxu0 0.0
        %2961 = vmatprep.subr.mxu0 0.0
        %2962 = vmatpush1.msra.mxu0 0.0
        %2963 = vmatprep.subr.mxu0 0.0
        %2964 = vmatpush1.msra.mxu0 0.0
        %2965 = vmatprep.subr.mxu0 0.0
        %2966 = vmatpush1.msra.mxu0 0.0
        %2967 = vmatprep.subr.mxu0 0.0
        %2968 = vmatpush1.msra.mxu0 0.0
        %2969 = vmatprep.subr.mxu0 0.0
        %2970 = vmatpush1.msra.mxu0 0.0
        %2971 = vmatprep.subr.mxu0 0.0
        %2972 = vmatpush1.msra.mxu0 0.0
        %2973 = vmatprep.subr.mxu0 0.0
        %2974 = vmatpush1.msra.mxu0 0.0
        %2975 = vmatprep.subr.mxu0 0.0
        %2976 = vmatpush1.msra.mxu0 0.0
        %2977 = vmatprep.subr.mxu0 0.0
        %2978 = vmatpush1.msra.mxu0 0.0
        %2979 = vmatprep.subr.mxu0 0.0
        %2980 = vmatpush1.msra.mxu0 %v2947
        %2981 = vmatprep.subr.mxu0 0.0
        %2982 = vmatpush2.msra.mxu0 0.0
        %2983 = vmatprep.subr.mxu0 0.0
        %2984 = vmatpush2.msra.mxu0 0.0
        %2985 = vmatprep.subr.mxu0 0.0
        %2986 = vmatpush2.msra.mxu0 0.0
        %2987 = vmatprep.subr.mxu0 0.0
        %2988 = vmatpush2.msra.mxu0 0.0
        %2989 = vmatprep.subr.mxu0 0.0
        %2990 = vmatpush2.msra.mxu0 0.0
        %2991 = vmatprep.subr.mxu0 0.0
        %2992 = vmatpush2.msra.mxu0 0.0
        %2993 = vmatprep.subr.mxu0 0.0
        %2994 = vmatpush2.msra.mxu0 0.0
        %2995 = vmatprep.subr.mxu0 0.0
        %2996 = vmatpush2.msra.mxu0 0.0
        %2997 = vmatprep.subr.mxu0 0.0
        %2998 = vmatpush2.msra.mxu0 0.0
        %2999 = vmatprep.subr.mxu0 0.0
        %3000 = vmatpush2.msra.mxu0 0.0
        %3001 = vmatprep.subr.mxu0 0.0
        %3002 = vmatpush2.msra.mxu0 0.0
        %3003 = vmatprep.subr.mxu0 0.0
        %3004 = vmatpush2.msra.mxu0 0.0
        %3005 = vmatprep.subr.mxu0 0.0
        %3006 = vmatpush2.msra.mxu0 0.0
        %3007 = vmatprep.subr.mxu0 0.0
        %3008 = vmatpush2.msra.mxu0 0.0
        %3009 = vmatprep.subr.mxu0 0.0
        %3010 = vmatpush2.msra.mxu0 0.0
        %3011 = vmatprep.subr.mxu0 0.0
        %3012 = vmatpush2.msra.mxu0 0.0
        %3013 = vmatprep.mubr.f32.mxu0 0.0
        %3014 = vmatmul.mubr.f32.gmra.mxu0 %v736
        %v3015 = vpop.f32.mrf.mxu0
        %v3016 = vadd.f32 0.0, %v3015
        %v3017 = vpop.f32.mrf.mxu0
        %3018 = vdwg.mxu0
        %v3020 = vsel %vm734, %v3016, 0
        %3022 = vmatprep.subr.mxu0 0.0
        %3023 = vmatpush1.msra.mxu0 0.0
        %3024 = vmatprep.subr.mxu0 0.0
        %3025 = vmatpush1.msra.mxu0 0.0
        %3026 = vmatprep.subr.mxu0 0.0
        %3027 = vmatpush1.msra.mxu0 0.0
        %3028 = vmatprep.subr.mxu0 0.0
        %3029 = vmatpush1.msra.mxu0 0.0
        %3030 = vmatprep.subr.mxu0 0.0
        %3031 = vmatpush1.msra.mxu0 0.0
        %3032 = vmatprep.subr.mxu0 0.0
        %3033 = vmatpush1.msra.mxu0 0.0
        %3034 = vmatprep.subr.mxu0 0.0
        %3035 = vmatpush1.msra.mxu0 0.0
        %3036 = vmatprep.subr.mxu0 0.0
        %3037 = vmatpush1.msra.mxu0 0.0
        %3038 = vmatprep.subr.mxu0 0.0
        %3039 = vmatpush1.msra.mxu0 0.0
        %3040 = vmatprep.subr.mxu0 0.0
        %3041 = vmatpush1.msra.mxu0 0.0
        %3042 = vmatprep.subr.mxu0 0.0
        %3043 = vmatpush1.msra.mxu0 0.0
        %3044 = vmatprep.subr.mxu0 0.0
        %3045 = vmatpush1.msra.mxu0 0.0
        %3046 = vmatprep.subr.mxu0 0.0
        %3047 = vmatpush1.msra.mxu0 0.0
        %3048 = vmatprep.subr.mxu0 0.0
        %3049 = vmatpush1.msra.mxu0 0.0
        %3050 = vmatprep.subr.mxu0 0.0
        %3051 = vmatpush1.msra.mxu0 0.0
        %3052 = vmatprep.subr.mxu0 0.0
        %3053 = vmatpush1.msra.mxu0 %v816
        %3054 = vmatprep.subr.mxu0 0.0
        %3055 = vmatpush2.msra.mxu0 0.0
        %3056 = vmatprep.subr.mxu0 0.0
        %3057 = vmatpush2.msra.mxu0 0.0
        %3058 = vmatprep.subr.mxu0 0.0
        %3059 = vmatpush2.msra.mxu0 0.0
        %3060 = vmatprep.subr.mxu0 0.0
        %3061 = vmatpush2.msra.mxu0 0.0
        %3062 = vmatprep.subr.mxu0 0.0
        %3063 = vmatpush2.msra.mxu0 0.0
        %3064 = vmatprep.subr.mxu0 0.0
        %3065 = vmatpush2.msra.mxu0 0.0
        %3066 = vmatprep.subr.mxu0 0.0
        %3067 = vmatpush2.msra.mxu0 0.0
        %3068 = vmatprep.subr.mxu0 0.0
        %3069 = vmatpush2.msra.mxu0 0.0
        %3070 = vmatprep.subr.mxu0 0.0
        %3071 = vmatpush2.msra.mxu0 0.0
        %3072 = vmatprep.subr.mxu0 0.0
        %3073 = vmatpush2.msra.mxu0 0.0
        %3074 = vmatprep.subr.mxu0 0.0
        %3075 = vmatpush2.msra.mxu0 0.0
        %3076 = vmatprep.subr.mxu0 0.0
        %3077 = vmatpush2.msra.mxu0 0.0
        %3078 = vmatprep.subr.mxu0 0.0
        %3079 = vmatpush2.msra.mxu0 0.0
        %3080 = vmatprep.subr.mxu0 0.0
        %3081 = vmatpush2.msra.mxu0 0.0
        %3082 = vmatprep.subr.mxu0 0.0
        %3083 = vmatpush2.msra.mxu0 0.0
        %3084 = vmatprep.subr.mxu0 0.0
        %3085 = vmatpush2.msra.mxu0 0.0
        %3086 = vmatprep.mubr.f32.mxu0 0.0
        %3087 = vmatmul.mubr.f32.gmra.mxu0 %v3020
        %v3088 = vpop.f32.mrf.mxu0
        %v3089 = vadd.f32 0.0, %v3088
        %v3090 = vpop.f32.mrf.mxu0
        %3091 = vdwg.mxu0
        %s3092 = scalar_lea.vmem %s407, 40 [#allocation11]
        %3093 = vst.msk [vmem:[%s3092] sm:$0xff] %vm587, %v2800
        %s3094 = scalar_lea.vmem %s414, 20 [#allocation12]
        %3095 = vst.msk [vmem:[%s3094] sm:$0xf] %vm889, %v2943
        %s3096 = scalar_lea.vmem %s429, 10
        %3097 = vst.msk [vmem:[%s3096] sm:$0x3] %vm891, %v3089
        %s3098 = sand.u32 %s192, 1
        %s3099 = scalar_lea.sflag [#allocation4], %s3098
        %s3100 = sand.u32 %s192, 1
        %s3101 = smul.addr %s3100, 48
        %s3102 = scalar_lea.vmem [#allocation11], %s3101
        %s3103 = sand.u32 %s218, 1
        %s3104 = scalar_lea.sflag [#allocation13], %s3103
        %s3105 = sand.u32 %s218, 1
        %s3106 = smul.addr %s3105, 24
        %s3107 = scalar_lea.vmem [#allocation12], %s3106
        %s3108 = smul.u32 6, %s32
        %p3109 = scmp.lt.s32.totalorder %s3108, 11
        %s3110 = scalar_select %p3109, %s3108, 11
        %s3111 = smul.addr %s3110, 2
        %s3112 = scalar_lea.vmem %s9, %s3111
        // Predicated region
        $region69: #{avgpool_pyramid.1} parent=47 // pred_check
          %p3113 = pneg %p202
        $region70: #{avgpool_pyramid.1} parent=47 // pred_check_branch
          %3115 = sbr.rel (%p3113) target = $region72
        $region71: #{avgpool_pyramid.1} parent=47 // pred_region
          %s3116 = smul.u32 6, %s32
          %s3118 = ssub.s32 768, 768
          %3119 = vsyncadd %s3099, %s3118
          %s3120 = smul.addr %s3116, 128
          %s3121 = scalar_lea.hbm %s7, %s3120
          %s3122 = sshll.u32 %s3102, 4
          %s3123 = int_to_ptr.vmem [resolvable:$true] %s3122
          %3128 = dma.vmem_to_hbm [thread:$0]  %s3123, 768, %s3121, %s3099, 128, 128, 8
        $region72: #{avgpool_pyramid.1} parent=47 // pred_fallthru
          _
        // Predicated region
        $region73: #{avgpool_pyramid.1} parent=47 // pred_check
          %p3129 = pneg %p228
        $region74: #{avgpool_pyramid.1} parent=47 // pred_check_branch
          %3131 = sbr.rel (%p3129) target = $region76
        $region75: #{avgpool_pyramid.1} parent=47 // pred_region
          %s3132 = smul.u32 6, %s32
          %s3134 = ssub.s32 384, 384
          %3135 = vsyncadd %s3104, %s3134
          %s3136 = smul.addr %s3132, 64
          %s3137 = scalar_lea.hbm %s8, %s3136
          %s3138 = sshll.u32 %s3107, 4
          %s3139 = int_to_ptr.vmem [resolvable:$true] %s3138
          %3144 = dma.vmem_to_hbm [thread:$0]  %s3139, 384, %s3137, %s3104, 64, 64, 4
        $region76: #{avgpool_pyramid.1} parent=47 // pred_fallthru
          _
        // Predicated region
        $region77: #{avgpool_pyramid.1} parent=47 // pred_check
          %p3145 = pneg %p254
        $region78: #{avgpool_pyramid.1} parent=47 // pred_check_branch
          %3147 = sbr.rel (%p3145) target = $region80
        $region79: #{avgpool_pyramid.1} parent=47 // pred_region
          %s3148 = smul.u32 6, %s32
        $region80: #{avgpool_pyramid.1} parent=47 // pred_fallthru
          _
      $region48: #{avgpool_pyramid.1} parent=5 // pred_fallthru
        _
      %p3149 = scmp.le.s32.totalorder 2, %s27
      // Predicated region
      $region81: #{avgpool_pyramid.1} parent=5 // pred_check
        %p3150 = pneg %p3149
      $region82: #{avgpool_pyramid.1} parent=5 // pred_check_branch
        %3152 = sbr.rel (%p3150) target = $region84
      $region83: #{avgpool_pyramid.1} parent=5 // pred_region
        %s3153 = ssub.s32 %s27, 2
        // Predicated region
        $region85: #{avgpool_pyramid.1} parent=83 // pred_check
          %p3154 = pneg %p208
        $region86: #{avgpool_pyramid.1} parent=83 // pred_check_branch
          %3156 = sbr.rel (%p3154) target = $region88
        $region87: #{avgpool_pyramid.1} parent=83 // pred_region
          %s3157 = sand.u32 %s193, 1
          %s3158 = scalar_lea.sflag [#allocation4], %s3157
          %s3159 = sand.u32 %s193, 1
          %s3160 = smul.addr %s3159, 48
          %s3161 = scalar_lea.vmem [#allocation11], %s3160
          %3162 = dma.done %s3158, 768
        $region88: #{avgpool_pyramid.1} parent=83 // pred_fallthru
          _
        // Predicated region
        $region89: #{avgpool_pyramid.1} parent=83 // pred_check
          %p3163 = pneg %p234
        $region90: #{avgpool_pyramid.1} parent=83 // pred_check_branch
          %3165 = sbr.rel (%p3163) target = $region92
        $region91: #{avgpool_pyramid.1} parent=83 // pred_region
          %s3166 = sand.u32 %s219, 1
          %s3167 = scalar_lea.sflag [#allocation13], %s3166
          %s3168 = sand.u32 %s219, 1
          %s3169 = smul.addr %s3168, 24
          %s3170 = scalar_lea.vmem [#allocation12], %s3169
          %3171 = dma.done %s3167, 384
        $region92: #{avgpool_pyramid.1} parent=83 // pred_fallthru
          _
        // Predicated region
        $region93: #{avgpool_pyramid.1} parent=83 // pred_check
          %p3172 = pneg %p260
        $region94: #{avgpool_pyramid.1} parent=83 // pred_check_branch
          %3174 = sbr.rel (%p3172) target = $region96
        $region95: #{avgpool_pyramid.1} parent=83 // pred_region
          %s3175 = smul.u32 6, %s33
          %p3176 = scmp.lt.s32.totalorder %s3175, 11
          %s3177 = scalar_select %p3176, %s3175, 11
          %s3178 = smul.addr %s3177, 2
          %s3179 = scalar_lea.vmem %s9, %s3178
        $region96: #{avgpool_pyramid.1} parent=83 // pred_fallthru
          _
      $region84: #{avgpool_pyramid.1} parent=5 // pred_fallthru
        _
    $region6: #{avgpool_pyramid.1} parent=1 // loop_footer
      %s31 = sadd.s32 1, %s27
    $region7: #{avgpool_pyramid.1} parent=1 // loop_footer_branch
      %26 = sbr.rel target = $region3
    $region8: #{avgpool_pyramid.1} parent=1 // loop_exit
      _
    %3180 = vsyncpa [#allocation3], 1
    %s3181 = scalar_lea.sflag [#allocation3], 1
    %3182 = vsyncpa %s3181, 1
    %3183 = vsyncpa [#allocation6], 1
    %3184 = vsyncpa [#allocation9], 1
    %3185 = vsyncpa [#allocation4], 1
    %s3186 = scalar_lea.sflag [#allocation4], 1
    %3187 = vsyncpa %s3186, 1
    %3188 = vsyncpa [#allocation13], 1
    %s3189 = scalar_lea.sflag [#allocation13], 1
    %3190 = vsyncpa %s3189, 1

</llo_original>
